<compile_context>
chip_gen: v5e
topology: v5e:2x2
jax: 0.10.0
libtpu: 0.0.40
codegen_flags: <defaults>
</compile_context>

<pallas_src>
import functools

import numpy as np
import jax
import jax.numpy as jnp
from jax import lax
from jax.experimental import pallas as pl
from jax.experimental.pallas import tpu as pltpu

LANE = 128   # vreg lane width


# --------------------------- sorting-network utils -------------------------- #
def _oets_pairs(n):
    """Odd-even transposition sorting network (n passes => sorted for any input)."""
    pairs = []
    for p in range(n):
        for a in range(p % 2, n - 1, 2):
            pairs.append((a, a + 1))
    return pairs


def _cmpx_rows(ref, a, b):
    """In-place compare-exchange of two statically indexed rows of a VMEM scratch."""
    va = ref[a, :]
    vb = ref[b, :]
    ref[a, :] = jnp.minimum(va, vb)
    ref[b, :] = jnp.maximum(va, vb)


# ------------------------------ Pallas kernel ------------------------------- #
def _fused_forward_kernel(x_ref, a0_ref, wf_ref, b0_ref, w1_ref, b1_ref, o_ref,
                          s1_ref, z_ref, *, nb, ni, nj, margin):
    """Fused forward of `new`.

    x_ref  : [nj, ni*nb]  with x[j, i*nb + b] = scores[b, j, i]
    a0_ref : [nq0, nj]    q0 linear-interp matrix (constant)
    wf_ref : [ni, nq0, nh3]  fold of (q1-interp o flatten o Linear0) (constant)
    b0_ref : [1, nh3] ; w1_ref: [nh3, 128] (lane padded) ; b1_ref: [1, 128]
    o_ref  : [nb, 128]  tanh(MLP(features)) * margin in lanes [:nout]
    s1_ref : [nj, ni*nb] scratch (stage-1 sort) ; z_ref: [ni*nb, nq0] scratch (stage-2 sort)
    """
    # ---- stage 1: sort over the j axis (rows) for every (i, b) lane ----
    s1_ref[...] = x_ref[...]
    for a, c in _oets_pairs(nj):
        _cmpx_rows(s1_ref, a, c)

    # ---- q0 interpolation (precomputed matrix) on the MXU ----
    y = jnp.dot(a0_ref[...], s1_ref[...],
                preferred_element_type=jnp.float32)              # [nq0, ni*nb]

    # ---- move (i,b) onto rows: identity @ Y^T via A.B^T dot_general ----
    n = ni * nb
    rows = lax.broadcasted_iota(jnp.int32, (n, n), 0)
    cols = lax.broadcasted_iota(jnp.int32, (n, n), 1)
    eye = jnp.where(rows == cols, jnp.float32(1.0), jnp.float32(0.0))
    z_ref[...] = lax.dot_general(eye, y, (((1,), (1,)), ((), ())),
                                 preferred_element_type=jnp.float32)   # [ni*nb, nq0]

    # ---- stage 2: per-sample sort over the i axis (rows i*nb + b) ----
    for b in range(nb):
        for a, c in _oets_pairs(ni):
            _cmpx_rows(z_ref, a * nb + b, c * nb + b)

    # ---- q1-interp + flatten + first Linear, all folded into wf (host-side):
    #      acc[b, m] = sum_r sum_k z[r*nb + b, k] * wf[r, k, m] ----
    acc = jnp.dot(z_ref[0:nb, :], wf_ref[0], preferred_element_type=jnp.float32)
    for r in range(1, ni):
        acc = acc + jnp.dot(z_ref[r * nb:(r + 1) * nb, :], wf_ref[r],
                            preferred_element_type=jnp.float32)        # [nb, nh3]

    # ---- ReLU -> second Linear (lane padded to 128) -> tanh * margin ----
    h1 = jnp.maximum(acc + b0_ref[...], 0.0)
    out = jnp.dot(h1, w1_ref[...], preferred_element_type=jnp.float32) + b1_ref[...]
    o_ref[...] = jnp.tanh(out) * margin


def fused_forward_pallas(x, a0, wf, b0, w1p, b1p, *, nb, ni, nj, margin):
    """Single launch; whole-array VMEM blocks (total footprint << 1 MB)."""
    nq0 = a0.shape[0]
    kernel = functools.partial(_fused_forward_kernel, nb=nb, ni=ni, nj=nj,
                               margin=float(margin))
    vmem = pl.BlockSpec(memory_space=pltpu.MemorySpace.VMEM)
    return pl.pallas_call(
        kernel,
        out_shape=jax.ShapeDtypeStruct((nb, LANE), jnp.float32),
        in_specs=[vmem] * 6,
        out_specs=vmem,
        scratch_shapes=[pltpu.VMEM((nj, ni * nb), jnp.float32),    # stage-1 sort buffer
                        pltpu.VMEM((ni * nb, nq0), jnp.float32)],  # stage-2 sort buffer
    )(x, a0, wf, b0, w1p, b1p)


# ------------------------- host-side one-time packing ----------------------- #
def quantile_interp_matrix(q, n):
    """Linear-interpolation matrix A so that quantile(v, q) = A @ sort(v) (torch 'linear')."""
    q = np.asarray(q, np.float64)
    pos = q * (n - 1)
    lo = np.floor(pos).astype(np.int64)
    hi = np.minimum(lo + 1, n - 1)
    frac = pos - lo
    A = np.zeros((len(q), n), np.float64)
    A[np.arange(len(q)), lo] += 1.0 - frac
    A[np.arange(len(q)), hi] += frac
    return A.astype(np.float32)


def pack_fused_params(module, *, n_sort1, n_sort2):
    q0 = np.asarray(module["q0"], np.float64)
    q1 = np.asarray(module["q1"], np.float64)
    K, L = len(q0), len(q1)
    assert len(module["weights"]) == 2, "kernel is specialised to nlayers2 == 2"
    W0 = np.asarray(module["weights"][0], np.float32)        # [K*L, nh3]
    b0 = np.asarray(module["biases"][0], np.float32)         # [nh3]
    W1 = np.asarray(module["weights"][1], np.float32)        # [nh3, 2]
    b1 = np.asarray(module["biases"][1], np.float32)         # [2]

    A0 = quantile_interp_matrix(q0, n_sort1)                 # [K, n_sort1]
    A1 = quantile_interp_matrix(q1, n_sort2)                 # [L, n_sort2]
    # h[b, l*K + k] = sum_r A1[l, r] * sorted2[b, r, k]  =>  fold A1 + flatten into W0.
    Wf = np.einsum("lr,lkm->rkm", A1, W0.reshape(L, K, -1))  # [n_sort2, K, nh3]

    W1p = np.zeros((W1.shape[0], LANE), np.float32)
    W1p[:, :W1.shape[1]] = W1
    b1p = np.zeros((1, LANE), np.float32)
    b1p[0, :W1.shape[1]] = b1
    return (jnp.asarray(A0), jnp.asarray(Wf), jnp.asarray(b0[None, :]),
            jnp.asarray(W1p), jnp.asarray(b1p))


# --------------------------- module construction ---------------------------- #
class Params:
    nh = 16        # -> q0 has int(sqrt(16))*4 + 1 = 17 points
    nh2 = 16       # -> q1 has int(sqrt(16)) + 1 = 5 points
    nh3 = 32       # hidden width of encoder2
    nlayers = 1    # encoder1 is forced to nn.Identity() in the reference anyway
    nlayers2 = 2   # encoder2: Linear(85,32) -> ReLU -> Linear(32,2)
    margin = 2.0


def build_new_module(params, key):
    """Deterministically builds the parameters of `new` (only encoder2 is used).
    self.w / self.b and the MLP's LayerNorm exist in __init__ but are unused in forward."""
    nh0 = int(params.nh ** 0.5) * 4
    q0 = np.arange(0.0, 1.0 + 1e-20, 1.0 / nh0)
    nh = len(q0)                               # 17
    nh2b = int(params.nh2 ** 0.5)
    q1 = np.arange(0.0, 1.0 + 1e-20, 1.0 / nh2b)
    nh2 = len(q1)                              # 5

    ninput = nh * nh2                          # 85
    if params.nlayers2 == 1:
        dims = [ninput, 2]
    else:
        dims = [ninput] + [params.nh3] * (params.nlayers2 - 1) + [2]

    weights, biases = [], []
    for i in range(len(dims) - 1):
        fan_in, fan_out = dims[i], dims[i + 1]
        key, kw, kb = jax.random.split(key, 3)
        bound = 1.0 / np.sqrt(fan_in)          # torch.nn.Linear default init range
        weights.append(jax.random.uniform(kw, (fan_in, fan_out), jnp.float32,
                                          -bound, bound))
        biases.append(jax.random.uniform(kb, (fan_out,), jnp.float32, -bound, bound))

    return {
        "q0": jnp.asarray(q0, jnp.float32),
        "q1": jnp.asarray(q1, jnp.float32),
        "weights": weights,
        "biases": biases,
        "margin": params.margin,
    }


# --------------------------------- forward ---------------------------------- #
@functools.partial(jax.jit, static_argnames=("margin", "nout"))
def new_forward(scores, a0, wf, b0, w1p, b1p, *, margin, nout):
    """JAX/Pallas equivalent of new.forward({'score': scores}); scores pre-stacked [B,R,C]."""
    B, R, I = scores.shape
    J = R - 1
    # pack x[j, i*B + b] = scores[b, j, i]  (tiny XLA repack; everything else in-kernel)
    x = jnp.transpose(scores[:, :J, :].astype(jnp.float32), (1, 2, 0)).reshape(J, I * B)
    out = fused_forward_pallas(x, a0, wf, b0, w1p, b1p,
                               nb=B, ni=I, nj=J, margin=margin)
    return out[:, :nout]


# ----------------------------------- main ------------------------------------ #
if __name__ == "__main__":
    params = Params()
    key = jax.random.PRNGKey(0)
    key, kmod = jax.random.split(key)
    module = build_new_module(params, kmod)

    # data_batch['score'] : list of B=2 tensors of shape [N+1, M] = [9, 8]
    B = 2
    scores = []
    for _ in range(B):
        key, ks = jax.random.split(key)
        scores.append(jax.random.normal(ks, (9, 8), jnp.float32))
    scores = jnp.stack(scores, axis=0)                    # [2, 9, 8]

    J, I = scores.shape[1] - 1, scores.shape[2]           # 8, 8
    a0, wf, b0, w1p, b1p = pack_fused_params(module, n_sort1=J, n_sort2=I)
    nout = module["weights"][-1].shape[1]                 # 2

    out = new_forward(scores, a0, wf, b0, w1p, b1p,
                      margin=params.margin, nout=nout)    # [2, 2]
    out = jax.block_until_ready(out)

    # -------- pure-numpy reference (matches the PyTorch forward) ----------- #
    q0_np = np.asarray(module["q0"], np.float64)
    q1_np = np.asarray(module["q1"], np.float64)
    feats = []
    for b in range(B):
        v = np.asarray(scores[b], np.float64)[:-1, :].T
        v = np.quantile(v, q0_np, axis=1)
        v = np.quantile(v, q1_np, axis=1)
        feats.append(v.reshape(-1))
    h_ref = np.stack(feats, axis=0)
    w0_, w1_ = (np.asarray(w, np.float64) for w in module["weights"])
    b0_, b1_ = (np.asarray(bb, np.float64) for bb in module["biases"])
    ref = np.tanh(np.maximum(h_ref @ w0_ + b0_, 0.0) @ w1_ + b1_) * params.margin

    assert out.shape == (B, nout)
    assert bool(jnp.all(jnp.isfinite(out)))
    assert bool(jnp.all(jnp.abs(out) <= params.margin + 1e-5))
    np.testing.assert_allclose(np.asarray(out), ref, rtol=5e-2, atol=5e-2)
    print("KERNEL_OK")
</pallas_src>

<mosaic_0001>
module attributes {stable_mosaic.version = 11 : i64} {
  func.func @_fused_forward_kernel(%arg0: memref<8x16xf32, #tpu.memory_space<vmem>>, %arg1: memref<16x8xf32, #tpu.memory_space<vmem>>, %arg2: memref<8x16x32xf32, #tpu.memory_space<vmem>>, %arg3: memref<1x32xf32, #tpu.memory_space<vmem>>, %arg4: memref<32x128xf32, #tpu.memory_space<vmem>>, %arg5: memref<1x128xf32, #tpu.memory_space<vmem>>, %arg6: memref<2x128xf32, #tpu.memory_space<vmem>>, %arg7: memref<8x16xf32, #tpu.memory_space<vmem>>, %arg8: memref<16x16xf32, #tpu.memory_space<vmem>>) attributes {dimension_semantics = [], scalar_prefetch = 0 : i64, scratch_operands = 2 : i64, tpu.core_type = #tpu.core_type<tc>} {
    %c0 = arith.constant 0 : index
    %c0_0 = arith.constant 0 : index
    %0 = vector.load %arg0[%c0, %c0_0] : memref<8x16xf32, #tpu.memory_space<vmem>>, vector<8x16xf32>
    %c0_1 = arith.constant 0 : index
    %c0_2 = arith.constant 0 : index
    %1 = vector.load %arg7[%c0_1, %c0_2] : memref<8x16xf32, #tpu.memory_space<vmem>>, vector<8x16xf32>
    tpu.vector_store %arg7[%c0_1, %c0_2], %0 {strides = array<i32>} : memref<8x16xf32, #tpu.memory_space<vmem>>, vector<8x16xf32>,
    %c0_3 = arith.constant 0 : index
    %c0_4 = arith.constant 0 : index
    %2 = vector.load %arg7[%c0_3, %c0_4] : memref<8x16xf32, #tpu.memory_space<vmem>>, vector<1x16xf32>
    %3 = vector.shape_cast %2 : vector<1x16xf32> to vector<16xf32>
    %c1 = arith.constant 1 : index
    %c0_5 = arith.constant 0 : index
    %4 = vector.load %arg7[%c1, %c0_5] : memref<8x16xf32, #tpu.memory_space<vmem>>, vector<1x16xf32>
    %5 = vector.shape_cast %4 : vector<1x16xf32> to vector<16xf32>
    %6 = arith.minimumf %3, %5 : vector<16xf32>
    %c0_6 = arith.constant 0 : index
    %c0_7 = arith.constant 0 : index
    %7 = vector.load %arg7[%c0_6, %c0_7] : memref<8x16xf32, #tpu.memory_space<vmem>>, vector<1x16xf32>
    %8 = vector.shape_cast %7 : vector<1x16xf32> to vector<16xf32>
    %9 = vector.shape_cast %6 : vector<16xf32> to vector<1x16xf32>
    tpu.vector_store %arg7[%c0_6, %c0_7], %9 {strides = array<i32>} : memref<8x16xf32, #tpu.memory_space<vmem>>, vector<1x16xf32>,
    %10 = arith.maximumf %3, %5 : vector<16xf32>
    %c1_8 = arith.constant 1 : index
    %c0_9 = arith.constant 0 : index
    %11 = vector.load %arg7[%c1_8, %c0_9] : memref<8x16xf32, #tpu.memory_space<vmem>>, vector<1x16xf32>
    %12 = vector.shape_cast %11 : vector<1x16xf32> to vector<16xf32>
    %13 = vector.shape_cast %10 : vector<16xf32> to vector<1x16xf32>
    tpu.vector_store %arg7[%c1_8, %c0_9], %13 {strides = array<i32>} : memref<8x16xf32, #tpu.memory_space<vmem>>, vector<1x16xf32>,
    %c2 = arith.constant 2 : index
    %c0_10 = arith.constant 0 : index
    %14 = vector.load %arg7[%c2, %c0_10] : memref<8x16xf32, #tpu.memory_space<vmem>>, vector<1x16xf32>
    %15 = vector.shape_cast %14 : vector<1x16xf32> to vector<16xf32>
    %c3 = arith.constant 3 : index
    %c0_11 = arith.constant 0 : index
    %16 = vector.load %arg7[%c3, %c0_11] : memref<8x16xf32, #tpu.memory_space<vmem>>, vector<1x16xf32>
    %17 = vector.shape_cast %16 : vector<1x16xf32> to vector<16xf32>
    %18 = arith.minimumf %15, %17 : vector<16xf32>
    %c2_12 = arith.constant 2 : index
    %c0_13 = arith.constant 0 : index
    %19 = vector.load %arg7[%c2_12, %c0_13] : memref<8x16xf32, #tpu.memory_space<vmem>>, vector<1x16xf32>
    %20 = vector.shape_cast %19 : vector<1x16xf32> to vector<16xf32>
    %21 = vector.shape_cast %18 : vector<16xf32> to vector<1x16xf32>
    tpu.vector_store %arg7[%c2_12, %c0_13], %21 {strides = array<i32>} : memref<8x16xf32, #tpu.memory_space<vmem>>, vector<1x16xf32>,
    %22 = arith.maximumf %15, %17 : vector<16xf32>
    %c3_14 = arith.constant 3 : index
    %c0_15 = arith.constant 0 : index
    %23 = vector.load %arg7[%c3_14, %c0_15] : memref<8x16xf32, #tpu.memory_space<vmem>>, vector<1x16xf32>
    %24 = vector.shape_cast %23 : vector<1x16xf32> to vector<16xf32>
    %25 = vector.shape_cast %22 : vector<16xf32> to vector<1x16xf32>
    tpu.vector_store %arg7[%c3_14, %c0_15], %25 {strides = array<i32>} : memref<8x16xf32, #tpu.memory_space<vmem>>, vector<1x16xf32>,
    %c4 = arith.constant 4 : index
    %c0_16 = arith.constant 0 : index
    %26 = vector.load %arg7[%c4, %c0_16] : memref<8x16xf32, #tpu.memory_space<vmem>>, vector<1x16xf32>
    %27 = vector.shape_cast %26 : vector<1x16xf32> to vector<16xf32>
    %c5 = arith.constant 5 : index
    %c0_17 = arith.constant 0 : index
    %28 = vector.load %arg7[%c5, %c0_17] : memref<8x16xf32, #tpu.memory_space<vmem>>, vector<1x16xf32>
    %29 = vector.shape_cast %28 : vector<1x16xf32> to vector<16xf32>
    %30 = arith.minimumf %27, %29 : vector<16xf32>
    %c4_18 = arith.constant 4 : index
    %c0_19 = arith.constant 0 : index
    %31 = vector.load %arg7[%c4_18, %c0_19] : memref<8x16xf32, #tpu.memory_space<vmem>>, vector<1x16xf32>
    %32 = vector.shape_cast %31 : vector<1x16xf32> to vector<16xf32>
    %33 = vector.shape_cast %30 : vector<16xf32> to vector<1x16xf32>
    tpu.vector_store %arg7[%c4_18, %c0_19], %33 {strides = array<i32>} : memref<8x16xf32, #tpu.memory_space<vmem>>, vector<1x16xf32>,
    %34 = arith.maximumf %27, %29 : vector<16xf32>
    %c5_20 = arith.constant 5 : index
    %c0_21 = arith.constant 0 : index
    %35 = vector.load %arg7[%c5_20, %c0_21] : memref<8x16xf32, #tpu.memory_space<vmem>>, vector<1x16xf32>
    %36 = vector.shape_cast %35 : vector<1x16xf32> to vector<16xf32>
    %37 = vector.shape_cast %34 : vector<16xf32> to vector<1x16xf32>
    tpu.vector_store %arg7[%c5_20, %c0_21], %37 {strides = array<i32>} : memref<8x16xf32, #tpu.memory_space<vmem>>, vector<1x16xf32>,
    %c6 = arith.constant 6 : index
    %c0_22 = arith.constant 0 : index
    %38 = vector.load %arg7[%c6, %c0_22] : memref<8x16xf32, #tpu.memory_space<vmem>>, vector<1x16xf32>
    %39 = vector.shape_cast %38 : vector<1x16xf32> to vector<16xf32>
    %c7 = arith.constant 7 : index
    %c0_23 = arith.constant 0 : index
    %40 = vector.load %arg7[%c7, %c0_23] : memref<8x16xf32, #tpu.memory_space<vmem>>, vector<1x16xf32>
    %41 = vector.shape_cast %40 : vector<1x16xf32> to vector<16xf32>
    %42 = arith.minimumf %39, %41 : vector<16xf32>
    %c6_24 = arith.constant 6 : index
    %c0_25 = arith.constant 0 : index
    %43 = vector.load %arg7[%c6_24, %c0_25] : memref<8x16xf32, #tpu.memory_space<vmem>>, vector<1x16xf32>
    %44 = vector.shape_cast %43 : vector<1x16xf32> to vector<16xf32>
    %45 = vector.shape_cast %42 : vector<16xf32> to vector<1x16xf32>
    tpu.vector_store %arg7[%c6_24, %c0_25], %45 {strides = array<i32>} : memref<8x16xf32, #tpu.memory_space<vmem>>, vector<1x16xf32>,
    %46 = arith.maximumf %39, %41 : vector<16xf32>
    %c7_26 = arith.constant 7 : index
    %c0_27 = arith.constant 0 : index
    %47 = vector.load %arg7[%c7_26, %c0_27] : memref<8x16xf32, #tpu.memory_space<vmem>>, vector<1x16xf32>
    %48 = vector.shape_cast %47 : vector<1x16xf32> to vector<16xf32>
    %49 = vector.shape_cast %46 : vector<16xf32> to vector<1x16xf32>
    tpu.vector_store %arg7[%c7_26, %c0_27], %49 {strides = array<i32>} : memref<8x16xf32, #tpu.memory_space<vmem>>, vector<1x16xf32>,
    %c1_28 = arith.constant 1 : index
    %c0_29 = arith.constant 0 : index
    %50 = vector.load %arg7[%c1_28, %c0_29] : memref<8x16xf32, #tpu.memory_space<vmem>>, vector<1x16xf32>
    %51 = vector.shape_cast %50 : vector<1x16xf32> to vector<16xf32>
    %c2_30 = arith.constant 2 : index
    %c0_31 = arith.constant 0 : index
    %52 = vector.load %arg7[%c2_30, %c0_31] : memref<8x16xf32, #tpu.memory_space<vmem>>, vector<1x16xf32>
    %53 = vector.shape_cast %52 : vector<1x16xf32> to vector<16xf32>
    %54 = arith.minimumf %51, %53 : vector<16xf32>
    %c1_32 = arith.constant 1 : index
    %c0_33 = arith.constant 0 : index
    %55 = vector.load %arg7[%c1_32, %c0_33] : memref<8x16xf32, #tpu.memory_space<vmem>>, vector<1x16xf32>
    %56 = vector.shape_cast %55 : vector<1x16xf32> to vector<16xf32>
    %57 = vector.shape_cast %54 : vector<16xf32> to vector<1x16xf32>
    tpu.vector_store %arg7[%c1_32, %c0_33], %57 {strides = array<i32>} : memref<8x16xf32, #tpu.memory_space<vmem>>, vector<1x16xf32>,
    %58 = arith.maximumf %51, %53 : vector<16xf32>
    %c2_34 = arith.constant 2 : index
    %c0_35 = arith.constant 0 : index
    %59 = vector.load %arg7[%c2_34, %c0_35] : memref<8x16xf32, #tpu.memory_space<vmem>>, vector<1x16xf32>
    %60 = vector.shape_cast %59 : vector<1x16xf32> to vector<16xf32>
    %61 = vector.shape_cast %58 : vector<16xf32> to vector<1x16xf32>
    tpu.vector_store %arg7[%c2_34, %c0_35], %61 {strides = array<i32>} : memref<8x16xf32, #tpu.memory_space<vmem>>, vector<1x16xf32>,
    %c3_36 = arith.constant 3 : index
    %c0_37 = arith.constant 0 : index
    %62 = vector.load %arg7[%c3_36, %c0_37] : memref<8x16xf32, #tpu.memory_space<vmem>>, vector<1x16xf32>
    %63 = vector.shape_cast %62 : vector<1x16xf32> to vector<16xf32>
    %c4_38 = arith.constant 4 : index
    %c0_39 = arith.constant 0 : index
    %64 = vector.load %arg7[%c4_38, %c0_39] : memref<8x16xf32, #tpu.memory_space<vmem>>, vector<1x16xf32>
    %65 = vector.shape_cast %64 : vector<1x16xf32> to vector<16xf32>
    %66 = arith.minimumf %63, %65 : vector<16xf32>
    %c3_40 = arith.constant 3 : index
    %c0_41 = arith.constant 0 : index
    %67 = vector.load %arg7[%c3_40, %c0_41] : memref<8x16xf32, #tpu.memory_space<vmem>>, vector<1x16xf32>
    %68 = vector.shape_cast %67 : vector<1x16xf32> to vector<16xf32>
    %69 = vector.shape_cast %66 : vector<16xf32> to vector<1x16xf32>
    tpu.vector_store %arg7[%c3_40, %c0_41], %69 {strides = array<i32>} : memref<8x16xf32, #tpu.memory_space<vmem>>, vector<1x16xf32>,
    %70 = arith.maximumf %63, %65 : vector<16xf32>
    %c4_42 = arith.constant 4 : index
    %c0_43 = arith.constant 0 : index
    %71 = vector.load %arg7[%c4_42, %c0_43] : memref<8x16xf32, #tpu.memory_space<vmem>>, vector<1x16xf32>
    %72 = vector.shape_cast %71 : vector<1x16xf32> to vector<16xf32>
    %73 = vector.shape_cast %70 : vector<16xf32> to vector<1x16xf32>
    tpu.vector_store %arg7[%c4_42, %c0_43], %73 {strides = array<i32>} : memref<8x16xf32, #tpu.memory_space<vmem>>, vector<1x16xf32>,
    %c5_44 = arith.constant 5 : index
    %c0_45 = arith.constant 0 : index
    %74 = vector.load %arg7[%c5_44, %c0_45] : memref<8x16xf32, #tpu.memory_space<vmem>>, vector<1x16xf32>
    %75 = vector.shape_cast %74 : vector<1x16xf32> to vector<16xf32>
    %c6_46 = arith.constant 6 : index
    %c0_47 = arith.constant 0 : index
    %76 = vector.load %arg7[%c6_46, %c0_47] : memref<8x16xf32, #tpu.memory_space<vmem>>, vector<1x16xf32>
    %77 = vector.shape_cast %76 : vector<1x16xf32> to vector<16xf32>
    %78 = arith.minimumf %75, %77 : vector<16xf32>
    %c5_48 = arith.constant 5 : index
    %c0_49 = arith.constant 0 : index
    %79 = vector.load %arg7[%c5_48, %c0_49] : memref<8x16xf32, #tpu.memory_space<vmem>>, vector<1x16xf32>
    %80 = vector.shape_cast %79 : vector<1x16xf32> to vector<16xf32>
    %81 = vector.shape_cast %78 : vector<16xf32> to vector<1x16xf32>
    tpu.vector_store %arg7[%c5_48, %c0_49], %81 {strides = array<i32>} : memref<8x16xf32, #tpu.memory_space<vmem>>, vector<1x16xf32>,
    %82 = arith.maximumf %75, %77 : vector<16xf32>
    %c6_50 = arith.constant 6 : index
    %c0_51 = arith.constant 0 : index
    %83 = vector.load %arg7[%c6_50, %c0_51] : memref<8x16xf32, #tpu.memory_space<vmem>>, vector<1x16xf32>
    %84 = vector.shape_cast %83 : vector<1x16xf32> to vector<16xf32>
    %85 = vector.shape_cast %82 : vector<16xf32> to vector<1x16xf32>
    tpu.vector_store %arg7[%c6_50, %c0_51], %85 {strides = array<i32>} : memref<8x16xf32, #tpu.memory_space<vmem>>, vector<1x16xf32>,
    %c0_52 = arith.constant 0 : index
    %c0_53 = arith.constant 0 : index
    %86 = vector.load %arg7[%c0_52, %c0_53] : memref<8x16xf32, #tpu.memory_space<vmem>>, vector<1x16xf32>
    %87 = vector.shape_cast %86 : vector<1x16xf32> to vector<16xf32>
    %c1_54 = arith.constant 1 : index
    %c0_55 = arith.constant 0 : index
    %88 = vector.load %arg7[%c1_54, %c0_55] : memref<8x16xf32, #tpu.memory_space<vmem>>, vector<1x16xf32>
    %89 = vector.shape_cast %88 : vector<1x16xf32> to vector<16xf32>
    %90 = arith.minimumf %87, %89 : vector<16xf32>
    %c0_56 = arith.constant 0 : index
    %c0_57 = arith.constant 0 : index
    %91 = vector.load %arg7[%c0_56, %c0_57] : memref<8x16xf32, #tpu.memory_space<vmem>>, vector<1x16xf32>
    %92 = vector.shape_cast %91 : vector<1x16xf32> to vector<16xf32>
    %93 = vector.shape_cast %90 : vector<16xf32> to vector<1x16xf32>
    tpu.vector_store %arg7[%c0_56, %c0_57], %93 {strides = array<i32>} : memref<8x16xf32, #tpu.memory_space<vmem>>, vector<1x16xf32>,
    %94 = arith.maximumf %87, %89 : vector<16xf32>
    %c1_58 = arith.constant 1 : index
    %c0_59 = arith.constant 0 : index
    %95 = vector.load %arg7[%c1_58, %c0_59] : memref<8x16xf32, #tpu.memory_space<vmem>>, vector<1x16xf32>
    %96 = vector.shape_cast %95 : vector<1x16xf32> to vector<16xf32>
    %97 = vector.shape_cast %94 : vector<16xf32> to vector<1x16xf32>
    tpu.vector_store %arg7[%c1_58, %c0_59], %97 {strides = array<i32>} : memref<8x16xf32, #tpu.memory_space<vmem>>, vector<1x16xf32>,
    %c2_60 = arith.constant 2 : index
    %c0_61 = arith.constant 0 : index
    %98 = vector.load %arg7[%c2_60, %c0_61] : memref<8x16xf32, #tpu.memory_space<vmem>>, vector<1x16xf32>
    %99 = vector.shape_cast %98 : vector<1x16xf32> to vector<16xf32>
    %c3_62 = arith.constant 3 : index
    %c0_63 = arith.constant 0 : index
    %100 = vector.load %arg7[%c3_62, %c0_63] : memref<8x16xf32, #tpu.memory_space<vmem>>, vector<1x16xf32>
    %101 = vector.shape_cast %100 : vector<1x16xf32> to vector<16xf32>
    %102 = arith.minimumf %99, %101 : vector<16xf32>
    %c2_64 = arith.constant 2 : index
    %c0_65 = arith.constant 0 : index
    %103 = vector.load %arg7[%c2_64, %c0_65] : memref<8x16xf32, #tpu.memory_space<vmem>>, vector<1x16xf32>
    %104 = vector.shape_cast %103 : vector<1x16xf32> to vector<16xf32>
    %105 = vector.shape_cast %102 : vector<16xf32> to vector<1x16xf32>
    tpu.vector_store %arg7[%c2_64, %c0_65], %105 {strides = array<i32>} : memref<8x16xf32, #tpu.memory_space<vmem>>, vector<1x16xf32>,
    %106 = arith.maximumf %99, %101 : vector<16xf32>
    %c3_66 = arith.constant 3 : index
    %c0_67 = arith.constant 0 : index
    %107 = vector.load %arg7[%c3_66, %c0_67] : memref<8x16xf32, #tpu.memory_space<vmem>>, vector<1x16xf32>
    %108 = vector.shape_cast %107 : vector<1x16xf32> to vector<16xf32>
    %109 = vector.shape_cast %106 : vector<16xf32> to vector<1x16xf32>
    tpu.vector_store %arg7[%c3_66, %c0_67], %109 {strides = array<i32>} : memref<8x16xf32, #tpu.memory_space<vmem>>, vector<1x16xf32>,
    %c4_68 = arith.constant 4 : index
    %c0_69 = arith.constant 0 : index
    %110 = vector.load %arg7[%c4_68, %c0_69] : memref<8x16xf32, #tpu.memory_space<vmem>>, vector<1x16xf32>
    %111 = vector.shape_cast %110 : vector<1x16xf32> to vector<16xf32>
    %c5_70 = arith.constant 5 : index
    %c0_71 = arith.constant 0 : index
    %112 = vector.load %arg7[%c5_70, %c0_71] : memref<8x16xf32, #tpu.memory_space<vmem>>, vector<1x16xf32>
    %113 = vector.shape_cast %112 : vector<1x16xf32> to vector<16xf32>
    %114 = arith.minimumf %111, %113 : vector<16xf32>
    %c4_72 = arith.constant 4 : index
    %c0_73 = arith.constant 0 : index
    %115 = vector.load %arg7[%c4_72, %c0_73] : memref<8x16xf32, #tpu.memory_space<vmem>>, vector<1x16xf32>
    %116 = vector.shape_cast %115 : vector<1x16xf32> to vector<16xf32>
    %117 = vector.shape_cast %114 : vector<16xf32> to vector<1x16xf32>
    tpu.vector_store %arg7[%c4_72, %c0_73], %117 {strides = array<i32>} : memref<8x16xf32, #tpu.memory_space<vmem>>, vector<1x16xf32>,
    %118 = arith.maximumf %111, %113 : vector<16xf32>
    %c5_74 = arith.constant 5 : index
    %c0_75 = arith.constant 0 : index
    %119 = vector.load %arg7[%c5_74, %c0_75] : memref<8x16xf32, #tpu.memory_space<vmem>>, vector<1x16xf32>
    %120 = vector.shape_cast %119 : vector<1x16xf32> to vector<16xf32>
    %121 = vector.shape_cast %118 : vector<16xf32> to vector<1x16xf32>
    tpu.vector_store %arg7[%c5_74, %c0_75], %121 {strides = array<i32>} : memref<8x16xf32, #tpu.memory_space<vmem>>, vector<1x16xf32>,
    %c6_76 = arith.constant 6 : index
    %c0_77 = arith.constant 0 : index
    %122 = vector.load %arg7[%c6_76, %c0_77] : memref<8x16xf32, #tpu.memory_space<vmem>>, vector<1x16xf32>
    %123 = vector.shape_cast %122 : vector<1x16xf32> to vector<16xf32>
    %c7_78 = arith.constant 7 : index
    %c0_79 = arith.constant 0 : index
    %124 = vector.load %arg7[%c7_78, %c0_79] : memref<8x16xf32, #tpu.memory_space<vmem>>, vector<1x16xf32>
    %125 = vector.shape_cast %124 : vector<1x16xf32> to vector<16xf32>
    %126 = arith.minimumf %123, %125 : vector<16xf32>
    %c6_80 = arith.constant 6 : index
    %c0_81 = arith.constant 0 : index
    %127 = vector.load %arg7[%c6_80, %c0_81] : memref<8x16xf32, #tpu.memory_space<vmem>>, vector<1x16xf32>
    %128 = vector.shape_cast %127 : vector<1x16xf32> to vector<16xf32>
    %129 = vector.shape_cast %126 : vector<16xf32> to vector<1x16xf32>
    tpu.vector_store %arg7[%c6_80, %c0_81], %129 {strides = array<i32>} : memref<8x16xf32, #tpu.memory_space<vmem>>, vector<1x16xf32>,
    %130 = arith.maximumf %123, %125 : vector<16xf32>
    %c7_82 = arith.constant 7 : index
    %c0_83 = arith.constant 0 : index
    %131 = vector.load %arg7[%c7_82, %c0_83] : memref<8x16xf32, #tpu.memory_space<vmem>>, vector<1x16xf32>
    %132 = vector.shape_cast %131 : vector<1x16xf32> to vector<16xf32>
    %133 = vector.shape_cast %130 : vector<16xf32> to vector<1x16xf32>
    tpu.vector_store %arg7[%c7_82, %c0_83], %133 {strides = array<i32>} : memref<8x16xf32, #tpu.memory_space<vmem>>, vector<1x16xf32>,
    %c1_84 = arith.constant 1 : index
    %c0_85 = arith.constant 0 : index
    %134 = vector.load %arg7[%c1_84, %c0_85] : memref<8x16xf32, #tpu.memory_space<vmem>>, vector<1x16xf32>
    %135 = vector.shape_cast %134 : vector<1x16xf32> to vector<16xf32>
    %c2_86 = arith.constant 2 : index
    %c0_87 = arith.constant 0 : index
    %136 = vector.load %arg7[%c2_86, %c0_87] : memref<8x16xf32, #tpu.memory_space<vmem>>, vector<1x16xf32>
    %137 = vector.shape_cast %136 : vector<1x16xf32> to vector<16xf32>
    %138 = arith.minimumf %135, %137 : vector<16xf32>
    %c1_88 = arith.constant 1 : index
    %c0_89 = arith.constant 0 : index
    %139 = vector.load %arg7[%c1_88, %c0_89] : memref<8x16xf32, #tpu.memory_space<vmem>>, vector<1x16xf32>
    %140 = vector.shape_cast %139 : vector<1x16xf32> to vector<16xf32>
    %141 = vector.shape_cast %138 : vector<16xf32> to vector<1x16xf32>
    tpu.vector_store %arg7[%c1_88, %c0_89], %141 {strides = array<i32>} : memref<8x16xf32, #tpu.memory_space<vmem>>, vector<1x16xf32>,
    %142 = arith.maximumf %135, %137 : vector<16xf32>
    %c2_90 = arith.constant 2 : index
    %c0_91 = arith.constant 0 : index
    %143 = vector.load %arg7[%c2_90, %c0_91] : memref<8x16xf32, #tpu.memory_space<vmem>>, vector<1x16xf32>
    %144 = vector.shape_cast %143 : vector<1x16xf32> to vector<16xf32>
    %145 = vector.shape_cast %142 : vector<16xf32> to vector<1x16xf32>
    tpu.vector_store %arg7[%c2_90, %c0_91], %145 {strides = array<i32>} : memref<8x16xf32, #tpu.memory_space<vmem>>, vector<1x16xf32>,
    %c3_92 = arith.constant 3 : index
    %c0_93 = arith.constant 0 : index
    %146 = vector.load %arg7[%c3_92, %c0_93] : memref<8x16xf32, #tpu.memory_space<vmem>>, vector<1x16xf32>
    %147 = vector.shape_cast %146 : vector<1x16xf32> to vector<16xf32>
    %c4_94 = arith.constant 4 : index
    %c0_95 = arith.constant 0 : index
    %148 = vector.load %arg7[%c4_94, %c0_95] : memref<8x16xf32, #tpu.memory_space<vmem>>, vector<1x16xf32>
    %149 = vector.shape_cast %148 : vector<1x16xf32> to vector<16xf32>
    %150 = arith.minimumf %147, %149 : vector<16xf32>
    %c3_96 = arith.constant 3 : index
    %c0_97 = arith.constant 0 : index
    %151 = vector.load %arg7[%c3_96, %c0_97] : memref<8x16xf32, #tpu.memory_space<vmem>>, vector<1x16xf32>
    %152 = vector.shape_cast %151 : vector<1x16xf32> to vector<16xf32>
    %153 = vector.shape_cast %150 : vector<16xf32> to vector<1x16xf32>
    tpu.vector_store %arg7[%c3_96, %c0_97], %153 {strides = array<i32>} : memref<8x16xf32, #tpu.memory_space<vmem>>, vector<1x16xf32>,
    %154 = arith.maximumf %147, %149 : vector<16xf32>
    %c4_98 = arith.constant 4 : index
    %c0_99 = arith.constant 0 : index
    %155 = vector.load %arg7[%c4_98, %c0_99] : memref<8x16xf32, #tpu.memory_space<vmem>>, vector<1x16xf32>
    %156 = vector.shape_cast %155 : vector<1x16xf32> to vector<16xf32>
    %157 = vector.shape_cast %154 : vector<16xf32> to vector<1x16xf32>
    tpu.vector_store %arg7[%c4_98, %c0_99], %157 {strides = array<i32>} : memref<8x16xf32, #tpu.memory_space<vmem>>, vector<1x16xf32>,
    %c5_100 = arith.constant 5 : index
    %c0_101 = arith.constant 0 : index
    %158 = vector.load %arg7[%c5_100, %c0_101] : memref<8x16xf32, #tpu.memory_space<vmem>>, vector<1x16xf32>
    %159 = vector.shape_cast %158 : vector<1x16xf32> to vector<16xf32>
    %c6_102 = arith.constant 6 : index
    %c0_103 = arith.constant 0 : index
    %160 = vector.load %arg7[%c6_102, %c0_103] : memref<8x16xf32, #tpu.memory_space<vmem>>, vector<1x16xf32>
    %161 = vector.shape_cast %160 : vector<1x16xf32> to vector<16xf32>
    %162 = arith.minimumf %159, %161 : vector<16xf32>
    %c5_104 = arith.constant 5 : index
    %c0_105 = arith.constant 0 : index
    %163 = vector.load %arg7[%c5_104, %c0_105] : memref<8x16xf32, #tpu.memory_space<vmem>>, vector<1x16xf32>
    %164 = vector.shape_cast %163 : vector<1x16xf32> to vector<16xf32>
    %165 = vector.shape_cast %162 : vector<16xf32> to vector<1x16xf32>
    tpu.vector_store %arg7[%c5_104, %c0_105], %165 {strides = array<i32>} : memref<8x16xf32, #tpu.memory_space<vmem>>, vector<1x16xf32>,
    %166 = arith.maximumf %159, %161 : vector<16xf32>
    %c6_106 = arith.constant 6 : index
    %c0_107 = arith.constant 0 : index
    %167 = vector.load %arg7[%c6_106, %c0_107] : memref<8x16xf32, #tpu.memory_space<vmem>>, vector<1x16xf32>
    %168 = vector.shape_cast %167 : vector<1x16xf32> to vector<16xf32>
    %169 = vector.shape_cast %166 : vector<16xf32> to vector<1x16xf32>
    tpu.vector_store %arg7[%c6_106, %c0_107], %169 {strides = array<i32>} : memref<8x16xf32, #tpu.memory_space<vmem>>, vector<1x16xf32>,
    %c0_108 = arith.constant 0 : index
    %c0_109 = arith.constant 0 : index
    %170 = vector.load %arg7[%c0_108, %c0_109] : memref<8x16xf32, #tpu.memory_space<vmem>>, vector<1x16xf32>
    %171 = vector.shape_cast %170 : vector<1x16xf32> to vector<16xf32>
    %c1_110 = arith.constant 1 : index
    %c0_111 = arith.constant 0 : index
    %172 = vector.load %arg7[%c1_110, %c0_111] : memref<8x16xf32, #tpu.memory_space<vmem>>, vector<1x16xf32>
    %173 = vector.shape_cast %172 : vector<1x16xf32> to vector<16xf32>
    %174 = arith.minimumf %171, %173 : vector<16xf32>
    %c0_112 = arith.constant 0 : index
    %c0_113 = arith.constant 0 : index
    %175 = vector.load %arg7[%c0_112, %c0_113] : memref<8x16xf32, #tpu.memory_space<vmem>>, vector<1x16xf32>
    %176 = vector.shape_cast %175 : vector<1x16xf32> to vector<16xf32>
    %177 = vector.shape_cast %174 : vector<16xf32> to vector<1x16xf32>
    tpu.vector_store %arg7[%c0_112, %c0_113], %177 {strides = array<i32>} : memref<8x16xf32, #tpu.memory_space<vmem>>, vector<1x16xf32>,
    %178 = arith.maximumf %171, %173 : vector<16xf32>
    %c1_114 = arith.constant 1 : index
    %c0_115 = arith.constant 0 : index
    %179 = vector.load %arg7[%c1_114, %c0_115] : memref<8x16xf32, #tpu.memory_space<vmem>>, vector<1x16xf32>
    %180 = vector.shape_cast %179 : vector<1x16xf32> to vector<16xf32>
    %181 = vector.shape_cast %178 : vector<16xf32> to vector<1x16xf32>
    tpu.vector_store %arg7[%c1_114, %c0_115], %181 {strides = array<i32>} : memref<8x16xf32, #tpu.memory_space<vmem>>, vector<1x16xf32>,
    %c2_116 = arith.constant 2 : index
    %c0_117 = arith.constant 0 : index
    %182 = vector.load %arg7[%c2_116, %c0_117] : memref<8x16xf32, #tpu.memory_space<vmem>>, vector<1x16xf32>
    %183 = vector.shape_cast %182 : vector<1x16xf32> to vector<16xf32>
    %c3_118 = arith.constant 3 : index
    %c0_119 = arith.constant 0 : index
    %184 = vector.load %arg7[%c3_118, %c0_119] : memref<8x16xf32, #tpu.memory_space<vmem>>, vector<1x16xf32>
    %185 = vector.shape_cast %184 : vector<1x16xf32> to vector<16xf32>
    %186 = arith.minimumf %183, %185 : vector<16xf32>
    %c2_120 = arith.constant 2 : index
    %c0_121 = arith.constant 0 : index
    %187 = vector.load %arg7[%c2_120, %c0_121] : memref<8x16xf32, #tpu.memory_space<vmem>>, vector<1x16xf32>
    %188 = vector.shape_cast %187 : vector<1x16xf32> to vector<16xf32>
    %189 = vector.shape_cast %186 : vector<16xf32> to vector<1x16xf32>
    tpu.vector_store %arg7[%c2_120, %c0_121], %189 {strides = array<i32>} : memref<8x16xf32, #tpu.memory_space<vmem>>, vector<1x16xf32>,
    %190 = arith.maximumf %183, %185 : vector<16xf32>
    %c3_122 = arith.constant 3 : index
    %c0_123 = arith.constant 0 : index
    %191 = vector.load %arg7[%c3_122, %c0_123] : memref<8x16xf32, #tpu.memory_space<vmem>>, vector<1x16xf32>
    %192 = vector.shape_cast %191 : vector<1x16xf32> to vector<16xf32>
    %193 = vector.shape_cast %190 : vector<16xf32> to vector<1x16xf32>
    tpu.vector_store %arg7[%c3_122, %c0_123], %193 {strides = array<i32>} : memref<8x16xf32, #tpu.memory_space<vmem>>, vector<1x16xf32>,
    %c4_124 = arith.constant 4 : index
    %c0_125 = arith.constant 0 : index
    %194 = vector.load %arg7[%c4_124, %c0_125] : memref<8x16xf32, #tpu.memory_space<vmem>>, vector<1x16xf32>
    %195 = vector.shape_cast %194 : vector<1x16xf32> to vector<16xf32>
    %c5_126 = arith.constant 5 : index
    %c0_127 = arith.constant 0 : index
    %196 = vector.load %arg7[%c5_126, %c0_127] : memref<8x16xf32, #tpu.memory_space<vmem>>, vector<1x16xf32>
    %197 = vector.shape_cast %196 : vector<1x16xf32> to vector<16xf32>
    %198 = arith.minimumf %195, %197 : vector<16xf32>
    %c4_128 = arith.constant 4 : index
    %c0_129 = arith.constant 0 : index
    %199 = vector.load %arg7[%c4_128, %c0_129] : memref<8x16xf32, #tpu.memory_space<vmem>>, vector<1x16xf32>
    %200 = vector.shape_cast %199 : vector<1x16xf32> to vector<16xf32>
    %201 = vector.shape_cast %198 : vector<16xf32> to vector<1x16xf32>
    tpu.vector_store %arg7[%c4_128, %c0_129], %201 {strides = array<i32>} : memref<8x16xf32, #tpu.memory_space<vmem>>, vector<1x16xf32>,
    %202 = arith.maximumf %195, %197 : vector<16xf32>
    %c5_130 = arith.constant 5 : index
    %c0_131 = arith.constant 0 : index
    %203 = vector.load %arg7[%c5_130, %c0_131] : memref<8x16xf32, #tpu.memory_space<vmem>>, vector<1x16xf32>
    %204 = vector.shape_cast %203 : vector<1x16xf32> to vector<16xf32>
    %205 = vector.shape_cast %202 : vector<16xf32> to vector<1x16xf32>
    tpu.vector_store %arg7[%c5_130, %c0_131], %205 {strides = array<i32>} : memref<8x16xf32, #tpu.memory_space<vmem>>, vector<1x16xf32>,
    %c6_132 = arith.constant 6 : index
    %c0_133 = arith.constant 0 : index
    %206 = vector.load %arg7[%c6_132, %c0_133] : memref<8x16xf32, #tpu.memory_space<vmem>>, vector<1x16xf32>
    %207 = vector.shape_cast %206 : vector<1x16xf32> to vector<16xf32>
    %c7_134 = arith.constant 7 : index
    %c0_135 = arith.constant 0 : index
    %208 = vector.load %arg7[%c7_134, %c0_135] : memref<8x16xf32, #tpu.memory_space<vmem>>, vector<1x16xf32>
    %209 = vector.shape_cast %208 : vector<1x16xf32> to vector<16xf32>
    %210 = arith.minimumf %207, %209 : vector<16xf32>
    %c6_136 = arith.constant 6 : index
    %c0_137 = arith.constant 0 : index
    %211 = vector.load %arg7[%c6_136, %c0_137] : memref<8x16xf32, #tpu.memory_space<vmem>>, vector<1x16xf32>
    %212 = vector.shape_cast %211 : vector<1x16xf32> to vector<16xf32>
    %213 = vector.shape_cast %210 : vector<16xf32> to vector<1x16xf32>
    tpu.vector_store %arg7[%c6_136, %c0_137], %213 {strides = array<i32>} : memref<8x16xf32, #tpu.memory_space<vmem>>, vector<1x16xf32>,
    %214 = arith.maximumf %207, %209 : vector<16xf32>
    %c7_138 = arith.constant 7 : index
    %c0_139 = arith.constant 0 : index
    %215 = vector.load %arg7[%c7_138, %c0_139] : memref<8x16xf32, #tpu.memory_space<vmem>>, vector<1x16xf32>
    %216 = vector.shape_cast %215 : vector<1x16xf32> to vector<16xf32>
    %217 = vector.shape_cast %214 : vector<16xf32> to vector<1x16xf32>
    tpu.vector_store %arg7[%c7_138, %c0_139], %217 {strides = array<i32>} : memref<8x16xf32, #tpu.memory_space<vmem>>, vector<1x16xf32>,
    %c1_140 = arith.constant 1 : index
    %c0_141 = arith.constant 0 : index
    %218 = vector.load %arg7[%c1_140, %c0_141] : memref<8x16xf32, #tpu.memory_space<vmem>>, vector<1x16xf32>
    %219 = vector.shape_cast %218 : vector<1x16xf32> to vector<16xf32>
    %c2_142 = arith.constant 2 : index
    %c0_143 = arith.constant 0 : index
    %220 = vector.load %arg7[%c2_142, %c0_143] : memref<8x16xf32, #tpu.memory_space<vmem>>, vector<1x16xf32>
    %221 = vector.shape_cast %220 : vector<1x16xf32> to vector<16xf32>
    %222 = arith.minimumf %219, %221 : vector<16xf32>
    %c1_144 = arith.constant 1 : index
    %c0_145 = arith.constant 0 : index
    %223 = vector.load %arg7[%c1_144, %c0_145] : memref<8x16xf32, #tpu.memory_space<vmem>>, vector<1x16xf32>
    %224 = vector.shape_cast %223 : vector<1x16xf32> to vector<16xf32>
    %225 = vector.shape_cast %222 : vector<16xf32> to vector<1x16xf32>
    tpu.vector_store %arg7[%c1_144, %c0_145], %225 {strides = array<i32>} : memref<8x16xf32, #tpu.memory_space<vmem>>, vector<1x16xf32>,
    %226 = arith.maximumf %219, %221 : vector<16xf32>
    %c2_146 = arith.constant 2 : index
    %c0_147 = arith.constant 0 : index
    %227 = vector.load %arg7[%c2_146, %c0_147] : memref<8x16xf32, #tpu.memory_space<vmem>>, vector<1x16xf32>
    %228 = vector.shape_cast %227 : vector<1x16xf32> to vector<16xf32>
    %229 = vector.shape_cast %226 : vector<16xf32> to vector<1x16xf32>
    tpu.vector_store %arg7[%c2_146, %c0_147], %229 {strides = array<i32>} : memref<8x16xf32, #tpu.memory_space<vmem>>, vector<1x16xf32>,
    %c3_148 = arith.constant 3 : index
    %c0_149 = arith.constant 0 : index
    %230 = vector.load %arg7[%c3_148, %c0_149] : memref<8x16xf32, #tpu.memory_space<vmem>>, vector<1x16xf32>
    %231 = vector.shape_cast %230 : vector<1x16xf32> to vector<16xf32>
    %c4_150 = arith.constant 4 : index
    %c0_151 = arith.constant 0 : index
    %232 = vector.load %arg7[%c4_150, %c0_151] : memref<8x16xf32, #tpu.memory_space<vmem>>, vector<1x16xf32>
    %233 = vector.shape_cast %232 : vector<1x16xf32> to vector<16xf32>
    %234 = arith.minimumf %231, %233 : vector<16xf32>
    %c3_152 = arith.constant 3 : index
    %c0_153 = arith.constant 0 : index
    %235 = vector.load %arg7[%c3_152, %c0_153] : memref<8x16xf32, #tpu.memory_space<vmem>>, vector<1x16xf32>
    %236 = vector.shape_cast %235 : vector<1x16xf32> to vector<16xf32>
    %237 = vector.shape_cast %234 : vector<16xf32> to vector<1x16xf32>
    tpu.vector_store %arg7[%c3_152, %c0_153], %237 {strides = array<i32>} : memref<8x16xf32, #tpu.memory_space<vmem>>, vector<1x16xf32>,
    %238 = arith.maximumf %231, %233 : vector<16xf32>
    %c4_154 = arith.constant 4 : index
    %c0_155 = arith.constant 0 : index
    %239 = vector.load %arg7[%c4_154, %c0_155] : memref<8x16xf32, #tpu.memory_space<vmem>>, vector<1x16xf32>
    %240 = vector.shape_cast %239 : vector<1x16xf32> to vector<16xf32>
    %241 = vector.shape_cast %238 : vector<16xf32> to vector<1x16xf32>
    tpu.vector_store %arg7[%c4_154, %c0_155], %241 {strides = array<i32>} : memref<8x16xf32, #tpu.memory_space<vmem>>, vector<1x16xf32>,
    %c5_156 = arith.constant 5 : index
    %c0_157 = arith.constant 0 : index
    %242 = vector.load %arg7[%c5_156, %c0_157] : memref<8x16xf32, #tpu.memory_space<vmem>>, vector<1x16xf32>
    %243 = vector.shape_cast %242 : vector<1x16xf32> to vector<16xf32>
    %c6_158 = arith.constant 6 : index
    %c0_159 = arith.constant 0 : index
    %244 = vector.load %arg7[%c6_158, %c0_159] : memref<8x16xf32, #tpu.memory_space<vmem>>, vector<1x16xf32>
    %245 = vector.shape_cast %244 : vector<1x16xf32> to vector<16xf32>
    %246 = arith.minimumf %243, %245 : vector<16xf32>
    %c5_160 = arith.constant 5 : index
    %c0_161 = arith.constant 0 : index
    %247 = vector.load %arg7[%c5_160, %c0_161] : memref<8x16xf32, #tpu.memory_space<vmem>>, vector<1x16xf32>
    %248 = vector.shape_cast %247 : vector<1x16xf32> to vector<16xf32>
    %249 = vector.shape_cast %246 : vector<16xf32> to vector<1x16xf32>
    tpu.vector_store %arg7[%c5_160, %c0_161], %249 {strides = array<i32>} : memref<8x16xf32, #tpu.memory_space<vmem>>, vector<1x16xf32>,
    %250 = arith.maximumf %243, %245 : vector<16xf32>
    %c6_162 = arith.constant 6 : index
    %c0_163 = arith.constant 0 : index
    %251 = vector.load %arg7[%c6_162, %c0_163] : memref<8x16xf32, #tpu.memory_space<vmem>>, vector<1x16xf32>
    %252 = vector.shape_cast %251 : vector<1x16xf32> to vector<16xf32>
    %253 = vector.shape_cast %250 : vector<16xf32> to vector<1x16xf32>
    tpu.vector_store %arg7[%c6_162, %c0_163], %253 {strides = array<i32>} : memref<8x16xf32, #tpu.memory_space<vmem>>, vector<1x16xf32>,
    %c0_164 = arith.constant 0 : index
    %c0_165 = arith.constant 0 : index
    %254 = vector.load %arg7[%c0_164, %c0_165] : memref<8x16xf32, #tpu.memory_space<vmem>>, vector<1x16xf32>
    %255 = vector.shape_cast %254 : vector<1x16xf32> to vector<16xf32>
    %c1_166 = arith.constant 1 : index
    %c0_167 = arith.constant 0 : index
    %256 = vector.load %arg7[%c1_166, %c0_167] : memref<8x16xf32, #tpu.memory_space<vmem>>, vector<1x16xf32>
    %257 = vector.shape_cast %256 : vector<1x16xf32> to vector<16xf32>
    %258 = arith.minimumf %255, %257 : vector<16xf32>
    %c0_168 = arith.constant 0 : index
    %c0_169 = arith.constant 0 : index
    %259 = vector.load %arg7[%c0_168, %c0_169] : memref<8x16xf32, #tpu.memory_space<vmem>>, vector<1x16xf32>
    %260 = vector.shape_cast %259 : vector<1x16xf32> to vector<16xf32>
    %261 = vector.shape_cast %258 : vector<16xf32> to vector<1x16xf32>
    tpu.vector_store %arg7[%c0_168, %c0_169], %261 {strides = array<i32>} : memref<8x16xf32, #tpu.memory_space<vmem>>, vector<1x16xf32>,
    %262 = arith.maximumf %255, %257 : vector<16xf32>
    %c1_170 = arith.constant 1 : index
    %c0_171 = arith.constant 0 : index
    %263 = vector.load %arg7[%c1_170, %c0_171] : memref<8x16xf32, #tpu.memory_space<vmem>>, vector<1x16xf32>
    %264 = vector.shape_cast %263 : vector<1x16xf32> to vector<16xf32>
    %265 = vector.shape_cast %262 : vector<16xf32> to vector<1x16xf32>
    tpu.vector_store %arg7[%c1_170, %c0_171], %265 {strides = array<i32>} : memref<8x16xf32, #tpu.memory_space<vmem>>, vector<1x16xf32>,
    %c2_172 = arith.constant 2 : index
    %c0_173 = arith.constant 0 : index
    %266 = vector.load %arg7[%c2_172, %c0_173] : memref<8x16xf32, #tpu.memory_space<vmem>>, vector<1x16xf32>
    %267 = vector.shape_cast %266 : vector<1x16xf32> to vector<16xf32>
    %c3_174 = arith.constant 3 : index
    %c0_175 = arith.constant 0 : index
    %268 = vector.load %arg7[%c3_174, %c0_175] : memref<8x16xf32, #tpu.memory_space<vmem>>, vector<1x16xf32>
    %269 = vector.shape_cast %268 : vector<1x16xf32> to vector<16xf32>
    %270 = arith.minimumf %267, %269 : vector<16xf32>
    %c2_176 = arith.constant 2 : index
    %c0_177 = arith.constant 0 : index
    %271 = vector.load %arg7[%c2_176, %c0_177] : memref<8x16xf32, #tpu.memory_space<vmem>>, vector<1x16xf32>
    %272 = vector.shape_cast %271 : vector<1x16xf32> to vector<16xf32>
    %273 = vector.shape_cast %270 : vector<16xf32> to vector<1x16xf32>
    tpu.vector_store %arg7[%c2_176, %c0_177], %273 {strides = array<i32>} : memref<8x16xf32, #tpu.memory_space<vmem>>, vector<1x16xf32>,
    %274 = arith.maximumf %267, %269 : vector<16xf32>
    %c3_178 = arith.constant 3 : index
    %c0_179 = arith.constant 0 : index
    %275 = vector.load %arg7[%c3_178, %c0_179] : memref<8x16xf32, #tpu.memory_space<vmem>>, vector<1x16xf32>
    %276 = vector.shape_cast %275 : vector<1x16xf32> to vector<16xf32>
    %277 = vector.shape_cast %274 : vector<16xf32> to vector<1x16xf32>
    tpu.vector_store %arg7[%c3_178, %c0_179], %277 {strides = array<i32>} : memref<8x16xf32, #tpu.memory_space<vmem>>, vector<1x16xf32>,
    %c4_180 = arith.constant 4 : index
    %c0_181 = arith.constant 0 : index
    %278 = vector.load %arg7[%c4_180, %c0_181] : memref<8x16xf32, #tpu.memory_space<vmem>>, vector<1x16xf32>
    %279 = vector.shape_cast %278 : vector<1x16xf32> to vector<16xf32>
    %c5_182 = arith.constant 5 : index
    %c0_183 = arith.constant 0 : index
    %280 = vector.load %arg7[%c5_182, %c0_183] : memref<8x16xf32, #tpu.memory_space<vmem>>, vector<1x16xf32>
    %281 = vector.shape_cast %280 : vector<1x16xf32> to vector<16xf32>
    %282 = arith.minimumf %279, %281 : vector<16xf32>
    %c4_184 = arith.constant 4 : index
    %c0_185 = arith.constant 0 : index
    %283 = vector.load %arg7[%c4_184, %c0_185] : memref<8x16xf32, #tpu.memory_space<vmem>>, vector<1x16xf32>
    %284 = vector.shape_cast %283 : vector<1x16xf32> to vector<16xf32>
    %285 = vector.shape_cast %282 : vector<16xf32> to vector<1x16xf32>
    tpu.vector_store %arg7[%c4_184, %c0_185], %285 {strides = array<i32>} : memref<8x16xf32, #tpu.memory_space<vmem>>, vector<1x16xf32>,
    %286 = arith.maximumf %279, %281 : vector<16xf32>
    %c5_186 = arith.constant 5 : index
    %c0_187 = arith.constant 0 : index
    %287 = vector.load %arg7[%c5_186, %c0_187] : memref<8x16xf32, #tpu.memory_space<vmem>>, vector<1x16xf32>
    %288 = vector.shape_cast %287 : vector<1x16xf32> to vector<16xf32>
    %289 = vector.shape_cast %286 : vector<16xf32> to vector<1x16xf32>
    tpu.vector_store %arg7[%c5_186, %c0_187], %289 {strides = array<i32>} : memref<8x16xf32, #tpu.memory_space<vmem>>, vector<1x16xf32>,
    %c6_188 = arith.constant 6 : index
    %c0_189 = arith.constant 0 : index
    %290 = vector.load %arg7[%c6_188, %c0_189] : memref<8x16xf32, #tpu.memory_space<vmem>>, vector<1x16xf32>
    %291 = vector.shape_cast %290 : vector<1x16xf32> to vector<16xf32>
    %c7_190 = arith.constant 7 : index
    %c0_191 = arith.constant 0 : index
    %292 = vector.load %arg7[%c7_190, %c0_191] : memref<8x16xf32, #tpu.memory_space<vmem>>, vector<1x16xf32>
    %293 = vector.shape_cast %292 : vector<1x16xf32> to vector<16xf32>
    %294 = arith.minimumf %291, %293 : vector<16xf32>
    %c6_192 = arith.constant 6 : index
    %c0_193 = arith.constant 0 : index
    %295 = vector.load %arg7[%c6_192, %c0_193] : memref<8x16xf32, #tpu.memory_space<vmem>>, vector<1x16xf32>
    %296 = vector.shape_cast %295 : vector<1x16xf32> to vector<16xf32>
    %297 = vector.shape_cast %294 : vector<16xf32> to vector<1x16xf32>
    tpu.vector_store %arg7[%c6_192, %c0_193], %297 {strides = array<i32>} : memref<8x16xf32, #tpu.memory_space<vmem>>, vector<1x16xf32>,
    %298 = arith.maximumf %291, %293 : vector<16xf32>
    %c7_194 = arith.constant 7 : index
    %c0_195 = arith.constant 0 : index
    %299 = vector.load %arg7[%c7_194, %c0_195] : memref<8x16xf32, #tpu.memory_space<vmem>>, vector<1x16xf32>
    %300 = vector.shape_cast %299 : vector<1x16xf32> to vector<16xf32>
    %301 = vector.shape_cast %298 : vector<16xf32> to vector<1x16xf32>
    tpu.vector_store %arg7[%c7_194, %c0_195], %301 {strides = array<i32>} : memref<8x16xf32, #tpu.memory_space<vmem>>, vector<1x16xf32>,
    %c1_196 = arith.constant 1 : index
    %c0_197 = arith.constant 0 : index
    %302 = vector.load %arg7[%c1_196, %c0_197] : memref<8x16xf32, #tpu.memory_space<vmem>>, vector<1x16xf32>
    %303 = vector.shape_cast %302 : vector<1x16xf32> to vector<16xf32>
    %c2_198 = arith.constant 2 : index
    %c0_199 = arith.constant 0 : index
    %304 = vector.load %arg7[%c2_198, %c0_199] : memref<8x16xf32, #tpu.memory_space<vmem>>, vector<1x16xf32>
    %305 = vector.shape_cast %304 : vector<1x16xf32> to vector<16xf32>
    %306 = arith.minimumf %303, %305 : vector<16xf32>
    %c1_200 = arith.constant 1 : index
    %c0_201 = arith.constant 0 : index
    %307 = vector.load %arg7[%c1_200, %c0_201] : memref<8x16xf32, #tpu.memory_space<vmem>>, vector<1x16xf32>
    %308 = vector.shape_cast %307 : vector<1x16xf32> to vector<16xf32>
    %309 = vector.shape_cast %306 : vector<16xf32> to vector<1x16xf32>
    tpu.vector_store %arg7[%c1_200, %c0_201], %309 {strides = array<i32>} : memref<8x16xf32, #tpu.memory_space<vmem>>, vector<1x16xf32>,
    %310 = arith.maximumf %303, %305 : vector<16xf32>
    %c2_202 = arith.constant 2 : index
    %c0_203 = arith.constant 0 : index
    %311 = vector.load %arg7[%c2_202, %c0_203] : memref<8x16xf32, #tpu.memory_space<vmem>>, vector<1x16xf32>
    %312 = vector.shape_cast %311 : vector<1x16xf32> to vector<16xf32>
    %313 = vector.shape_cast %310 : vector<16xf32> to vector<1x16xf32>
    tpu.vector_store %arg7[%c2_202, %c0_203], %313 {strides = array<i32>} : memref<8x16xf32, #tpu.memory_space<vmem>>, vector<1x16xf32>,
    %c3_204 = arith.constant 3 : index
    %c0_205 = arith.constant 0 : index
    %314 = vector.load %arg7[%c3_204, %c0_205] : memref<8x16xf32, #tpu.memory_space<vmem>>, vector<1x16xf32>
    %315 = vector.shape_cast %314 : vector<1x16xf32> to vector<16xf32>
    %c4_206 = arith.constant 4 : index
    %c0_207 = arith.constant 0 : index
    %316 = vector.load %arg7[%c4_206, %c0_207] : memref<8x16xf32, #tpu.memory_space<vmem>>, vector<1x16xf32>
    %317 = vector.shape_cast %316 : vector<1x16xf32> to vector<16xf32>
    %318 = arith.minimumf %315, %317 : vector<16xf32>
    %c3_208 = arith.constant 3 : index
    %c0_209 = arith.constant 0 : index
    %319 = vector.load %arg7[%c3_208, %c0_209] : memref<8x16xf32, #tpu.memory_space<vmem>>, vector<1x16xf32>
    %320 = vector.shape_cast %319 : vector<1x16xf32> to vector<16xf32>
    %321 = vector.shape_cast %318 : vector<16xf32> to vector<1x16xf32>
    tpu.vector_store %arg7[%c3_208, %c0_209], %321 {strides = array<i32>} : memref<8x16xf32, #tpu.memory_space<vmem>>, vector<1x16xf32>,
    %322 = arith.maximumf %315, %317 : vector<16xf32>
    %c4_210 = arith.constant 4 : index
    %c0_211 = arith.constant 0 : index
    %323 = vector.load %arg7[%c4_210, %c0_211] : memref<8x16xf32, #tpu.memory_space<vmem>>, vector<1x16xf32>
    %324 = vector.shape_cast %323 : vector<1x16xf32> to vector<16xf32>
    %325 = vector.shape_cast %322 : vector<16xf32> to vector<1x16xf32>
    tpu.vector_store %arg7[%c4_210, %c0_211], %325 {strides = array<i32>} : memref<8x16xf32, #tpu.memory_space<vmem>>, vector<1x16xf32>,
    %c5_212 = arith.constant 5 : index
    %c0_213 = arith.constant 0 : index
    %326 = vector.load %arg7[%c5_212, %c0_213] : memref<8x16xf32, #tpu.memory_space<vmem>>, vector<1x16xf32>
    %327 = vector.shape_cast %326 : vector<1x16xf32> to vector<16xf32>
    %c6_214 = arith.constant 6 : index
    %c0_215 = arith.constant 0 : index
    %328 = vector.load %arg7[%c6_214, %c0_215] : memref<8x16xf32, #tpu.memory_space<vmem>>, vector<1x16xf32>
    %329 = vector.shape_cast %328 : vector<1x16xf32> to vector<16xf32>
    %330 = arith.minimumf %327, %329 : vector<16xf32>
    %c5_216 = arith.constant 5 : index
    %c0_217 = arith.constant 0 : index
    %331 = vector.load %arg7[%c5_216, %c0_217] : memref<8x16xf32, #tpu.memory_space<vmem>>, vector<1x16xf32>
    %332 = vector.shape_cast %331 : vector<1x16xf32> to vector<16xf32>
    %333 = vector.shape_cast %330 : vector<16xf32> to vector<1x16xf32>
    tpu.vector_store %arg7[%c5_216, %c0_217], %333 {strides = array<i32>} : memref<8x16xf32, #tpu.memory_space<vmem>>, vector<1x16xf32>,
    %334 = arith.maximumf %327, %329 : vector<16xf32>
    %c6_218 = arith.constant 6 : index
    %c0_219 = arith.constant 0 : index
    %335 = vector.load %arg7[%c6_218, %c0_219] : memref<8x16xf32, #tpu.memory_space<vmem>>, vector<1x16xf32>
    %336 = vector.shape_cast %335 : vector<1x16xf32> to vector<16xf32>
    %337 = vector.shape_cast %334 : vector<16xf32> to vector<1x16xf32>
    tpu.vector_store %arg7[%c6_218, %c0_219], %337 {strides = array<i32>} : memref<8x16xf32, #tpu.memory_space<vmem>>, vector<1x16xf32>,
    %c0_220 = arith.constant 0 : index
    %c0_221 = arith.constant 0 : index
    %338 = vector.load %arg1[%c0_220, %c0_221] : memref<16x8xf32, #tpu.memory_space<vmem>>, vector<16x8xf32>
    %c0_222 = arith.constant 0 : index
    %c0_223 = arith.constant 0 : index
    %339 = vector.load %arg7[%c0_222, %c0_223] : memref<8x16xf32, #tpu.memory_space<vmem>>, vector<8x16xf32>
    %cst = arith.constant dense<0.000000e+00> : vector<16x16xf32>
    %340 = tpu.matmul %338, %339, %cst {dimension_numbers = #tpu.dot_dimension_numbers<[1], [0], [0], [1], [0, 0, 1, 1], [], []>} : vector<16x8xf32>, vector<8x16xf32>, vector<16x16xf32> -> vector<16x16xf32>
    %341 = tpu.iota {dimensions = array<i32: 0>} : vector<16x16xi32>
    %342 = tpu.iota {dimensions = array<i32: 1>} : vector<16x16xi32>
    %343 = arith.cmpi eq, %341, %342 : vector<16x16xi32>
    %cst_224 = arith.constant 1.000000e+00 : f32
    %cst_225 = arith.constant 0.000000e+00 : f32
    %344 = vector.broadcast %cst_224 : f32 to vector<16x16xf32>
    %345 = vector.broadcast %cst_225 : f32 to vector<16x16xf32>
    %346 = arith.select %343, %344, %345 : vector<16x16xi1>, vector<16x16xf32>
    %cst_226 = arith.constant dense<0.000000e+00> : vector<16x16xf32>
    %347 = tpu.matmul %346, %340, %cst_226 {dimension_numbers = #tpu.dot_dimension_numbers<[1], [1], [0], [0], [0, 0, 1, 0], [], []>} : vector<16x16xf32>, vector<16x16xf32>, vector<16x16xf32> -> vector<16x16xf32>
    %c0_227 = arith.constant 0 : index
    %c0_228 = arith.constant 0 : index
    %348 = vector.load %arg8[%c0_227, %c0_228] : memref<16x16xf32, #tpu.memory_space<vmem>>, vector<16x16xf32>
    tpu.vector_store %arg8[%c0_227, %c0_228], %347 {strides = array<i32>} : memref<16x16xf32, #tpu.memory_space<vmem>>, vector<16x16xf32>,
    %c0_229 = arith.constant 0 : index
    %c0_230 = arith.constant 0 : index
    %349 = vector.load %arg8[%c0_229, %c0_230] : memref<16x16xf32, #tpu.memory_space<vmem>>, vector<1x16xf32>
    %350 = vector.shape_cast %349 : vector<1x16xf32> to vector<16xf32>
    %c2_231 = arith.constant 2 : index
    %c0_232 = arith.constant 0 : index
    %351 = vector.load %arg8[%c2_231, %c0_232] : memref<16x16xf32, #tpu.memory_space<vmem>>, vector<1x16xf32>
    %352 = vector.shape_cast %351 : vector<1x16xf32> to vector<16xf32>
    %353 = arith.minimumf %350, %352 : vector<16xf32>
    %c0_233 = arith.constant 0 : index
    %c0_234 = arith.constant 0 : index
    %354 = vector.load %arg8[%c0_233, %c0_234] : memref<16x16xf32, #tpu.memory_space<vmem>>, vector<1x16xf32>
    %355 = vector.shape_cast %354 : vector<1x16xf32> to vector<16xf32>
    %356 = vector.shape_cast %353 : vector<16xf32> to vector<1x16xf32>
    tpu.vector_store %arg8[%c0_233, %c0_234], %356 {strides = array<i32>} : memref<16x16xf32, #tpu.memory_space<vmem>>, vector<1x16xf32>,
    %357 = arith.maximumf %350, %352 : vector<16xf32>
    %c2_235 = arith.constant 2 : index
    %c0_236 = arith.constant 0 : index
    %358 = vector.load %arg8[%c2_235, %c0_236] : memref<16x16xf32, #tpu.memory_space<vmem>>, vector<1x16xf32>
    %359 = vector.shape_cast %358 : vector<1x16xf32> to vector<16xf32>
    %360 = vector.shape_cast %357 : vector<16xf32> to vector<1x16xf32>
    tpu.vector_store %arg8[%c2_235, %c0_236], %360 {strides = array<i32>} : memref<16x16xf32, #tpu.memory_space<vmem>>, vector<1x16xf32>,
    %c4_237 = arith.constant 4 : index
    %c0_238 = arith.constant 0 : index
    %361 = vector.load %arg8[%c4_237, %c0_238] : memref<16x16xf32, #tpu.memory_space<vmem>>, vector<1x16xf32>
    %362 = vector.shape_cast %361 : vector<1x16xf32> to vector<16xf32>
    %c6_239 = arith.constant 6 : index
    %c0_240 = arith.constant 0 : index
    %363 = vector.load %arg8[%c6_239, %c0_240] : memref<16x16xf32, #tpu.memory_space<vmem>>, vector<1x16xf32>
    %364 = vector.shape_cast %363 : vector<1x16xf32> to vector<16xf32>
    %365 = arith.minimumf %362, %364 : vector<16xf32>
    %c4_241 = arith.constant 4 : index
    %c0_242 = arith.constant 0 : index
    %366 = vector.load %arg8[%c4_241, %c0_242] : memref<16x16xf32, #tpu.memory_space<vmem>>, vector<1x16xf32>
    %367 = vector.shape_cast %366 : vector<1x16xf32> to vector<16xf32>
    %368 = vector.shape_cast %365 : vector<16xf32> to vector<1x16xf32>
    tpu.vector_store %arg8[%c4_241, %c0_242], %368 {strides = array<i32>} : memref<16x16xf32, #tpu.memory_space<vmem>>, vector<1x16xf32>,
    %369 = arith.maximumf %362, %364 : vector<16xf32>
    %c6_243 = arith.constant 6 : index
    %c0_244 = arith.constant 0 : index
    %370 = vector.load %arg8[%c6_243, %c0_244] : memref<16x16xf32, #tpu.memory_space<vmem>>, vector<1x16xf32>
    %371 = vector.shape_cast %370 : vector<1x16xf32> to vector<16xf32>
    %372 = vector.shape_cast %369 : vector<16xf32> to vector<1x16xf32>
    tpu.vector_store %arg8[%c6_243, %c0_244], %372 {strides = array<i32>} : memref<16x16xf32, #tpu.memory_space<vmem>>, vector<1x16xf32>,
    %c8 = arith.constant 8 : index
    %c0_245 = arith.constant 0 : index
    %373 = vector.load %arg8[%c8, %c0_245] : memref<16x16xf32, #tpu.memory_space<vmem>>, vector<1x16xf32>
    %374 = vector.shape_cast %373 : vector<1x16xf32> to vector<16xf32>
    %c10 = arith.constant 10 : index
    %c0_246 = arith.constant 0 : index
    %375 = vector.load %arg8[%c10, %c0_246] : memref<16x16xf32, #tpu.memory_space<vmem>>, vector<1x16xf32>
    %376 = vector.shape_cast %375 : vector<1x16xf32> to vector<16xf32>
    %377 = arith.minimumf %374, %376 : vector<16xf32>
    %c8_247 = arith.constant 8 : index
    %c0_248 = arith.constant 0 : index
    %378 = vector.load %arg8[%c8_247, %c0_248] : memref<16x16xf32, #tpu.memory_space<vmem>>, vector<1x16xf32>
    %379 = vector.shape_cast %378 : vector<1x16xf32> to vector<16xf32>
    %380 = vector.shape_cast %377 : vector<16xf32> to vector<1x16xf32>
    tpu.vector_store %arg8[%c8_247, %c0_248], %380 {strides = array<i32>} : memref<16x16xf32, #tpu.memory_space<vmem>>, vector<1x16xf32>,
    %381 = arith.maximumf %374, %376 : vector<16xf32>
    %c10_249 = arith.constant 10 : index
    %c0_250 = arith.constant 0 : index
    %382 = vector.load %arg8[%c10_249, %c0_250] : memref<16x16xf32, #tpu.memory_space<vmem>>, vector<1x16xf32>
    %383 = vector.shape_cast %382 : vector<1x16xf32> to vector<16xf32>
    %384 = vector.shape_cast %381 : vector<16xf32> to vector<1x16xf32>
    tpu.vector_store %arg8[%c10_249, %c0_250], %384 {strides = array<i32>} : memref<16x16xf32, #tpu.memory_space<vmem>>, vector<1x16xf32>,
    %c12 = arith.constant 12 : index
    %c0_251 = arith.constant 0 : index
    %385 = vector.load %arg8[%c12, %c0_251] : memref<16x16xf32, #tpu.memory_space<vmem>>, vector<1x16xf32>
    %386 = vector.shape_cast %385 : vector<1x16xf32> to vector<16xf32>
    %c14 = arith.constant 14 : index
    %c0_252 = arith.constant 0 : index
    %387 = vector.load %arg8[%c14, %c0_252] : memref<16x16xf32, #tpu.memory_space<vmem>>, vector<1x16xf32>
    %388 = vector.shape_cast %387 : vector<1x16xf32> to vector<16xf32>
    %389 = arith.minimumf %386, %388 : vector<16xf32>
    %c12_253 = arith.constant 12 : index
    %c0_254 = arith.constant 0 : index
    %390 = vector.load %arg8[%c12_253, %c0_254] : memref<16x16xf32, #tpu.memory_space<vmem>>, vector<1x16xf32>
    %391 = vector.shape_cast %390 : vector<1x16xf32> to vector<16xf32>
    %392 = vector.shape_cast %389 : vector<16xf32> to vector<1x16xf32>
    tpu.vector_store %arg8[%c12_253, %c0_254], %392 {strides = array<i32>} : memref<16x16xf32, #tpu.memory_space<vmem>>, vector<1x16xf32>,
    %393 = arith.maximumf %386, %388 : vector<16xf32>
    %c14_255 = arith.constant 14 : index
    %c0_256 = arith.constant 0 : index
    %394 = vector.load %arg8[%c14_255, %c0_256] : memref<16x16xf32, #tpu.memory_space<vmem>>, vector<1x16xf32>
    %395 = vector.shape_cast %394 : vector<1x16xf32> to vector<16xf32>
    %396 = vector.shape_cast %393 : vector<16xf32> to vector<1x16xf32>
    tpu.vector_store %arg8[%c14_255, %c0_256], %396 {strides = array<i32>} : memref<16x16xf32, #tpu.memory_space<vmem>>, vector<1x16xf32>,
    %c2_257 = arith.constant 2 : index
    %c0_258 = arith.constant 0 : index
    %397 = vector.load %arg8[%c2_257, %c0_258] : memref<16x16xf32, #tpu.memory_space<vmem>>, vector<1x16xf32>
    %398 = vector.shape_cast %397 : vector<1x16xf32> to vector<16xf32>
    %c4_259 = arith.constant 4 : index
    %c0_260 = arith.constant 0 : index
    %399 = vector.load %arg8[%c4_259, %c0_260] : memref<16x16xf32, #tpu.memory_space<vmem>>, vector<1x16xf32>
    %400 = vector.shape_cast %399 : vector<1x16xf32> to vector<16xf32>
    %401 = arith.minimumf %398, %400 : vector<16xf32>
    %c2_261 = arith.constant 2 : index
    %c0_262 = arith.constant 0 : index
    %402 = vector.load %arg8[%c2_261, %c0_262] : memref<16x16xf32, #tpu.memory_space<vmem>>, vector<1x16xf32>
    %403 = vector.shape_cast %402 : vector<1x16xf32> to vector<16xf32>
    %404 = vector.shape_cast %401 : vector<16xf32> to vector<1x16xf32>
    tpu.vector_store %arg8[%c2_261, %c0_262], %404 {strides = array<i32>} : memref<16x16xf32, #tpu.memory_space<vmem>>, vector<1x16xf32>,
    %405 = arith.maximumf %398, %400 : vector<16xf32>
    %c4_263 = arith.constant 4 : index
    %c0_264 = arith.constant 0 : index
    %406 = vector.load %arg8[%c4_263, %c0_264] : memref<16x16xf32, #tpu.memory_space<vmem>>, vector<1x16xf32>
    %407 = vector.shape_cast %406 : vector<1x16xf32> to vector<16xf32>
    %408 = vector.shape_cast %405 : vector<16xf32> to vector<1x16xf32>
    tpu.vector_store %arg8[%c4_263, %c0_264], %408 {strides = array<i32>} : memref<16x16xf32, #tpu.memory_space<vmem>>, vector<1x16xf32>,
    %c6_265 = arith.constant 6 : index
    %c0_266 = arith.constant 0 : index
    %409 = vector.load %arg8[%c6_265, %c0_266] : memref<16x16xf32, #tpu.memory_space<vmem>>, vector<1x16xf32>
    %410 = vector.shape_cast %409 : vector<1x16xf32> to vector<16xf32>
    %c8_267 = arith.constant 8 : index
    %c0_268 = arith.constant 0 : index
    %411 = vector.load %arg8[%c8_267, %c0_268] : memref<16x16xf32, #tpu.memory_space<vmem>>, vector<1x16xf32>
    %412 = vector.shape_cast %411 : vector<1x16xf32> to vector<16xf32>
    %413 = arith.minimumf %410, %412 : vector<16xf32>
    %c6_269 = arith.constant 6 : index
    %c0_270 = arith.constant 0 : index
    %414 = vector.load %arg8[%c6_269, %c0_270] : memref<16x16xf32, #tpu.memory_space<vmem>>, vector<1x16xf32>
    %415 = vector.shape_cast %414 : vector<1x16xf32> to vector<16xf32>
    %416 = vector.shape_cast %413 : vector<16xf32> to vector<1x16xf32>
    tpu.vector_store %arg8[%c6_269, %c0_270], %416 {strides = array<i32>} : memref<16x16xf32, #tpu.memory_space<vmem>>, vector<1x16xf32>,
    %417 = arith.maximumf %410, %412 : vector<16xf32>
    %c8_271 = arith.constant 8 : index
    %c0_272 = arith.constant 0 : index
    %418 = vector.load %arg8[%c8_271, %c0_272] : memref<16x16xf32, #tpu.memory_space<vmem>>, vector<1x16xf32>
    %419 = vector.shape_cast %418 : vector<1x16xf32> to vector<16xf32>
    %420 = vector.shape_cast %417 : vector<16xf32> to vector<1x16xf32>
    tpu.vector_store %arg8[%c8_271, %c0_272], %420 {strides = array<i32>} : memref<16x16xf32, #tpu.memory_space<vmem>>, vector<1x16xf32>,
    %c10_273 = arith.constant 10 : index
    %c0_274 = arith.constant 0 : index
    %421 = vector.load %arg8[%c10_273, %c0_274] : memref<16x16xf32, #tpu.memory_space<vmem>>, vector<1x16xf32>
    %422 = vector.shape_cast %421 : vector<1x16xf32> to vector<16xf32>
    %c12_275 = arith.constant 12 : index
    %c0_276 = arith.constant 0 : index
    %423 = vector.load %arg8[%c12_275, %c0_276] : memref<16x16xf32, #tpu.memory_space<vmem>>, vector<1x16xf32>
    %424 = vector.shape_cast %423 : vector<1x16xf32> to vector<16xf32>
    %425 = arith.minimumf %422, %424 : vector<16xf32>
    %c10_277 = arith.constant 10 : index
    %c0_278 = arith.constant 0 : index
    %426 = vector.load %arg8[%c10_277, %c0_278] : memref<16x16xf32, #tpu.memory_space<vmem>>, vector<1x16xf32>
    %427 = vector.shape_cast %426 : vector<1x16xf32> to vector<16xf32>
    %428 = vector.shape_cast %425 : vector<16xf32> to vector<1x16xf32>
    tpu.vector_store %arg8[%c10_277, %c0_278], %428 {strides = array<i32>} : memref<16x16xf32, #tpu.memory_space<vmem>>, vector<1x16xf32>,
    %429 = arith.maximumf %422, %424 : vector<16xf32>
    %c12_279 = arith.constant 12 : index
    %c0_280 = arith.constant 0 : index
    %430 = vector.load %arg8[%c12_279, %c0_280] : memref<16x16xf32, #tpu.memory_space<vmem>>, vector<1x16xf32>
    %431 = vector.shape_cast %430 : vector<1x16xf32> to vector<16xf32>
    %432 = vector.shape_cast %429 : vector<16xf32> to vector<1x16xf32>
    tpu.vector_store %arg8[%c12_279, %c0_280], %432 {strides = array<i32>} : memref<16x16xf32, #tpu.memory_space<vmem>>, vector<1x16xf32>,
    %c0_281 = arith.constant 0 : index
    %c0_282 = arith.constant 0 : index
    %433 = vector.load %arg8[%c0_281, %c0_282] : memref<16x16xf32, #tpu.memory_space<vmem>>, vector<1x16xf32>
    %434 = vector.shape_cast %433 : vector<1x16xf32> to vector<16xf32>
    %c2_283 = arith.constant 2 : index
    %c0_284 = arith.constant 0 : index
    %435 = vector.load %arg8[%c2_283, %c0_284] : memref<16x16xf32, #tpu.memory_space<vmem>>, vector<1x16xf32>
    %436 = vector.shape_cast %435 : vector<1x16xf32> to vector<16xf32>
    %437 = arith.minimumf %434, %436 : vector<16xf32>
    %c0_285 = arith.constant 0 : index
    %c0_286 = arith.constant 0 : index
    %438 = vector.load %arg8[%c0_285, %c0_286] : memref<16x16xf32, #tpu.memory_space<vmem>>, vector<1x16xf32>
    %439 = vector.shape_cast %438 : vector<1x16xf32> to vector<16xf32>
    %440 = vector.shape_cast %437 : vector<16xf32> to vector<1x16xf32>
    tpu.vector_store %arg8[%c0_285, %c0_286], %440 {strides = array<i32>} : memref<16x16xf32, #tpu.memory_space<vmem>>, vector<1x16xf32>,
    %441 = arith.maximumf %434, %436 : vector<16xf32>
    %c2_287 = arith.constant 2 : index
    %c0_288 = arith.constant 0 : index
    %442 = vector.load %arg8[%c2_287, %c0_288] : memref<16x16xf32, #tpu.memory_space<vmem>>, vector<1x16xf32>
    %443 = vector.shape_cast %442 : vector<1x16xf32> to vector<16xf32>
    %444 = vector.shape_cast %441 : vector<16xf32> to vector<1x16xf32>
    tpu.vector_store %arg8[%c2_287, %c0_288], %444 {strides = array<i32>} : memref<16x16xf32, #tpu.memory_space<vmem>>, vector<1x16xf32>,
    %c4_289 = arith.constant 4 : index
    %c0_290 = arith.constant 0 : index
    %445 = vector.load %arg8[%c4_289, %c0_290] : memref<16x16xf32, #tpu.memory_space<vmem>>, vector<1x16xf32>
    %446 = vector.shape_cast %445 : vector<1x16xf32> to vector<16xf32>
    %c6_291 = arith.constant 6 : index
    %c0_292 = arith.constant 0 : index
    %447 = vector.load %arg8[%c6_291, %c0_292] : memref<16x16xf32, #tpu.memory_space<vmem>>, vector<1x16xf32>
    %448 = vector.shape_cast %447 : vector<1x16xf32> to vector<16xf32>
    %449 = arith.minimumf %446, %448 : vector<16xf32>
    %c4_293 = arith.constant 4 : index
    %c0_294 = arith.constant 0 : index
    %450 = vector.load %arg8[%c4_293, %c0_294] : memref<16x16xf32, #tpu.memory_space<vmem>>, vector<1x16xf32>
    %451 = vector.shape_cast %450 : vector<1x16xf32> to vector<16xf32>
    %452 = vector.shape_cast %449 : vector<16xf32> to vector<1x16xf32>
    tpu.vector_store %arg8[%c4_293, %c0_294], %452 {strides = array<i32>} : memref<16x16xf32, #tpu.memory_space<vmem>>, vector<1x16xf32>,
    %453 = arith.maximumf %446, %448 : vector<16xf32>
    %c6_295 = arith.constant 6 : index
    %c0_296 = arith.constant 0 : index
    %454 = vector.load %arg8[%c6_295, %c0_296] : memref<16x16xf32, #tpu.memory_space<vmem>>, vector<1x16xf32>
    %455 = vector.shape_cast %454 : vector<1x16xf32> to vector<16xf32>
    %456 = vector.shape_cast %453 : vector<16xf32> to vector<1x16xf32>
    tpu.vector_store %arg8[%c6_295, %c0_296], %456 {strides = array<i32>} : memref<16x16xf32, #tpu.memory_space<vmem>>, vector<1x16xf32>,
    %c8_297 = arith.constant 8 : index
    %c0_298 = arith.constant 0 : index
    %457 = vector.load %arg8[%c8_297, %c0_298] : memref<16x16xf32, #tpu.memory_space<vmem>>, vector<1x16xf32>
    %458 = vector.shape_cast %457 : vector<1x16xf32> to vector<16xf32>
    %c10_299 = arith.constant 10 : index
    %c0_300 = arith.constant 0 : index
    %459 = vector.load %arg8[%c10_299, %c0_300] : memref<16x16xf32, #tpu.memory_space<vmem>>, vector<1x16xf32>
    %460 = vector.shape_cast %459 : vector<1x16xf32> to vector<16xf32>
    %461 = arith.minimumf %458, %460 : vector<16xf32>
    %c8_301 = arith.constant 8 : index
    %c0_302 = arith.constant 0 : index
    %462 = vector.load %arg8[%c8_301, %c0_302] : memref<16x16xf32, #tpu.memory_space<vmem>>, vector<1x16xf32>
    %463 = vector.shape_cast %462 : vector<1x16xf32> to vector<16xf32>
    %464 = vector.shape_cast %461 : vector<16xf32> to vector<1x16xf32>
    tpu.vector_store %arg8[%c8_301, %c0_302], %464 {strides = array<i32>} : memref<16x16xf32, #tpu.memory_space<vmem>>, vector<1x16xf32>,
    %465 = arith.maximumf %458, %460 : vector<16xf32>
    %c10_303 = arith.constant 10 : index
    %c0_304 = arith.constant 0 : index
    %466 = vector.load %arg8[%c10_303, %c0_304] : memref<16x16xf32, #tpu.memory_space<vmem>>, vector<1x16xf32>
    %467 = vector.shape_cast %466 : vector<1x16xf32> to vector<16xf32>
    %468 = vector.shape_cast %465 : vector<16xf32> to vector<1x16xf32>
    tpu.vector_store %arg8[%c10_303, %c0_304], %468 {strides = array<i32>} : memref<16x16xf32, #tpu.memory_space<vmem>>, vector<1x16xf32>,
    %c12_305 = arith.constant 12 : index
    %c0_306 = arith.constant 0 : index
    %469 = vector.load %arg8[%c12_305, %c0_306] : memref<16x16xf32, #tpu.memory_space<vmem>>, vector<1x16xf32>
    %470 = vector.shape_cast %469 : vector<1x16xf32> to vector<16xf32>
    %c14_307 = arith.constant 14 : index
    %c0_308 = arith.constant 0 : index
    %471 = vector.load %arg8[%c14_307, %c0_308] : memref<16x16xf32, #tpu.memory_space<vmem>>, vector<1x16xf32>
    %472 = vector.shape_cast %471 : vector<1x16xf32> to vector<16xf32>
    %473 = arith.minimumf %470, %472 : vector<16xf32>
    %c12_309 = arith.constant 12 : index
    %c0_310 = arith.constant 0 : index
    %474 = vector.load %arg8[%c12_309, %c0_310] : memref<16x16xf32, #tpu.memory_space<vmem>>, vector<1x16xf32>
    %475 = vector.shape_cast %474 : vector<1x16xf32> to vector<16xf32>
    %476 = vector.shape_cast %473 : vector<16xf32> to vector<1x16xf32>
    tpu.vector_store %arg8[%c12_309, %c0_310], %476 {strides = array<i32>} : memref<16x16xf32, #tpu.memory_space<vmem>>, vector<1x16xf32>,
    %477 = arith.maximumf %470, %472 : vector<16xf32>
    %c14_311 = arith.constant 14 : index
    %c0_312 = arith.constant 0 : index
    %478 = vector.load %arg8[%c14_311, %c0_312] : memref<16x16xf32, #tpu.memory_space<vmem>>, vector<1x16xf32>
    %479 = vector.shape_cast %478 : vector<1x16xf32> to vector<16xf32>
    %480 = vector.shape_cast %477 : vector<16xf32> to vector<1x16xf32>
    tpu.vector_store %arg8[%c14_311, %c0_312], %480 {strides = array<i32>} : memref<16x16xf32, #tpu.memory_space<vmem>>, vector<1x16xf32>,
    %c2_313 = arith.constant 2 : index
    %c0_314 = arith.constant 0 : index
    %481 = vector.load %arg8[%c2_313, %c0_314] : memref<16x16xf32, #tpu.memory_space<vmem>>, vector<1x16xf32>
    %482 = vector.shape_cast %481 : vector<1x16xf32> to vector<16xf32>
    %c4_315 = arith.constant 4 : index
    %c0_316 = arith.constant 0 : index
    %483 = vector.load %arg8[%c4_315, %c0_316] : memref<16x16xf32, #tpu.memory_space<vmem>>, vector<1x16xf32>
    %484 = vector.shape_cast %483 : vector<1x16xf32> to vector<16xf32>
    %485 = arith.minimumf %482, %484 : vector<16xf32>
    %c2_317 = arith.constant 2 : index
    %c0_318 = arith.constant 0 : index
    %486 = vector.load %arg8[%c2_317, %c0_318] : memref<16x16xf32, #tpu.memory_space<vmem>>, vector<1x16xf32>
    %487 = vector.shape_cast %486 : vector<1x16xf32> to vector<16xf32>
    %488 = vector.shape_cast %485 : vector<16xf32> to vector<1x16xf32>
    tpu.vector_store %arg8[%c2_317, %c0_318], %488 {strides = array<i32>} : memref<16x16xf32, #tpu.memory_space<vmem>>, vector<1x16xf32>,
    %489 = arith.maximumf %482, %484 : vector<16xf32>
    %c4_319 = arith.constant 4 : index
    %c0_320 = arith.constant 0 : index
    %490 = vector.load %arg8[%c4_319, %c0_320] : memref<16x16xf32, #tpu.memory_space<vmem>>, vector<1x16xf32>
    %491 = vector.shape_cast %490 : vector<1x16xf32> to vector<16xf32>
    %492 = vector.shape_cast %489 : vector<16xf32> to vector<1x16xf32>
    tpu.vector_store %arg8[%c4_319, %c0_320], %492 {strides = array<i32>} : memref<16x16xf32, #tpu.memory_space<vmem>>, vector<1x16xf32>,
    %c6_321 = arith.constant 6 : index
    %c0_322 = arith.constant 0 : index
    %493 = vector.load %arg8[%c6_321, %c0_322] : memref<16x16xf32, #tpu.memory_space<vmem>>, vector<1x16xf32>
    %494 = vector.shape_cast %493 : vector<1x16xf32> to vector<16xf32>
    %c8_323 = arith.constant 8 : index
    %c0_324 = arith.constant 0 : index
    %495 = vector.load %arg8[%c8_323, %c0_324] : memref<16x16xf32, #tpu.memory_space<vmem>>, vector<1x16xf32>
    %496 = vector.shape_cast %495 : vector<1x16xf32> to vector<16xf32>
    %497 = arith.minimumf %494, %496 : vector<16xf32>
    %c6_325 = arith.constant 6 : index
    %c0_326 = arith.constant 0 : index
    %498 = vector.load %arg8[%c6_325, %c0_326] : memref<16x16xf32, #tpu.memory_space<vmem>>, vector<1x16xf32>
    %499 = vector.shape_cast %498 : vector<1x16xf32> to vector<16xf32>
    %500 = vector.shape_cast %497 : vector<16xf32> to vector<1x16xf32>
    tpu.vector_store %arg8[%c6_325, %c0_326], %500 {strides = array<i32>} : memref<16x16xf32, #tpu.memory_space<vmem>>, vector<1x16xf32>,
    %501 = arith.maximumf %494, %496 : vector<16xf32>
    %c8_327 = arith.constant 8 : index
    %c0_328 = arith.constant 0 : index
    %502 = vector.load %arg8[%c8_327, %c0_328] : memref<16x16xf32, #tpu.memory_space<vmem>>, vector<1x16xf32>
    %503 = vector.shape_cast %502 : vector<1x16xf32> to vector<16xf32>
    %504 = vector.shape_cast %501 : vector<16xf32> to vector<1x16xf32>
    tpu.vector_store %arg8[%c8_327, %c0_328], %504 {strides = array<i32>} : memref<16x16xf32, #tpu.memory_space<vmem>>, vector<1x16xf32>,
    %c10_329 = arith.constant 10 : index
    %c0_330 = arith.constant 0 : index
    %505 = vector.load %arg8[%c10_329, %c0_330] : memref<16x16xf32, #tpu.memory_space<vmem>>, vector<1x16xf32>
    %506 = vector.shape_cast %505 : vector<1x16xf32> to vector<16xf32>
    %c12_331 = arith.constant 12 : index
    %c0_332 = arith.constant 0 : index
    %507 = vector.load %arg8[%c12_331, %c0_332] : memref<16x16xf32, #tpu.memory_space<vmem>>, vector<1x16xf32>
    %508 = vector.shape_cast %507 : vector<1x16xf32> to vector<16xf32>
    %509 = arith.minimumf %506, %508 : vector<16xf32>
    %c10_333 = arith.constant 10 : index
    %c0_334 = arith.constant 0 : index
    %510 = vector.load %arg8[%c10_333, %c0_334] : memref<16x16xf32, #tpu.memory_space<vmem>>, vector<1x16xf32>
    %511 = vector.shape_cast %510 : vector<1x16xf32> to vector<16xf32>
    %512 = vector.shape_cast %509 : vector<16xf32> to vector<1x16xf32>
    tpu.vector_store %arg8[%c10_333, %c0_334], %512 {strides = array<i32>} : memref<16x16xf32, #tpu.memory_space<vmem>>, vector<1x16xf32>,
    %513 = arith.maximumf %506, %508 : vector<16xf32>
    %c12_335 = arith.constant 12 : index
    %c0_336 = arith.constant 0 : index
    %514 = vector.load %arg8[%c12_335, %c0_336] : memref<16x16xf32, #tpu.memory_space<vmem>>, vector<1x16xf32>
    %515 = vector.shape_cast %514 : vector<1x16xf32> to vector<16xf32>
    %516 = vector.shape_cast %513 : vector<16xf32> to vector<1x16xf32>
    tpu.vector_store %arg8[%c12_335, %c0_336], %516 {strides = array<i32>} : memref<16x16xf32, #tpu.memory_space<vmem>>, vector<1x16xf32>,
    %c0_337 = arith.constant 0 : index
    %c0_338 = arith.constant 0 : index
    %517 = vector.load %arg8[%c0_337, %c0_338] : memref<16x16xf32, #tpu.memory_space<vmem>>, vector<1x16xf32>
    %518 = vector.shape_cast %517 : vector<1x16xf32> to vector<16xf32>
    %c2_339 = arith.constant 2 : index
    %c0_340 = arith.constant 0 : index
    %519 = vector.load %arg8[%c2_339, %c0_340] : memref<16x16xf32, #tpu.memory_space<vmem>>, vector<1x16xf32>
    %520 = vector.shape_cast %519 : vector<1x16xf32> to vector<16xf32>
    %521 = arith.minimumf %518, %520 : vector<16xf32>
    %c0_341 = arith.constant 0 : index
    %c0_342 = arith.constant 0 : index
    %522 = vector.load %arg8[%c0_341, %c0_342] : memref<16x16xf32, #tpu.memory_space<vmem>>, vector<1x16xf32>
    %523 = vector.shape_cast %522 : vector<1x16xf32> to vector<16xf32>
    %524 = vector.shape_cast %521 : vector<16xf32> to vector<1x16xf32>
    tpu.vector_store %arg8[%c0_341, %c0_342], %524 {strides = array<i32>} : memref<16x16xf32, #tpu.memory_space<vmem>>, vector<1x16xf32>,
    %525 = arith.maximumf %518, %520 : vector<16xf32>
    %c2_343 = arith.constant 2 : index
    %c0_344 = arith.constant 0 : index
    %526 = vector.load %arg8[%c2_343, %c0_344] : memref<16x16xf32, #tpu.memory_space<vmem>>, vector<1x16xf32>
    %527 = vector.shape_cast %526 : vector<1x16xf32> to vector<16xf32>
    %528 = vector.shape_cast %525 : vector<16xf32> to vector<1x16xf32>
    tpu.vector_store %arg8[%c2_343, %c0_344], %528 {strides = array<i32>} : memref<16x16xf32, #tpu.memory_space<vmem>>, vector<1x16xf32>,
    %c4_345 = arith.constant 4 : index
    %c0_346 = arith.constant 0 : index
    %529 = vector.load %arg8[%c4_345, %c0_346] : memref<16x16xf32, #tpu.memory_space<vmem>>, vector<1x16xf32>
    %530 = vector.shape_cast %529 : vector<1x16xf32> to vector<16xf32>
    %c6_347 = arith.constant 6 : index
    %c0_348 = arith.constant 0 : index
    %531 = vector.load %arg8[%c6_347, %c0_348] : memref<16x16xf32, #tpu.memory_space<vmem>>, vector<1x16xf32>
    %532 = vector.shape_cast %531 : vector<1x16xf32> to vector<16xf32>
    %533 = arith.minimumf %530, %532 : vector<16xf32>
    %c4_349 = arith.constant 4 : index
    %c0_350 = arith.constant 0 : index
    %534 = vector.load %arg8[%c4_349, %c0_350] : memref<16x16xf32, #tpu.memory_space<vmem>>, vector<1x16xf32>
    %535 = vector.shape_cast %534 : vector<1x16xf32> to vector<16xf32>
    %536 = vector.shape_cast %533 : vector<16xf32> to vector<1x16xf32>
    tpu.vector_store %arg8[%c4_349, %c0_350], %536 {strides = array<i32>} : memref<16x16xf32, #tpu.memory_space<vmem>>, vector<1x16xf32>,
    %537 = arith.maximumf %530, %532 : vector<16xf32>
    %c6_351 = arith.constant 6 : index
    %c0_352 = arith.constant 0 : index
    %538 = vector.load %arg8[%c6_351, %c0_352] : memref<16x16xf32, #tpu.memory_space<vmem>>, vector<1x16xf32>
    %539 = vector.shape_cast %538 : vector<1x16xf32> to vector<16xf32>
    %540 = vector.shape_cast %537 : vector<16xf32> to vector<1x16xf32>
    tpu.vector_store %arg8[%c6_351, %c0_352], %540 {strides = array<i32>} : memref<16x16xf32, #tpu.memory_space<vmem>>, vector<1x16xf32>,
    %c8_353 = arith.constant 8 : index
    %c0_354 = arith.constant 0 : index
    %541 = vector.load %arg8[%c8_353, %c0_354] : memref<16x16xf32, #tpu.memory_space<vmem>>, vector<1x16xf32>
    %542 = vector.shape_cast %541 : vector<1x16xf32> to vector<16xf32>
    %c10_355 = arith.constant 10 : index
    %c0_356 = arith.constant 0 : index
    %543 = vector.load %arg8[%c10_355, %c0_356] : memref<16x16xf32, #tpu.memory_space<vmem>>, vector<1x16xf32>
    %544 = vector.shape_cast %543 : vector<1x16xf32> to vector<16xf32>
    %545 = arith.minimumf %542, %544 : vector<16xf32>
    %c8_357 = arith.constant 8 : index
    %c0_358 = arith.constant 0 : index
    %546 = vector.load %arg8[%c8_357, %c0_358] : memref<16x16xf32, #tpu.memory_space<vmem>>, vector<1x16xf32>
    %547 = vector.shape_cast %546 : vector<1x16xf32> to vector<16xf32>
    %548 = vector.shape_cast %545 : vector<16xf32> to vector<1x16xf32>
    tpu.vector_store %arg8[%c8_357, %c0_358], %548 {strides = array<i32>} : memref<16x16xf32, #tpu.memory_space<vmem>>, vector<1x16xf32>,
    %549 = arith.maximumf %542, %544 : vector<16xf32>
    %c10_359 = arith.constant 10 : index
    %c0_360 = arith.constant 0 : index
    %550 = vector.load %arg8[%c10_359, %c0_360] : memref<16x16xf32, #tpu.memory_space<vmem>>, vector<1x16xf32>
    %551 = vector.shape_cast %550 : vector<1x16xf32> to vector<16xf32>
    %552 = vector.shape_cast %549 : vector<16xf32> to vector<1x16xf32>
    tpu.vector_store %arg8[%c10_359, %c0_360], %552 {strides = array<i32>} : memref<16x16xf32, #tpu.memory_space<vmem>>, vector<1x16xf32>,
    %c12_361 = arith.constant 12 : index
    %c0_362 = arith.constant 0 : index
    %553 = vector.load %arg8[%c12_361, %c0_362] : memref<16x16xf32, #tpu.memory_space<vmem>>, vector<1x16xf32>
    %554 = vector.shape_cast %553 : vector<1x16xf32> to vector<16xf32>
    %c14_363 = arith.constant 14 : index
    %c0_364 = arith.constant 0 : index
    %555 = vector.load %arg8[%c14_363, %c0_364] : memref<16x16xf32, #tpu.memory_space<vmem>>, vector<1x16xf32>
    %556 = vector.shape_cast %555 : vector<1x16xf32> to vector<16xf32>
    %557 = arith.minimumf %554, %556 : vector<16xf32>
    %c12_365 = arith.constant 12 : index
    %c0_366 = arith.constant 0 : index
    %558 = vector.load %arg8[%c12_365, %c0_366] : memref<16x16xf32, #tpu.memory_space<vmem>>, vector<1x16xf32>
    %559 = vector.shape_cast %558 : vector<1x16xf32> to vector<16xf32>
    %560 = vector.shape_cast %557 : vector<16xf32> to vector<1x16xf32>
    tpu.vector_store %arg8[%c12_365, %c0_366], %560 {strides = array<i32>} : memref<16x16xf32, #tpu.memory_space<vmem>>, vector<1x16xf32>,
    %561 = arith.maximumf %554, %556 : vector<16xf32>
    %c14_367 = arith.constant 14 : index
    %c0_368 = arith.constant 0 : index
    %562 = vector.load %arg8[%c14_367, %c0_368] : memref<16x16xf32, #tpu.memory_space<vmem>>, vector<1x16xf32>
    %563 = vector.shape_cast %562 : vector<1x16xf32> to vector<16xf32>
    %564 = vector.shape_cast %561 : vector<16xf32> to vector<1x16xf32>
    tpu.vector_store %arg8[%c14_367, %c0_368], %564 {strides = array<i32>} : memref<16x16xf32, #tpu.memory_space<vmem>>, vector<1x16xf32>,
    %c2_369 = arith.constant 2 : index
    %c0_370 = arith.constant 0 : index
    %565 = vector.load %arg8[%c2_369, %c0_370] : memref<16x16xf32, #tpu.memory_space<vmem>>, vector<1x16xf32>
    %566 = vector.shape_cast %565 : vector<1x16xf32> to vector<16xf32>
    %c4_371 = arith.constant 4 : index
    %c0_372 = arith.constant 0 : index
    %567 = vector.load %arg8[%c4_371, %c0_372] : memref<16x16xf32, #tpu.memory_space<vmem>>, vector<1x16xf32>
    %568 = vector.shape_cast %567 : vector<1x16xf32> to vector<16xf32>
    %569 = arith.minimumf %566, %568 : vector<16xf32>
    %c2_373 = arith.constant 2 : index
    %c0_374 = arith.constant 0 : index
    %570 = vector.load %arg8[%c2_373, %c0_374] : memref<16x16xf32, #tpu.memory_space<vmem>>, vector<1x16xf32>
    %571 = vector.shape_cast %570 : vector<1x16xf32> to vector<16xf32>
    %572 = vector.shape_cast %569 : vector<16xf32> to vector<1x16xf32>
    tpu.vector_store %arg8[%c2_373, %c0_374], %572 {strides = array<i32>} : memref<16x16xf32, #tpu.memory_space<vmem>>, vector<1x16xf32>,
    %573 = arith.maximumf %566, %568 : vector<16xf32>
    %c4_375 = arith.constant 4 : index
    %c0_376 = arith.constant 0 : index
    %574 = vector.load %arg8[%c4_375, %c0_376] : memref<16x16xf32, #tpu.memory_space<vmem>>, vector<1x16xf32>
    %575 = vector.shape_cast %574 : vector<1x16xf32> to vector<16xf32>
    %576 = vector.shape_cast %573 : vector<16xf32> to vector<1x16xf32>
    tpu.vector_store %arg8[%c4_375, %c0_376], %576 {strides = array<i32>} : memref<16x16xf32, #tpu.memory_space<vmem>>, vector<1x16xf32>,
    %c6_377 = arith.constant 6 : index
    %c0_378 = arith.constant 0 : index
    %577 = vector.load %arg8[%c6_377, %c0_378] : memref<16x16xf32, #tpu.memory_space<vmem>>, vector<1x16xf32>
    %578 = vector.shape_cast %577 : vector<1x16xf32> to vector<16xf32>
    %c8_379 = arith.constant 8 : index
    %c0_380 = arith.constant 0 : index
    %579 = vector.load %arg8[%c8_379, %c0_380] : memref<16x16xf32, #tpu.memory_space<vmem>>, vector<1x16xf32>
    %580 = vector.shape_cast %579 : vector<1x16xf32> to vector<16xf32>
    %581 = arith.minimumf %578, %580 : vector<16xf32>
    %c6_381 = arith.constant 6 : index
    %c0_382 = arith.constant 0 : index
    %582 = vector.load %arg8[%c6_381, %c0_382] : memref<16x16xf32, #tpu.memory_space<vmem>>, vector<1x16xf32>
    %583 = vector.shape_cast %582 : vector<1x16xf32> to vector<16xf32>
    %584 = vector.shape_cast %581 : vector<16xf32> to vector<1x16xf32>
    tpu.vector_store %arg8[%c6_381, %c0_382], %584 {strides = array<i32>} : memref<16x16xf32, #tpu.memory_space<vmem>>, vector<1x16xf32>,
    %585 = arith.maximumf %578, %580 : vector<16xf32>
    %c8_383 = arith.constant 8 : index
    %c0_384 = arith.constant 0 : index
    %586 = vector.load %arg8[%c8_383, %c0_384] : memref<16x16xf32, #tpu.memory_space<vmem>>, vector<1x16xf32>
    %587 = vector.shape_cast %586 : vector<1x16xf32> to vector<16xf32>
    %588 = vector.shape_cast %585 : vector<16xf32> to vector<1x16xf32>
    tpu.vector_store %arg8[%c8_383, %c0_384], %588 {strides = array<i32>} : memref<16x16xf32, #tpu.memory_space<vmem>>, vector<1x16xf32>,
    %c10_385 = arith.constant 10 : index
    %c0_386 = arith.constant 0 : index
    %589 = vector.load %arg8[%c10_385, %c0_386] : memref<16x16xf32, #tpu.memory_space<vmem>>, vector<1x16xf32>
    %590 = vector.shape_cast %589 : vector<1x16xf32> to vector<16xf32>
    %c12_387 = arith.constant 12 : index
    %c0_388 = arith.constant 0 : index
    %591 = vector.load %arg8[%c12_387, %c0_388] : memref<16x16xf32, #tpu.memory_space<vmem>>, vector<1x16xf32>
    %592 = vector.shape_cast %591 : vector<1x16xf32> to vector<16xf32>
    %593 = arith.minimumf %590, %592 : vector<16xf32>
    %c10_389 = arith.constant 10 : index
    %c0_390 = arith.constant 0 : index
    %594 = vector.load %arg8[%c10_389, %c0_390] : memref<16x16xf32, #tpu.memory_space<vmem>>, vector<1x16xf32>
    %595 = vector.shape_cast %594 : vector<1x16xf32> to vector<16xf32>
    %596 = vector.shape_cast %593 : vector<16xf32> to vector<1x16xf32>
    tpu.vector_store %arg8[%c10_389, %c0_390], %596 {strides = array<i32>} : memref<16x16xf32, #tpu.memory_space<vmem>>, vector<1x16xf32>,
    %597 = arith.maximumf %590, %592 : vector<16xf32>
    %c12_391 = arith.constant 12 : index
    %c0_392 = arith.constant 0 : index
    %598 = vector.load %arg8[%c12_391, %c0_392] : memref<16x16xf32, #tpu.memory_space<vmem>>, vector<1x16xf32>
    %599 = vector.shape_cast %598 : vector<1x16xf32> to vector<16xf32>
    %600 = vector.shape_cast %597 : vector<16xf32> to vector<1x16xf32>
    tpu.vector_store %arg8[%c12_391, %c0_392], %600 {strides = array<i32>} : memref<16x16xf32, #tpu.memory_space<vmem>>, vector<1x16xf32>,
    %c0_393 = arith.constant 0 : index
    %c0_394 = arith.constant 0 : index
    %601 = vector.load %arg8[%c0_393, %c0_394] : memref<16x16xf32, #tpu.memory_space<vmem>>, vector<1x16xf32>
    %602 = vector.shape_cast %601 : vector<1x16xf32> to vector<16xf32>
    %c2_395 = arith.constant 2 : index
    %c0_396 = arith.constant 0 : index
    %603 = vector.load %arg8[%c2_395, %c0_396] : memref<16x16xf32, #tpu.memory_space<vmem>>, vector<1x16xf32>
    %604 = vector.shape_cast %603 : vector<1x16xf32> to vector<16xf32>
    %605 = arith.minimumf %602, %604 : vector<16xf32>
    %c0_397 = arith.constant 0 : index
    %c0_398 = arith.constant 0 : index
    %606 = vector.load %arg8[%c0_397, %c0_398] : memref<16x16xf32, #tpu.memory_space<vmem>>, vector<1x16xf32>
    %607 = vector.shape_cast %606 : vector<1x16xf32> to vector<16xf32>
    %608 = vector.shape_cast %605 : vector<16xf32> to vector<1x16xf32>
    tpu.vector_store %arg8[%c0_397, %c0_398], %608 {strides = array<i32>} : memref<16x16xf32, #tpu.memory_space<vmem>>, vector<1x16xf32>,
    %609 = arith.maximumf %602, %604 : vector<16xf32>
    %c2_399 = arith.constant 2 : index
    %c0_400 = arith.constant 0 : index
    %610 = vector.load %arg8[%c2_399, %c0_400] : memref<16x16xf32, #tpu.memory_space<vmem>>, vector<1x16xf32>
    %611 = vector.shape_cast %610 : vector<1x16xf32> to vector<16xf32>
    %612 = vector.shape_cast %609 : vector<16xf32> to vector<1x16xf32>
    tpu.vector_store %arg8[%c2_399, %c0_400], %612 {strides = array<i32>} : memref<16x16xf32, #tpu.memory_space<vmem>>, vector<1x16xf32>,
    %c4_401 = arith.constant 4 : index
    %c0_402 = arith.constant 0 : index
    %613 = vector.load %arg8[%c4_401, %c0_402] : memref<16x16xf32, #tpu.memory_space<vmem>>, vector<1x16xf32>
    %614 = vector.shape_cast %613 : vector<1x16xf32> to vector<16xf32>
    %c6_403 = arith.constant 6 : index
    %c0_404 = arith.constant 0 : index
    %615 = vector.load %arg8[%c6_403, %c0_404] : memref<16x16xf32, #tpu.memory_space<vmem>>, vector<1x16xf32>
    %616 = vector.shape_cast %615 : vector<1x16xf32> to vector<16xf32>
    %617 = arith.minimumf %614, %616 : vector<16xf32>
    %c4_405 = arith.constant 4 : index
    %c0_406 = arith.constant 0 : index
    %618 = vector.load %arg8[%c4_405, %c0_406] : memref<16x16xf32, #tpu.memory_space<vmem>>, vector<1x16xf32>
    %619 = vector.shape_cast %618 : vector<1x16xf32> to vector<16xf32>
    %620 = vector.shape_cast %617 : vector<16xf32> to vector<1x16xf32>
    tpu.vector_store %arg8[%c4_405, %c0_406], %620 {strides = array<i32>} : memref<16x16xf32, #tpu.memory_space<vmem>>, vector<1x16xf32>,
    %621 = arith.maximumf %614, %616 : vector<16xf32>
    %c6_407 = arith.constant 6 : index
    %c0_408 = arith.constant 0 : index
    %622 = vector.load %arg8[%c6_407, %c0_408] : memref<16x16xf32, #tpu.memory_space<vmem>>, vector<1x16xf32>
    %623 = vector.shape_cast %622 : vector<1x16xf32> to vector<16xf32>
    %624 = vector.shape_cast %621 : vector<16xf32> to vector<1x16xf32>
    tpu.vector_store %arg8[%c6_407, %c0_408], %624 {strides = array<i32>} : memref<16x16xf32, #tpu.memory_space<vmem>>, vector<1x16xf32>,
    %c8_409 = arith.constant 8 : index
    %c0_410 = arith.constant 0 : index
    %625 = vector.load %arg8[%c8_409, %c0_410] : memref<16x16xf32, #tpu.memory_space<vmem>>, vector<1x16xf32>
    %626 = vector.shape_cast %625 : vector<1x16xf32> to vector<16xf32>
    %c10_411 = arith.constant 10 : index
    %c0_412 = arith.constant 0 : index
    %627 = vector.load %arg8[%c10_411, %c0_412] : memref<16x16xf32, #tpu.memory_space<vmem>>, vector<1x16xf32>
    %628 = vector.shape_cast %627 : vector<1x16xf32> to vector<16xf32>
    %629 = arith.minimumf %626, %628 : vector<16xf32>
    %c8_413 = arith.constant 8 : index
    %c0_414 = arith.constant 0 : index
    %630 = vector.load %arg8[%c8_413, %c0_414] : memref<16x16xf32, #tpu.memory_space<vmem>>, vector<1x16xf32>
    %631 = vector.shape_cast %630 : vector<1x16xf32> to vector<16xf32>
    %632 = vector.shape_cast %629 : vector<16xf32> to vector<1x16xf32>
    tpu.vector_store %arg8[%c8_413, %c0_414], %632 {strides = array<i32>} : memref<16x16xf32, #tpu.memory_space<vmem>>, vector<1x16xf32>,
    %633 = arith.maximumf %626, %628 : vector<16xf32>
    %c10_415 = arith.constant 10 : index
    %c0_416 = arith.constant 0 : index
    %634 = vector.load %arg8[%c10_415, %c0_416] : memref<16x16xf32, #tpu.memory_space<vmem>>, vector<1x16xf32>
    %635 = vector.shape_cast %634 : vector<1x16xf32> to vector<16xf32>
    %636 = vector.shape_cast %633 : vector<16xf32> to vector<1x16xf32>
    tpu.vector_store %arg8[%c10_415, %c0_416], %636 {strides = array<i32>} : memref<16x16xf32, #tpu.memory_space<vmem>>, vector<1x16xf32>,
    %c12_417 = arith.constant 12 : index
    %c0_418 = arith.constant 0 : index
    %637 = vector.load %arg8[%c12_417, %c0_418] : memref<16x16xf32, #tpu.memory_space<vmem>>, vector<1x16xf32>
    %638 = vector.shape_cast %637 : vector<1x16xf32> to vector<16xf32>
    %c14_419 = arith.constant 14 : index
    %c0_420 = arith.constant 0 : index
    %639 = vector.load %arg8[%c14_419, %c0_420] : memref<16x16xf32, #tpu.memory_space<vmem>>, vector<1x16xf32>
    %640 = vector.shape_cast %639 : vector<1x16xf32> to vector<16xf32>
    %641 = arith.minimumf %638, %640 : vector<16xf32>
    %c12_421 = arith.constant 12 : index
    %c0_422 = arith.constant 0 : index
    %642 = vector.load %arg8[%c12_421, %c0_422] : memref<16x16xf32, #tpu.memory_space<vmem>>, vector<1x16xf32>
    %643 = vector.shape_cast %642 : vector<1x16xf32> to vector<16xf32>
    %644 = vector.shape_cast %641 : vector<16xf32> to vector<1x16xf32>
    tpu.vector_store %arg8[%c12_421, %c0_422], %644 {strides = array<i32>} : memref<16x16xf32, #tpu.memory_space<vmem>>, vector<1x16xf32>,
    %645 = arith.maximumf %638, %640 : vector<16xf32>
    %c14_423 = arith.constant 14 : index
    %c0_424 = arith.constant 0 : index
    %646 = vector.load %arg8[%c14_423, %c0_424] : memref<16x16xf32, #tpu.memory_space<vmem>>, vector<1x16xf32>
    %647 = vector.shape_cast %646 : vector<1x16xf32> to vector<16xf32>
    %648 = vector.shape_cast %645 : vector<16xf32> to vector<1x16xf32>
    tpu.vector_store %arg8[%c14_423, %c0_424], %648 {strides = array<i32>} : memref<16x16xf32, #tpu.memory_space<vmem>>, vector<1x16xf32>,
    %c2_425 = arith.constant 2 : index
    %c0_426 = arith.constant 0 : index
    %649 = vector.load %arg8[%c2_425, %c0_426] : memref<16x16xf32, #tpu.memory_space<vmem>>, vector<1x16xf32>
    %650 = vector.shape_cast %649 : vector<1x16xf32> to vector<16xf32>
    %c4_427 = arith.constant 4 : index
    %c0_428 = arith.constant 0 : index
    %651 = vector.load %arg8[%c4_427, %c0_428] : memref<16x16xf32, #tpu.memory_space<vmem>>, vector<1x16xf32>
    %652 = vector.shape_cast %651 : vector<1x16xf32> to vector<16xf32>
    %653 = arith.minimumf %650, %652 : vector<16xf32>
    %c2_429 = arith.constant 2 : index
    %c0_430 = arith.constant 0 : index
    %654 = vector.load %arg8[%c2_429, %c0_430] : memref<16x16xf32, #tpu.memory_space<vmem>>, vector<1x16xf32>
    %655 = vector.shape_cast %654 : vector<1x16xf32> to vector<16xf32>
    %656 = vector.shape_cast %653 : vector<16xf32> to vector<1x16xf32>
    tpu.vector_store %arg8[%c2_429, %c0_430], %656 {strides = array<i32>} : memref<16x16xf32, #tpu.memory_space<vmem>>, vector<1x16xf32>,
    %657 = arith.maximumf %650, %652 : vector<16xf32>
    %c4_431 = arith.constant 4 : index
    %c0_432 = arith.constant 0 : index
    %658 = vector.load %arg8[%c4_431, %c0_432] : memref<16x16xf32, #tpu.memory_space<vmem>>, vector<1x16xf32>
    %659 = vector.shape_cast %658 : vector<1x16xf32> to vector<16xf32>
    %660 = vector.shape_cast %657 : vector<16xf32> to vector<1x16xf32>
    tpu.vector_store %arg8[%c4_431, %c0_432], %660 {strides = array<i32>} : memref<16x16xf32, #tpu.memory_space<vmem>>, vector<1x16xf32>,
    %c6_433 = arith.constant 6 : index
    %c0_434 = arith.constant 0 : index
    %661 = vector.load %arg8[%c6_433, %c0_434] : memref<16x16xf32, #tpu.memory_space<vmem>>, vector<1x16xf32>
    %662 = vector.shape_cast %661 : vector<1x16xf32> to vector<16xf32>
    %c8_435 = arith.constant 8 : index
    %c0_436 = arith.constant 0 : index
    %663 = vector.load %arg8[%c8_435, %c0_436] : memref<16x16xf32, #tpu.memory_space<vmem>>, vector<1x16xf32>
    %664 = vector.shape_cast %663 : vector<1x16xf32> to vector<16xf32>
    %665 = arith.minimumf %662, %664 : vector<16xf32>
    %c6_437 = arith.constant 6 : index
    %c0_438 = arith.constant 0 : index
    %666 = vector.load %arg8[%c6_437, %c0_438] : memref<16x16xf32, #tpu.memory_space<vmem>>, vector<1x16xf32>
    %667 = vector.shape_cast %666 : vector<1x16xf32> to vector<16xf32>
    %668 = vector.shape_cast %665 : vector<16xf32> to vector<1x16xf32>
    tpu.vector_store %arg8[%c6_437, %c0_438], %668 {strides = array<i32>} : memref<16x16xf32, #tpu.memory_space<vmem>>, vector<1x16xf32>,
    %669 = arith.maximumf %662, %664 : vector<16xf32>
    %c8_439 = arith.constant 8 : index
    %c0_440 = arith.constant 0 : index
    %670 = vector.load %arg8[%c8_439, %c0_440] : memref<16x16xf32, #tpu.memory_space<vmem>>, vector<1x16xf32>
    %671 = vector.shape_cast %670 : vector<1x16xf32> to vector<16xf32>
    %672 = vector.shape_cast %669 : vector<16xf32> to vector<1x16xf32>
    tpu.vector_store %arg8[%c8_439, %c0_440], %672 {strides = array<i32>} : memref<16x16xf32, #tpu.memory_space<vmem>>, vector<1x16xf32>,
    %c10_441 = arith.constant 10 : index
    %c0_442 = arith.constant 0 : index
    %673 = vector.load %arg8[%c10_441, %c0_442] : memref<16x16xf32, #tpu.memory_space<vmem>>, vector<1x16xf32>
    %674 = vector.shape_cast %673 : vector<1x16xf32> to vector<16xf32>
    %c12_443 = arith.constant 12 : index
    %c0_444 = arith.constant 0 : index
    %675 = vector.load %arg8[%c12_443, %c0_444] : memref<16x16xf32, #tpu.memory_space<vmem>>, vector<1x16xf32>
    %676 = vector.shape_cast %675 : vector<1x16xf32> to vector<16xf32>
    %677 = arith.minimumf %674, %676 : vector<16xf32>
    %c10_445 = arith.constant 10 : index
    %c0_446 = arith.constant 0 : index
    %678 = vector.load %arg8[%c10_445, %c0_446] : memref<16x16xf32, #tpu.memory_space<vmem>>, vector<1x16xf32>
    %679 = vector.shape_cast %678 : vector<1x16xf32> to vector<16xf32>
    %680 = vector.shape_cast %677 : vector<16xf32> to vector<1x16xf32>
    tpu.vector_store %arg8[%c10_445, %c0_446], %680 {strides = array<i32>} : memref<16x16xf32, #tpu.memory_space<vmem>>, vector<1x16xf32>,
    %681 = arith.maximumf %674, %676 : vector<16xf32>
    %c12_447 = arith.constant 12 : index
    %c0_448 = arith.constant 0 : index
    %682 = vector.load %arg8[%c12_447, %c0_448] : memref<16x16xf32, #tpu.memory_space<vmem>>, vector<1x16xf32>
    %683 = vector.shape_cast %682 : vector<1x16xf32> to vector<16xf32>
    %684 = vector.shape_cast %681 : vector<16xf32> to vector<1x16xf32>
    tpu.vector_store %arg8[%c12_447, %c0_448], %684 {strides = array<i32>} : memref<16x16xf32, #tpu.memory_space<vmem>>, vector<1x16xf32>,
    %c1_449 = arith.constant 1 : index
    %c0_450 = arith.constant 0 : index
    %685 = vector.load %arg8[%c1_449, %c0_450] : memref<16x16xf32, #tpu.memory_space<vmem>>, vector<1x16xf32>
    %686 = vector.shape_cast %685 : vector<1x16xf32> to vector<16xf32>
    %c3_451 = arith.constant 3 : index
    %c0_452 = arith.constant 0 : index
    %687 = vector.load %arg8[%c3_451, %c0_452] : memref<16x16xf32, #tpu.memory_space<vmem>>, vector<1x16xf32>
    %688 = vector.shape_cast %687 : vector<1x16xf32> to vector<16xf32>
    %689 = arith.minimumf %686, %688 : vector<16xf32>
    %c1_453 = arith.constant 1 : index
    %c0_454 = arith.constant 0 : index
    %690 = vector.load %arg8[%c1_453, %c0_454] : memref<16x16xf32, #tpu.memory_space<vmem>>, vector<1x16xf32>
    %691 = vector.shape_cast %690 : vector<1x16xf32> to vector<16xf32>
    %692 = vector.shape_cast %689 : vector<16xf32> to vector<1x16xf32>
    tpu.vector_store %arg8[%c1_453, %c0_454], %692 {strides = array<i32>} : memref<16x16xf32, #tpu.memory_space<vmem>>, vector<1x16xf32>,
    %693 = arith.maximumf %686, %688 : vector<16xf32>
    %c3_455 = arith.constant 3 : index
    %c0_456 = arith.constant 0 : index
    %694 = vector.load %arg8[%c3_455, %c0_456] : memref<16x16xf32, #tpu.memory_space<vmem>>, vector<1x16xf32>
    %695 = vector.shape_cast %694 : vector<1x16xf32> to vector<16xf32>
    %696 = vector.shape_cast %693 : vector<16xf32> to vector<1x16xf32>
    tpu.vector_store %arg8[%c3_455, %c0_456], %696 {strides = array<i32>} : memref<16x16xf32, #tpu.memory_space<vmem>>, vector<1x16xf32>,
    %c5_457 = arith.constant 5 : index
    %c0_458 = arith.constant 0 : index
    %697 = vector.load %arg8[%c5_457, %c0_458] : memref<16x16xf32, #tpu.memory_space<vmem>>, vector<1x16xf32>
    %698 = vector.shape_cast %697 : vector<1x16xf32> to vector<16xf32>
    %c7_459 = arith.constant 7 : index
    %c0_460 = arith.constant 0 : index
    %699 = vector.load %arg8[%c7_459, %c0_460] : memref<16x16xf32, #tpu.memory_space<vmem>>, vector<1x16xf32>
    %700 = vector.shape_cast %699 : vector<1x16xf32> to vector<16xf32>
    %701 = arith.minimumf %698, %700 : vector<16xf32>
    %c5_461 = arith.constant 5 : index
    %c0_462 = arith.constant 0 : index
    %702 = vector.load %arg8[%c5_461, %c0_462] : memref<16x16xf32, #tpu.memory_space<vmem>>, vector<1x16xf32>
    %703 = vector.shape_cast %702 : vector<1x16xf32> to vector<16xf32>
    %704 = vector.shape_cast %701 : vector<16xf32> to vector<1x16xf32>
    tpu.vector_store %arg8[%c5_461, %c0_462], %704 {strides = array<i32>} : memref<16x16xf32, #tpu.memory_space<vmem>>, vector<1x16xf32>,
    %705 = arith.maximumf %698, %700 : vector<16xf32>
    %c7_463 = arith.constant 7 : index
    %c0_464 = arith.constant 0 : index
    %706 = vector.load %arg8[%c7_463, %c0_464] : memref<16x16xf32, #tpu.memory_space<vmem>>, vector<1x16xf32>
    %707 = vector.shape_cast %706 : vector<1x16xf32> to vector<16xf32>
    %708 = vector.shape_cast %705 : vector<16xf32> to vector<1x16xf32>
    tpu.vector_store %arg8[%c7_463, %c0_464], %708 {strides = array<i32>} : memref<16x16xf32, #tpu.memory_space<vmem>>, vector<1x16xf32>,
    %c9 = arith.constant 9 : index
    %c0_465 = arith.constant 0 : index
    %709 = vector.load %arg8[%c9, %c0_465] : memref<16x16xf32, #tpu.memory_space<vmem>>, vector<1x16xf32>
    %710 = vector.shape_cast %709 : vector<1x16xf32> to vector<16xf32>
    %c11 = arith.constant 11 : index
    %c0_466 = arith.constant 0 : index
    %711 = vector.load %arg8[%c11, %c0_466] : memref<16x16xf32, #tpu.memory_space<vmem>>, vector<1x16xf32>
    %712 = vector.shape_cast %711 : vector<1x16xf32> to vector<16xf32>
    %713 = arith.minimumf %710, %712 : vector<16xf32>
    %c9_467 = arith.constant 9 : index
    %c0_468 = arith.constant 0 : index
    %714 = vector.load %arg8[%c9_467, %c0_468] : memref<16x16xf32, #tpu.memory_space<vmem>>, vector<1x16xf32>
    %715 = vector.shape_cast %714 : vector<1x16xf32> to vector<16xf32>
    %716 = vector.shape_cast %713 : vector<16xf32> to vector<1x16xf32>
    tpu.vector_store %arg8[%c9_467, %c0_468], %716 {strides = array<i32>} : memref<16x16xf32, #tpu.memory_space<vmem>>, vector<1x16xf32>,
    %717 = arith.maximumf %710, %712 : vector<16xf32>
    %c11_469 = arith.constant 11 : index
    %c0_470 = arith.constant 0 : index
    %718 = vector.load %arg8[%c11_469, %c0_470] : memref<16x16xf32, #tpu.memory_space<vmem>>, vector<1x16xf32>
    %719 = vector.shape_cast %718 : vector<1x16xf32> to vector<16xf32>
    %720 = vector.shape_cast %717 : vector<16xf32> to vector<1x16xf32>
    tpu.vector_store %arg8[%c11_469, %c0_470], %720 {strides = array<i32>} : memref<16x16xf32, #tpu.memory_space<vmem>>, vector<1x16xf32>,
    %c13 = arith.constant 13 : index
    %c0_471 = arith.constant 0 : index
    %721 = vector.load %arg8[%c13, %c0_471] : memref<16x16xf32, #tpu.memory_space<vmem>>, vector<1x16xf32>
    %722 = vector.shape_cast %721 : vector<1x16xf32> to vector<16xf32>
    %c15 = arith.constant 15 : index
    %c0_472 = arith.constant 0 : index
    %723 = vector.load %arg8[%c15, %c0_472] : memref<16x16xf32, #tpu.memory_space<vmem>>, vector<1x16xf32>
    %724 = vector.shape_cast %723 : vector<1x16xf32> to vector<16xf32>
    %725 = arith.minimumf %722, %724 : vector<16xf32>
    %c13_473 = arith.constant 13 : index
    %c0_474 = arith.constant 0 : index
    %726 = vector.load %arg8[%c13_473, %c0_474] : memref<16x16xf32, #tpu.memory_space<vmem>>, vector<1x16xf32>
    %727 = vector.shape_cast %726 : vector<1x16xf32> to vector<16xf32>
    %728 = vector.shape_cast %725 : vector<16xf32> to vector<1x16xf32>
    tpu.vector_store %arg8[%c13_473, %c0_474], %728 {strides = array<i32>} : memref<16x16xf32, #tpu.memory_space<vmem>>, vector<1x16xf32>,
    %729 = arith.maximumf %722, %724 : vector<16xf32>
    %c15_475 = arith.constant 15 : index
    %c0_476 = arith.constant 0 : index
    %730 = vector.load %arg8[%c15_475, %c0_476] : memref<16x16xf32, #tpu.memory_space<vmem>>, vector<1x16xf32>
    %731 = vector.shape_cast %730 : vector<1x16xf32> to vector<16xf32>
    %732 = vector.shape_cast %729 : vector<16xf32> to vector<1x16xf32>
    tpu.vector_store %arg8[%c15_475, %c0_476], %732 {strides = array<i32>} : memref<16x16xf32, #tpu.memory_space<vmem>>, vector<1x16xf32>,
    %c3_477 = arith.constant 3 : index
    %c0_478 = arith.constant 0 : index
    %733 = vector.load %arg8[%c3_477, %c0_478] : memref<16x16xf32, #tpu.memory_space<vmem>>, vector<1x16xf32>
    %734 = vector.shape_cast %733 : vector<1x16xf32> to vector<16xf32>
    %c5_479 = arith.constant 5 : index
    %c0_480 = arith.constant 0 : index
    %735 = vector.load %arg8[%c5_479, %c0_480] : memref<16x16xf32, #tpu.memory_space<vmem>>, vector<1x16xf32>
    %736 = vector.shape_cast %735 : vector<1x16xf32> to vector<16xf32>
    %737 = arith.minimumf %734, %736 : vector<16xf32>
    %c3_481 = arith.constant 3 : index
    %c0_482 = arith.constant 0 : index
    %738 = vector.load %arg8[%c3_481, %c0_482] : memref<16x16xf32, #tpu.memory_space<vmem>>, vector<1x16xf32>
    %739 = vector.shape_cast %738 : vector<1x16xf32> to vector<16xf32>
    %740 = vector.shape_cast %737 : vector<16xf32> to vector<1x16xf32>
    tpu.vector_store %arg8[%c3_481, %c0_482], %740 {strides = array<i32>} : memref<16x16xf32, #tpu.memory_space<vmem>>, vector<1x16xf32>,
    %741 = arith.maximumf %734, %736 : vector<16xf32>
    %c5_483 = arith.constant 5 : index
    %c0_484 = arith.constant 0 : index
    %742 = vector.load %arg8[%c5_483, %c0_484] : memref<16x16xf32, #tpu.memory_space<vmem>>, vector<1x16xf32>
    %743 = vector.shape_cast %742 : vector<1x16xf32> to vector<16xf32>
    %744 = vector.shape_cast %741 : vector<16xf32> to vector<1x16xf32>
    tpu.vector_store %arg8[%c5_483, %c0_484], %744 {strides = array<i32>} : memref<16x16xf32, #tpu.memory_space<vmem>>, vector<1x16xf32>,
    %c7_485 = arith.constant 7 : index
    %c0_486 = arith.constant 0 : index
    %745 = vector.load %arg8[%c7_485, %c0_486] : memref<16x16xf32, #tpu.memory_space<vmem>>, vector<1x16xf32>
    %746 = vector.shape_cast %745 : vector<1x16xf32> to vector<16xf32>
    %c9_487 = arith.constant 9 : index
    %c0_488 = arith.constant 0 : index
    %747 = vector.load %arg8[%c9_487, %c0_488] : memref<16x16xf32, #tpu.memory_space<vmem>>, vector<1x16xf32>
    %748 = vector.shape_cast %747 : vector<1x16xf32> to vector<16xf32>
    %749 = arith.minimumf %746, %748 : vector<16xf32>
    %c7_489 = arith.constant 7 : index
    %c0_490 = arith.constant 0 : index
    %750 = vector.load %arg8[%c7_489, %c0_490] : memref<16x16xf32, #tpu.memory_space<vmem>>, vector<1x16xf32>
    %751 = vector.shape_cast %750 : vector<1x16xf32> to vector<16xf32>
    %752 = vector.shape_cast %749 : vector<16xf32> to vector<1x16xf32>
    tpu.vector_store %arg8[%c7_489, %c0_490], %752 {strides = array<i32>} : memref<16x16xf32, #tpu.memory_space<vmem>>, vector<1x16xf32>,
    %753 = arith.maximumf %746, %748 : vector<16xf32>
    %c9_491 = arith.constant 9 : index
    %c0_492 = arith.constant 0 : index
    %754 = vector.load %arg8[%c9_491, %c0_492] : memref<16x16xf32, #tpu.memory_space<vmem>>, vector<1x16xf32>
    %755 = vector.shape_cast %754 : vector<1x16xf32> to vector<16xf32>
    %756 = vector.shape_cast %753 : vector<16xf32> to vector<1x16xf32>
    tpu.vector_store %arg8[%c9_491, %c0_492], %756 {strides = array<i32>} : memref<16x16xf32, #tpu.memory_space<vmem>>, vector<1x16xf32>,
    %c11_493 = arith.constant 11 : index
    %c0_494 = arith.constant 0 : index
    %757 = vector.load %arg8[%c11_493, %c0_494] : memref<16x16xf32, #tpu.memory_space<vmem>>, vector<1x16xf32>
    %758 = vector.shape_cast %757 : vector<1x16xf32> to vector<16xf32>
    %c13_495 = arith.constant 13 : index
    %c0_496 = arith.constant 0 : index
    %759 = vector.load %arg8[%c13_495, %c0_496] : memref<16x16xf32, #tpu.memory_space<vmem>>, vector<1x16xf32>
    %760 = vector.shape_cast %759 : vector<1x16xf32> to vector<16xf32>
    %761 = arith.minimumf %758, %760 : vector<16xf32>
    %c11_497 = arith.constant 11 : index
    %c0_498 = arith.constant 0 : index
    %762 = vector.load %arg8[%c11_497, %c0_498] : memref<16x16xf32, #tpu.memory_space<vmem>>, vector<1x16xf32>
    %763 = vector.shape_cast %762 : vector<1x16xf32> to vector<16xf32>
    %764 = vector.shape_cast %761 : vector<16xf32> to vector<1x16xf32>
    tpu.vector_store %arg8[%c11_497, %c0_498], %764 {strides = array<i32>} : memref<16x16xf32, #tpu.memory_space<vmem>>, vector<1x16xf32>,
    %765 = arith.maximumf %758, %760 : vector<16xf32>
    %c13_499 = arith.constant 13 : index
    %c0_500 = arith.constant 0 : index
    %766 = vector.load %arg8[%c13_499, %c0_500] : memref<16x16xf32, #tpu.memory_space<vmem>>, vector<1x16xf32>
    %767 = vector.shape_cast %766 : vector<1x16xf32> to vector<16xf32>
    %768 = vector.shape_cast %765 : vector<16xf32> to vector<1x16xf32>
    tpu.vector_store %arg8[%c13_499, %c0_500], %768 {strides = array<i32>} : memref<16x16xf32, #tpu.memory_space<vmem>>, vector<1x16xf32>,
    %c1_501 = arith.constant 1 : index
    %c0_502 = arith.constant 0 : index
    %769 = vector.load %arg8[%c1_501, %c0_502] : memref<16x16xf32, #tpu.memory_space<vmem>>, vector<1x16xf32>
    %770 = vector.shape_cast %769 : vector<1x16xf32> to vector<16xf32>
    %c3_503 = arith.constant 3 : index
    %c0_504 = arith.constant 0 : index
    %771 = vector.load %arg8[%c3_503, %c0_504] : memref<16x16xf32, #tpu.memory_space<vmem>>, vector<1x16xf32>
    %772 = vector.shape_cast %771 : vector<1x16xf32> to vector<16xf32>
    %773 = arith.minimumf %770, %772 : vector<16xf32>
    %c1_505 = arith.constant 1 : index
    %c0_506 = arith.constant 0 : index
    %774 = vector.load %arg8[%c1_505, %c0_506] : memref<16x16xf32, #tpu.memory_space<vmem>>, vector<1x16xf32>
    %775 = vector.shape_cast %774 : vector<1x16xf32> to vector<16xf32>
    %776 = vector.shape_cast %773 : vector<16xf32> to vector<1x16xf32>
    tpu.vector_store %arg8[%c1_505, %c0_506], %776 {strides = array<i32>} : memref<16x16xf32, #tpu.memory_space<vmem>>, vector<1x16xf32>,
    %777 = arith.maximumf %770, %772 : vector<16xf32>
    %c3_507 = arith.constant 3 : index
    %c0_508 = arith.constant 0 : index
    %778 = vector.load %arg8[%c3_507, %c0_508] : memref<16x16xf32, #tpu.memory_space<vmem>>, vector<1x16xf32>
    %779 = vector.shape_cast %778 : vector<1x16xf32> to vector<16xf32>
    %780 = vector.shape_cast %777 : vector<16xf32> to vector<1x16xf32>
    tpu.vector_store %arg8[%c3_507, %c0_508], %780 {strides = array<i32>} : memref<16x16xf32, #tpu.memory_space<vmem>>, vector<1x16xf32>,
    %c5_509 = arith.constant 5 : index
    %c0_510 = arith.constant 0 : index
    %781 = vector.load %arg8[%c5_509, %c0_510] : memref<16x16xf32, #tpu.memory_space<vmem>>, vector<1x16xf32>
    %782 = vector.shape_cast %781 : vector<1x16xf32> to vector<16xf32>
    %c7_511 = arith.constant 7 : index
    %c0_512 = arith.constant 0 : index
    %783 = vector.load %arg8[%c7_511, %c0_512] : memref<16x16xf32, #tpu.memory_space<vmem>>, vector<1x16xf32>
    %784 = vector.shape_cast %783 : vector<1x16xf32> to vector<16xf32>
    %785 = arith.minimumf %782, %784 : vector<16xf32>
    %c5_513 = arith.constant 5 : index
    %c0_514 = arith.constant 0 : index
    %786 = vector.load %arg8[%c5_513, %c0_514] : memref<16x16xf32, #tpu.memory_space<vmem>>, vector<1x16xf32>
    %787 = vector.shape_cast %786 : vector<1x16xf32> to vector<16xf32>
    %788 = vector.shape_cast %785 : vector<16xf32> to vector<1x16xf32>
    tpu.vector_store %arg8[%c5_513, %c0_514], %788 {strides = array<i32>} : memref<16x16xf32, #tpu.memory_space<vmem>>, vector<1x16xf32>,
    %789 = arith.maximumf %782, %784 : vector<16xf32>
    %c7_515 = arith.constant 7 : index
    %c0_516 = arith.constant 0 : index
    %790 = vector.load %arg8[%c7_515, %c0_516] : memref<16x16xf32, #tpu.memory_space<vmem>>, vector<1x16xf32>
    %791 = vector.shape_cast %790 : vector<1x16xf32> to vector<16xf32>
    %792 = vector.shape_cast %789 : vector<16xf32> to vector<1x16xf32>
    tpu.vector_store %arg8[%c7_515, %c0_516], %792 {strides = array<i32>} : memref<16x16xf32, #tpu.memory_space<vmem>>, vector<1x16xf32>,
    %c9_517 = arith.constant 9 : index
    %c0_518 = arith.constant 0 : index
    %793 = vector.load %arg8[%c9_517, %c0_518] : memref<16x16xf32, #tpu.memory_space<vmem>>, vector<1x16xf32>
    %794 = vector.shape_cast %793 : vector<1x16xf32> to vector<16xf32>
    %c11_519 = arith.constant 11 : index
    %c0_520 = arith.constant 0 : index
    %795 = vector.load %arg8[%c11_519, %c0_520] : memref<16x16xf32, #tpu.memory_space<vmem>>, vector<1x16xf32>
    %796 = vector.shape_cast %795 : vector<1x16xf32> to vector<16xf32>
    %797 = arith.minimumf %794, %796 : vector<16xf32>
    %c9_521 = arith.constant 9 : index
    %c0_522 = arith.constant 0 : index
    %798 = vector.load %arg8[%c9_521, %c0_522] : memref<16x16xf32, #tpu.memory_space<vmem>>, vector<1x16xf32>
    %799 = vector.shape_cast %798 : vector<1x16xf32> to vector<16xf32>
    %800 = vector.shape_cast %797 : vector<16xf32> to vector<1x16xf32>
    tpu.vector_store %arg8[%c9_521, %c0_522], %800 {strides = array<i32>} : memref<16x16xf32, #tpu.memory_space<vmem>>, vector<1x16xf32>,
    %801 = arith.maximumf %794, %796 : vector<16xf32>
    %c11_523 = arith.constant 11 : index
    %c0_524 = arith.constant 0 : index
    %802 = vector.load %arg8[%c11_523, %c0_524] : memref<16x16xf32, #tpu.memory_space<vmem>>, vector<1x16xf32>
    %803 = vector.shape_cast %802 : vector<1x16xf32> to vector<16xf32>
    %804 = vector.shape_cast %801 : vector<16xf32> to vector<1x16xf32>
    tpu.vector_store %arg8[%c11_523, %c0_524], %804 {strides = array<i32>} : memref<16x16xf32, #tpu.memory_space<vmem>>, vector<1x16xf32>,
    %c13_525 = arith.constant 13 : index
    %c0_526 = arith.constant 0 : index
    %805 = vector.load %arg8[%c13_525, %c0_526] : memref<16x16xf32, #tpu.memory_space<vmem>>, vector<1x16xf32>
    %806 = vector.shape_cast %805 : vector<1x16xf32> to vector<16xf32>
    %c15_527 = arith.constant 15 : index
    %c0_528 = arith.constant 0 : index
    %807 = vector.load %arg8[%c15_527, %c0_528] : memref<16x16xf32, #tpu.memory_space<vmem>>, vector<1x16xf32>
    %808 = vector.shape_cast %807 : vector<1x16xf32> to vector<16xf32>
    %809 = arith.minimumf %806, %808 : vector<16xf32>
    %c13_529 = arith.constant 13 : index
    %c0_530 = arith.constant 0 : index
    %810 = vector.load %arg8[%c13_529, %c0_530] : memref<16x16xf32, #tpu.memory_space<vmem>>, vector<1x16xf32>
    %811 = vector.shape_cast %810 : vector<1x16xf32> to vector<16xf32>
    %812 = vector.shape_cast %809 : vector<16xf32> to vector<1x16xf32>
    tpu.vector_store %arg8[%c13_529, %c0_530], %812 {strides = array<i32>} : memref<16x16xf32, #tpu.memory_space<vmem>>, vector<1x16xf32>,
    %813 = arith.maximumf %806, %808 : vector<16xf32>
    %c15_531 = arith.constant 15 : index
    %c0_532 = arith.constant 0 : index
    %814 = vector.load %arg8[%c15_531, %c0_532] : memref<16x16xf32, #tpu.memory_space<vmem>>, vector<1x16xf32>
    %815 = vector.shape_cast %814 : vector<1x16xf32> to vector<16xf32>
    %816 = vector.shape_cast %813 : vector<16xf32> to vector<1x16xf32>
    tpu.vector_store %arg8[%c15_531, %c0_532], %816 {strides = array<i32>} : memref<16x16xf32, #tpu.memory_space<vmem>>, vector<1x16xf32>,
    %c3_533 = arith.constant 3 : index
    %c0_534 = arith.constant 0 : index
    %817 = vector.load %arg8[%c3_533, %c0_534] : memref<16x16xf32, #tpu.memory_space<vmem>>, vector<1x16xf32>
    %818 = vector.shape_cast %817 : vector<1x16xf32> to vector<16xf32>
    %c5_535 = arith.constant 5 : index
    %c0_536 = arith.constant 0 : index
    %819 = vector.load %arg8[%c5_535, %c0_536] : memref<16x16xf32, #tpu.memory_space<vmem>>, vector<1x16xf32>
    %820 = vector.shape_cast %819 : vector<1x16xf32> to vector<16xf32>
    %821 = arith.minimumf %818, %820 : vector<16xf32>
    %c3_537 = arith.constant 3 : index
    %c0_538 = arith.constant 0 : index
    %822 = vector.load %arg8[%c3_537, %c0_538] : memref<16x16xf32, #tpu.memory_space<vmem>>, vector<1x16xf32>
    %823 = vector.shape_cast %822 : vector<1x16xf32> to vector<16xf32>
    %824 = vector.shape_cast %821 : vector<16xf32> to vector<1x16xf32>
    tpu.vector_store %arg8[%c3_537, %c0_538], %824 {strides = array<i32>} : memref<16x16xf32, #tpu.memory_space<vmem>>, vector<1x16xf32>,
    %825 = arith.maximumf %818, %820 : vector<16xf32>
    %c5_539 = arith.constant 5 : index
    %c0_540 = arith.constant 0 : index
    %826 = vector.load %arg8[%c5_539, %c0_540] : memref<16x16xf32, #tpu.memory_space<vmem>>, vector<1x16xf32>
    %827 = vector.shape_cast %826 : vector<1x16xf32> to vector<16xf32>
    %828 = vector.shape_cast %825 : vector<16xf32> to vector<1x16xf32>
    tpu.vector_store %arg8[%c5_539, %c0_540], %828 {strides = array<i32>} : memref<16x16xf32, #tpu.memory_space<vmem>>, vector<1x16xf32>,
    %c7_541 = arith.constant 7 : index
    %c0_542 = arith.constant 0 : index
    %829 = vector.load %arg8[%c7_541, %c0_542] : memref<16x16xf32, #tpu.memory_space<vmem>>, vector<1x16xf32>
    %830 = vector.shape_cast %829 : vector<1x16xf32> to vector<16xf32>
    %c9_543 = arith.constant 9 : index
    %c0_544 = arith.constant 0 : index
    %831 = vector.load %arg8[%c9_543, %c0_544] : memref<16x16xf32, #tpu.memory_space<vmem>>, vector<1x16xf32>
    %832 = vector.shape_cast %831 : vector<1x16xf32> to vector<16xf32>
    %833 = arith.minimumf %830, %832 : vector<16xf32>
    %c7_545 = arith.constant 7 : index
    %c0_546 = arith.constant 0 : index
    %834 = vector.load %arg8[%c7_545, %c0_546] : memref<16x16xf32, #tpu.memory_space<vmem>>, vector<1x16xf32>
    %835 = vector.shape_cast %834 : vector<1x16xf32> to vector<16xf32>
    %836 = vector.shape_cast %833 : vector<16xf32> to vector<1x16xf32>
    tpu.vector_store %arg8[%c7_545, %c0_546], %836 {strides = array<i32>} : memref<16x16xf32, #tpu.memory_space<vmem>>, vector<1x16xf32>,
    %837 = arith.maximumf %830, %832 : vector<16xf32>
    %c9_547 = arith.constant 9 : index
    %c0_548 = arith.constant 0 : index
    %838 = vector.load %arg8[%c9_547, %c0_548] : memref<16x16xf32, #tpu.memory_space<vmem>>, vector<1x16xf32>
    %839 = vector.shape_cast %838 : vector<1x16xf32> to vector<16xf32>
    %840 = vector.shape_cast %837 : vector<16xf32> to vector<1x16xf32>
    tpu.vector_store %arg8[%c9_547, %c0_548], %840 {strides = array<i32>} : memref<16x16xf32, #tpu.memory_space<vmem>>, vector<1x16xf32>,
    %c11_549 = arith.constant 11 : index
    %c0_550 = arith.constant 0 : index
    %841 = vector.load %arg8[%c11_549, %c0_550] : memref<16x16xf32, #tpu.memory_space<vmem>>, vector<1x16xf32>
    %842 = vector.shape_cast %841 : vector<1x16xf32> to vector<16xf32>
    %c13_551 = arith.constant 13 : index
    %c0_552 = arith.constant 0 : index
    %843 = vector.load %arg8[%c13_551, %c0_552] : memref<16x16xf32, #tpu.memory_space<vmem>>, vector<1x16xf32>
    %844 = vector.shape_cast %843 : vector<1x16xf32> to vector<16xf32>
    %845 = arith.minimumf %842, %844 : vector<16xf32>
    %c11_553 = arith.constant 11 : index
    %c0_554 = arith.constant 0 : index
    %846 = vector.load %arg8[%c11_553, %c0_554] : memref<16x16xf32, #tpu.memory_space<vmem>>, vector<1x16xf32>
    %847 = vector.shape_cast %846 : vector<1x16xf32> to vector<16xf32>
    %848 = vector.shape_cast %845 : vector<16xf32> to vector<1x16xf32>
    tpu.vector_store %arg8[%c11_553, %c0_554], %848 {strides = array<i32>} : memref<16x16xf32, #tpu.memory_space<vmem>>, vector<1x16xf32>,
    %849 = arith.maximumf %842, %844 : vector<16xf32>
    %c13_555 = arith.constant 13 : index
    %c0_556 = arith.constant 0 : index
    %850 = vector.load %arg8[%c13_555, %c0_556] : memref<16x16xf32, #tpu.memory_space<vmem>>, vector<1x16xf32>
    %851 = vector.shape_cast %850 : vector<1x16xf32> to vector<16xf32>
    %852 = vector.shape_cast %849 : vector<16xf32> to vector<1x16xf32>
    tpu.vector_store %arg8[%c13_555, %c0_556], %852 {strides = array<i32>} : memref<16x16xf32, #tpu.memory_space<vmem>>, vector<1x16xf32>,
    %c1_557 = arith.constant 1 : index
    %c0_558 = arith.constant 0 : index
    %853 = vector.load %arg8[%c1_557, %c0_558] : memref<16x16xf32, #tpu.memory_space<vmem>>, vector<1x16xf32>
    %854 = vector.shape_cast %853 : vector<1x16xf32> to vector<16xf32>
    %c3_559 = arith.constant 3 : index
    %c0_560 = arith.constant 0 : index
    %855 = vector.load %arg8[%c3_559, %c0_560] : memref<16x16xf32, #tpu.memory_space<vmem>>, vector<1x16xf32>
    %856 = vector.shape_cast %855 : vector<1x16xf32> to vector<16xf32>
    %857 = arith.minimumf %854, %856 : vector<16xf32>
    %c1_561 = arith.constant 1 : index
    %c0_562 = arith.constant 0 : index
    %858 = vector.load %arg8[%c1_561, %c0_562] : memref<16x16xf32, #tpu.memory_space<vmem>>, vector<1x16xf32>
    %859 = vector.shape_cast %858 : vector<1x16xf32> to vector<16xf32>
    %860 = vector.shape_cast %857 : vector<16xf32> to vector<1x16xf32>
    tpu.vector_store %arg8[%c1_561, %c0_562], %860 {strides = array<i32>} : memref<16x16xf32, #tpu.memory_space<vmem>>, vector<1x16xf32>,
    %861 = arith.maximumf %854, %856 : vector<16xf32>
    %c3_563 = arith.constant 3 : index
    %c0_564 = arith.constant 0 : index
    %862 = vector.load %arg8[%c3_563, %c0_564] : memref<16x16xf32, #tpu.memory_space<vmem>>, vector<1x16xf32>
    %863 = vector.shape_cast %862 : vector<1x16xf32> to vector<16xf32>
    %864 = vector.shape_cast %861 : vector<16xf32> to vector<1x16xf32>
    tpu.vector_store %arg8[%c3_563, %c0_564], %864 {strides = array<i32>} : memref<16x16xf32, #tpu.memory_space<vmem>>, vector<1x16xf32>,
    %c5_565 = arith.constant 5 : index
    %c0_566 = arith.constant 0 : index
    %865 = vector.load %arg8[%c5_565, %c0_566] : memref<16x16xf32, #tpu.memory_space<vmem>>, vector<1x16xf32>
    %866 = vector.shape_cast %865 : vector<1x16xf32> to vector<16xf32>
    %c7_567 = arith.constant 7 : index
    %c0_568 = arith.constant 0 : index
    %867 = vector.load %arg8[%c7_567, %c0_568] : memref<16x16xf32, #tpu.memory_space<vmem>>, vector<1x16xf32>
    %868 = vector.shape_cast %867 : vector<1x16xf32> to vector<16xf32>
    %869 = arith.minimumf %866, %868 : vector<16xf32>
    %c5_569 = arith.constant 5 : index
    %c0_570 = arith.constant 0 : index
    %870 = vector.load %arg8[%c5_569, %c0_570] : memref<16x16xf32, #tpu.memory_space<vmem>>, vector<1x16xf32>
    %871 = vector.shape_cast %870 : vector<1x16xf32> to vector<16xf32>
    %872 = vector.shape_cast %869 : vector<16xf32> to vector<1x16xf32>
    tpu.vector_store %arg8[%c5_569, %c0_570], %872 {strides = array<i32>} : memref<16x16xf32, #tpu.memory_space<vmem>>, vector<1x16xf32>,
    %873 = arith.maximumf %866, %868 : vector<16xf32>
    %c7_571 = arith.constant 7 : index
    %c0_572 = arith.constant 0 : index
    %874 = vector.load %arg8[%c7_571, %c0_572] : memref<16x16xf32, #tpu.memory_space<vmem>>, vector<1x16xf32>
    %875 = vector.shape_cast %874 : vector<1x16xf32> to vector<16xf32>
    %876 = vector.shape_cast %873 : vector<16xf32> to vector<1x16xf32>
    tpu.vector_store %arg8[%c7_571, %c0_572], %876 {strides = array<i32>} : memref<16x16xf32, #tpu.memory_space<vmem>>, vector<1x16xf32>,
    %c9_573 = arith.constant 9 : index
    %c0_574 = arith.constant 0 : index
    %877 = vector.load %arg8[%c9_573, %c0_574] : memref<16x16xf32, #tpu.memory_space<vmem>>, vector<1x16xf32>
    %878 = vector.shape_cast %877 : vector<1x16xf32> to vector<16xf32>
    %c11_575 = arith.constant 11 : index
    %c0_576 = arith.constant 0 : index
    %879 = vector.load %arg8[%c11_575, %c0_576] : memref<16x16xf32, #tpu.memory_space<vmem>>, vector<1x16xf32>
    %880 = vector.shape_cast %879 : vector<1x16xf32> to vector<16xf32>
    %881 = arith.minimumf %878, %880 : vector<16xf32>
    %c9_577 = arith.constant 9 : index
    %c0_578 = arith.constant 0 : index
    %882 = vector.load %arg8[%c9_577, %c0_578] : memref<16x16xf32, #tpu.memory_space<vmem>>, vector<1x16xf32>
    %883 = vector.shape_cast %882 : vector<1x16xf32> to vector<16xf32>
    %884 = vector.shape_cast %881 : vector<16xf32> to vector<1x16xf32>
    tpu.vector_store %arg8[%c9_577, %c0_578], %884 {strides = array<i32>} : memref<16x16xf32, #tpu.memory_space<vmem>>, vector<1x16xf32>,
    %885 = arith.maximumf %878, %880 : vector<16xf32>
    %c11_579 = arith.constant 11 : index
    %c0_580 = arith.constant 0 : index
    %886 = vector.load %arg8[%c11_579, %c0_580] : memref<16x16xf32, #tpu.memory_space<vmem>>, vector<1x16xf32>
    %887 = vector.shape_cast %886 : vector<1x16xf32> to vector<16xf32>
    %888 = vector.shape_cast %885 : vector<16xf32> to vector<1x16xf32>
    tpu.vector_store %arg8[%c11_579, %c0_580], %888 {strides = array<i32>} : memref<16x16xf32, #tpu.memory_space<vmem>>, vector<1x16xf32>,
    %c13_581 = arith.constant 13 : index
    %c0_582 = arith.constant 0 : index
    %889 = vector.load %arg8[%c13_581, %c0_582] : memref<16x16xf32, #tpu.memory_space<vmem>>, vector<1x16xf32>
    %890 = vector.shape_cast %889 : vector<1x16xf32> to vector<16xf32>
    %c15_583 = arith.constant 15 : index
    %c0_584 = arith.constant 0 : index
    %891 = vector.load %arg8[%c15_583, %c0_584] : memref<16x16xf32, #tpu.memory_space<vmem>>, vector<1x16xf32>
    %892 = vector.shape_cast %891 : vector<1x16xf32> to vector<16xf32>
    %893 = arith.minimumf %890, %892 : vector<16xf32>
    %c13_585 = arith.constant 13 : index
    %c0_586 = arith.constant 0 : index
    %894 = vector.load %arg8[%c13_585, %c0_586] : memref<16x16xf32, #tpu.memory_space<vmem>>, vector<1x16xf32>
    %895 = vector.shape_cast %894 : vector<1x16xf32> to vector<16xf32>
    %896 = vector.shape_cast %893 : vector<16xf32> to vector<1x16xf32>
    tpu.vector_store %arg8[%c13_585, %c0_586], %896 {strides = array<i32>} : memref<16x16xf32, #tpu.memory_space<vmem>>, vector<1x16xf32>,
    %897 = arith.maximumf %890, %892 : vector<16xf32>
    %c15_587 = arith.constant 15 : index
    %c0_588 = arith.constant 0 : index
    %898 = vector.load %arg8[%c15_587, %c0_588] : memref<16x16xf32, #tpu.memory_space<vmem>>, vector<1x16xf32>
    %899 = vector.shape_cast %898 : vector<1x16xf32> to vector<16xf32>
    %900 = vector.shape_cast %897 : vector<16xf32> to vector<1x16xf32>
    tpu.vector_store %arg8[%c15_587, %c0_588], %900 {strides = array<i32>} : memref<16x16xf32, #tpu.memory_space<vmem>>, vector<1x16xf32>,
    %c3_589 = arith.constant 3 : index
    %c0_590 = arith.constant 0 : index
    %901 = vector.load %arg8[%c3_589, %c0_590] : memref<16x16xf32, #tpu.memory_space<vmem>>, vector<1x16xf32>
    %902 = vector.shape_cast %901 : vector<1x16xf32> to vector<16xf32>
    %c5_591 = arith.constant 5 : index
    %c0_592 = arith.constant 0 : index
    %903 = vector.load %arg8[%c5_591, %c0_592] : memref<16x16xf32, #tpu.memory_space<vmem>>, vector<1x16xf32>
    %904 = vector.shape_cast %903 : vector<1x16xf32> to vector<16xf32>
    %905 = arith.minimumf %902, %904 : vector<16xf32>
    %c3_593 = arith.constant 3 : index
    %c0_594 = arith.constant 0 : index
    %906 = vector.load %arg8[%c3_593, %c0_594] : memref<16x16xf32, #tpu.memory_space<vmem>>, vector<1x16xf32>
    %907 = vector.shape_cast %906 : vector<1x16xf32> to vector<16xf32>
    %908 = vector.shape_cast %905 : vector<16xf32> to vector<1x16xf32>
    tpu.vector_store %arg8[%c3_593, %c0_594], %908 {strides = array<i32>} : memref<16x16xf32, #tpu.memory_space<vmem>>, vector<1x16xf32>,
    %909 = arith.maximumf %902, %904 : vector<16xf32>
    %c5_595 = arith.constant 5 : index
    %c0_596 = arith.constant 0 : index
    %910 = vector.load %arg8[%c5_595, %c0_596] : memref<16x16xf32, #tpu.memory_space<vmem>>, vector<1x16xf32>
    %911 = vector.shape_cast %910 : vector<1x16xf32> to vector<16xf32>
    %912 = vector.shape_cast %909 : vector<16xf32> to vector<1x16xf32>
    tpu.vector_store %arg8[%c5_595, %c0_596], %912 {strides = array<i32>} : memref<16x16xf32, #tpu.memory_space<vmem>>, vector<1x16xf32>,
    %c7_597 = arith.constant 7 : index
    %c0_598 = arith.constant 0 : index
    %913 = vector.load %arg8[%c7_597, %c0_598] : memref<16x16xf32, #tpu.memory_space<vmem>>, vector<1x16xf32>
    %914 = vector.shape_cast %913 : vector<1x16xf32> to vector<16xf32>
    %c9_599 = arith.constant 9 : index
    %c0_600 = arith.constant 0 : index
    %915 = vector.load %arg8[%c9_599, %c0_600] : memref<16x16xf32, #tpu.memory_space<vmem>>, vector<1x16xf32>
    %916 = vector.shape_cast %915 : vector<1x16xf32> to vector<16xf32>
    %917 = arith.minimumf %914, %916 : vector<16xf32>
    %c7_601 = arith.constant 7 : index
    %c0_602 = arith.constant 0 : index
    %918 = vector.load %arg8[%c7_601, %c0_602] : memref<16x16xf32, #tpu.memory_space<vmem>>, vector<1x16xf32>
    %919 = vector.shape_cast %918 : vector<1x16xf32> to vector<16xf32>
    %920 = vector.shape_cast %917 : vector<16xf32> to vector<1x16xf32>
    tpu.vector_store %arg8[%c7_601, %c0_602], %920 {strides = array<i32>} : memref<16x16xf32, #tpu.memory_space<vmem>>, vector<1x16xf32>,
    %921 = arith.maximumf %914, %916 : vector<16xf32>
    %c9_603 = arith.constant 9 : index
    %c0_604 = arith.constant 0 : index
    %922 = vector.load %arg8[%c9_603, %c0_604] : memref<16x16xf32, #tpu.memory_space<vmem>>, vector<1x16xf32>
    %923 = vector.shape_cast %922 : vector<1x16xf32> to vector<16xf32>
    %924 = vector.shape_cast %921 : vector<16xf32> to vector<1x16xf32>
    tpu.vector_store %arg8[%c9_603, %c0_604], %924 {strides = array<i32>} : memref<16x16xf32, #tpu.memory_space<vmem>>, vector<1x16xf32>,
    %c11_605 = arith.constant 11 : index
    %c0_606 = arith.constant 0 : index
    %925 = vector.load %arg8[%c11_605, %c0_606] : memref<16x16xf32, #tpu.memory_space<vmem>>, vector<1x16xf32>
    %926 = vector.shape_cast %925 : vector<1x16xf32> to vector<16xf32>
    %c13_607 = arith.constant 13 : index
    %c0_608 = arith.constant 0 : index
    %927 = vector.load %arg8[%c13_607, %c0_608] : memref<16x16xf32, #tpu.memory_space<vmem>>, vector<1x16xf32>
    %928 = vector.shape_cast %927 : vector<1x16xf32> to vector<16xf32>
    %929 = arith.minimumf %926, %928 : vector<16xf32>
    %c11_609 = arith.constant 11 : index
    %c0_610 = arith.constant 0 : index
    %930 = vector.load %arg8[%c11_609, %c0_610] : memref<16x16xf32, #tpu.memory_space<vmem>>, vector<1x16xf32>
    %931 = vector.shape_cast %930 : vector<1x16xf32> to vector<16xf32>
    %932 = vector.shape_cast %929 : vector<16xf32> to vector<1x16xf32>
    tpu.vector_store %arg8[%c11_609, %c0_610], %932 {strides = array<i32>} : memref<16x16xf32, #tpu.memory_space<vmem>>, vector<1x16xf32>,
    %933 = arith.maximumf %926, %928 : vector<16xf32>
    %c13_611 = arith.constant 13 : index
    %c0_612 = arith.constant 0 : index
    %934 = vector.load %arg8[%c13_611, %c0_612] : memref<16x16xf32, #tpu.memory_space<vmem>>, vector<1x16xf32>
    %935 = vector.shape_cast %934 : vector<1x16xf32> to vector<16xf32>
    %936 = vector.shape_cast %933 : vector<16xf32> to vector<1x16xf32>
    tpu.vector_store %arg8[%c13_611, %c0_612], %936 {strides = array<i32>} : memref<16x16xf32, #tpu.memory_space<vmem>>, vector<1x16xf32>,
    %c1_613 = arith.constant 1 : index
    %c0_614 = arith.constant 0 : index
    %937 = vector.load %arg8[%c1_613, %c0_614] : memref<16x16xf32, #tpu.memory_space<vmem>>, vector<1x16xf32>
    %938 = vector.shape_cast %937 : vector<1x16xf32> to vector<16xf32>
    %c3_615 = arith.constant 3 : index
    %c0_616 = arith.constant 0 : index
    %939 = vector.load %arg8[%c3_615, %c0_616] : memref<16x16xf32, #tpu.memory_space<vmem>>, vector<1x16xf32>
    %940 = vector.shape_cast %939 : vector<1x16xf32> to vector<16xf32>
    %941 = arith.minimumf %938, %940 : vector<16xf32>
    %c1_617 = arith.constant 1 : index
    %c0_618 = arith.constant 0 : index
    %942 = vector.load %arg8[%c1_617, %c0_618] : memref<16x16xf32, #tpu.memory_space<vmem>>, vector<1x16xf32>
    %943 = vector.shape_cast %942 : vector<1x16xf32> to vector<16xf32>
    %944 = vector.shape_cast %941 : vector<16xf32> to vector<1x16xf32>
    tpu.vector_store %arg8[%c1_617, %c0_618], %944 {strides = array<i32>} : memref<16x16xf32, #tpu.memory_space<vmem>>, vector<1x16xf32>,
    %945 = arith.maximumf %938, %940 : vector<16xf32>
    %c3_619 = arith.constant 3 : index
    %c0_620 = arith.constant 0 : index
    %946 = vector.load %arg8[%c3_619, %c0_620] : memref<16x16xf32, #tpu.memory_space<vmem>>, vector<1x16xf32>
    %947 = vector.shape_cast %946 : vector<1x16xf32> to vector<16xf32>
    %948 = vector.shape_cast %945 : vector<16xf32> to vector<1x16xf32>
    tpu.vector_store %arg8[%c3_619, %c0_620], %948 {strides = array<i32>} : memref<16x16xf32, #tpu.memory_space<vmem>>, vector<1x16xf32>,
    %c5_621 = arith.constant 5 : index
    %c0_622 = arith.constant 0 : index
    %949 = vector.load %arg8[%c5_621, %c0_622] : memref<16x16xf32, #tpu.memory_space<vmem>>, vector<1x16xf32>
    %950 = vector.shape_cast %949 : vector<1x16xf32> to vector<16xf32>
    %c7_623 = arith.constant 7 : index
    %c0_624 = arith.constant 0 : index
    %951 = vector.load %arg8[%c7_623, %c0_624] : memref<16x16xf32, #tpu.memory_space<vmem>>, vector<1x16xf32>
    %952 = vector.shape_cast %951 : vector<1x16xf32> to vector<16xf32>
    %953 = arith.minimumf %950, %952 : vector<16xf32>
    %c5_625 = arith.constant 5 : index
    %c0_626 = arith.constant 0 : index
    %954 = vector.load %arg8[%c5_625, %c0_626] : memref<16x16xf32, #tpu.memory_space<vmem>>, vector<1x16xf32>
    %955 = vector.shape_cast %954 : vector<1x16xf32> to vector<16xf32>
    %956 = vector.shape_cast %953 : vector<16xf32> to vector<1x16xf32>
    tpu.vector_store %arg8[%c5_625, %c0_626], %956 {strides = array<i32>} : memref<16x16xf32, #tpu.memory_space<vmem>>, vector<1x16xf32>,
    %957 = arith.maximumf %950, %952 : vector<16xf32>
    %c7_627 = arith.constant 7 : index
    %c0_628 = arith.constant 0 : index
    %958 = vector.load %arg8[%c7_627, %c0_628] : memref<16x16xf32, #tpu.memory_space<vmem>>, vector<1x16xf32>
    %959 = vector.shape_cast %958 : vector<1x16xf32> to vector<16xf32>
    %960 = vector.shape_cast %957 : vector<16xf32> to vector<1x16xf32>
    tpu.vector_store %arg8[%c7_627, %c0_628], %960 {strides = array<i32>} : memref<16x16xf32, #tpu.memory_space<vmem>>, vector<1x16xf32>,
    %c9_629 = arith.constant 9 : index
    %c0_630 = arith.constant 0 : index
    %961 = vector.load %arg8[%c9_629, %c0_630] : memref<16x16xf32, #tpu.memory_space<vmem>>, vector<1x16xf32>
    %962 = vector.shape_cast %961 : vector<1x16xf32> to vector<16xf32>
    %c11_631 = arith.constant 11 : index
    %c0_632 = arith.constant 0 : index
    %963 = vector.load %arg8[%c11_631, %c0_632] : memref<16x16xf32, #tpu.memory_space<vmem>>, vector<1x16xf32>
    %964 = vector.shape_cast %963 : vector<1x16xf32> to vector<16xf32>
    %965 = arith.minimumf %962, %964 : vector<16xf32>
    %c9_633 = arith.constant 9 : index
    %c0_634 = arith.constant 0 : index
    %966 = vector.load %arg8[%c9_633, %c0_634] : memref<16x16xf32, #tpu.memory_space<vmem>>, vector<1x16xf32>
    %967 = vector.shape_cast %966 : vector<1x16xf32> to vector<16xf32>
    %968 = vector.shape_cast %965 : vector<16xf32> to vector<1x16xf32>
    tpu.vector_store %arg8[%c9_633, %c0_634], %968 {strides = array<i32>} : memref<16x16xf32, #tpu.memory_space<vmem>>, vector<1x16xf32>,
    %969 = arith.maximumf %962, %964 : vector<16xf32>
    %c11_635 = arith.constant 11 : index
    %c0_636 = arith.constant 0 : index
    %970 = vector.load %arg8[%c11_635, %c0_636] : memref<16x16xf32, #tpu.memory_space<vmem>>, vector<1x16xf32>
    %971 = vector.shape_cast %970 : vector<1x16xf32> to vector<16xf32>
    %972 = vector.shape_cast %969 : vector<16xf32> to vector<1x16xf32>
    tpu.vector_store %arg8[%c11_635, %c0_636], %972 {strides = array<i32>} : memref<16x16xf32, #tpu.memory_space<vmem>>, vector<1x16xf32>,
    %c13_637 = arith.constant 13 : index
    %c0_638 = arith.constant 0 : index
    %973 = vector.load %arg8[%c13_637, %c0_638] : memref<16x16xf32, #tpu.memory_space<vmem>>, vector<1x16xf32>
    %974 = vector.shape_cast %973 : vector<1x16xf32> to vector<16xf32>
    %c15_639 = arith.constant 15 : index
    %c0_640 = arith.constant 0 : index
    %975 = vector.load %arg8[%c15_639, %c0_640] : memref<16x16xf32, #tpu.memory_space<vmem>>, vector<1x16xf32>
    %976 = vector.shape_cast %975 : vector<1x16xf32> to vector<16xf32>
    %977 = arith.minimumf %974, %976 : vector<16xf32>
    %c13_641 = arith.constant 13 : index
    %c0_642 = arith.constant 0 : index
    %978 = vector.load %arg8[%c13_641, %c0_642] : memref<16x16xf32, #tpu.memory_space<vmem>>, vector<1x16xf32>
    %979 = vector.shape_cast %978 : vector<1x16xf32> to vector<16xf32>
    %980 = vector.shape_cast %977 : vector<16xf32> to vector<1x16xf32>
    tpu.vector_store %arg8[%c13_641, %c0_642], %980 {strides = array<i32>} : memref<16x16xf32, #tpu.memory_space<vmem>>, vector<1x16xf32>,
    %981 = arith.maximumf %974, %976 : vector<16xf32>
    %c15_643 = arith.constant 15 : index
    %c0_644 = arith.constant 0 : index
    %982 = vector.load %arg8[%c15_643, %c0_644] : memref<16x16xf32, #tpu.memory_space<vmem>>, vector<1x16xf32>
    %983 = vector.shape_cast %982 : vector<1x16xf32> to vector<16xf32>
    %984 = vector.shape_cast %981 : vector<16xf32> to vector<1x16xf32>
    tpu.vector_store %arg8[%c15_643, %c0_644], %984 {strides = array<i32>} : memref<16x16xf32, #tpu.memory_space<vmem>>, vector<1x16xf32>,
    %c3_645 = arith.constant 3 : index
    %c0_646 = arith.constant 0 : index
    %985 = vector.load %arg8[%c3_645, %c0_646] : memref<16x16xf32, #tpu.memory_space<vmem>>, vector<1x16xf32>
    %986 = vector.shape_cast %985 : vector<1x16xf32> to vector<16xf32>
    %c5_647 = arith.constant 5 : index
    %c0_648 = arith.constant 0 : index
    %987 = vector.load %arg8[%c5_647, %c0_648] : memref<16x16xf32, #tpu.memory_space<vmem>>, vector<1x16xf32>
    %988 = vector.shape_cast %987 : vector<1x16xf32> to vector<16xf32>
    %989 = arith.minimumf %986, %988 : vector<16xf32>
    %c3_649 = arith.constant 3 : index
    %c0_650 = arith.constant 0 : index
    %990 = vector.load %arg8[%c3_649, %c0_650] : memref<16x16xf32, #tpu.memory_space<vmem>>, vector<1x16xf32>
    %991 = vector.shape_cast %990 : vector<1x16xf32> to vector<16xf32>
    %992 = vector.shape_cast %989 : vector<16xf32> to vector<1x16xf32>
    tpu.vector_store %arg8[%c3_649, %c0_650], %992 {strides = array<i32>} : memref<16x16xf32, #tpu.memory_space<vmem>>, vector<1x16xf32>,
    %993 = arith.maximumf %986, %988 : vector<16xf32>
    %c5_651 = arith.constant 5 : index
    %c0_652 = arith.constant 0 : index
    %994 = vector.load %arg8[%c5_651, %c0_652] : memref<16x16xf32, #tpu.memory_space<vmem>>, vector<1x16xf32>
    %995 = vector.shape_cast %994 : vector<1x16xf32> to vector<16xf32>
    %996 = vector.shape_cast %993 : vector<16xf32> to vector<1x16xf32>
    tpu.vector_store %arg8[%c5_651, %c0_652], %996 {strides = array<i32>} : memref<16x16xf32, #tpu.memory_space<vmem>>, vector<1x16xf32>,
    %c7_653 = arith.constant 7 : index
    %c0_654 = arith.constant 0 : index
    %997 = vector.load %arg8[%c7_653, %c0_654] : memref<16x16xf32, #tpu.memory_space<vmem>>, vector<1x16xf32>
    %998 = vector.shape_cast %997 : vector<1x16xf32> to vector<16xf32>
    %c9_655 = arith.constant 9 : index
    %c0_656 = arith.constant 0 : index
    %999 = vector.load %arg8[%c9_655, %c0_656] : memref<16x16xf32, #tpu.memory_space<vmem>>, vector<1x16xf32>
    %1000 = vector.shape_cast %999 : vector<1x16xf32> to vector<16xf32>
    %1001 = arith.minimumf %998, %1000 : vector<16xf32>
    %c7_657 = arith.constant 7 : index
    %c0_658 = arith.constant 0 : index
    %1002 = vector.load %arg8[%c7_657, %c0_658] : memref<16x16xf32, #tpu.memory_space<vmem>>, vector<1x16xf32>
    %1003 = vector.shape_cast %1002 : vector<1x16xf32> to vector<16xf32>
    %1004 = vector.shape_cast %1001 : vector<16xf32> to vector<1x16xf32>
    tpu.vector_store %arg8[%c7_657, %c0_658], %1004 {strides = array<i32>} : memref<16x16xf32, #tpu.memory_space<vmem>>, vector<1x16xf32>,
    %1005 = arith.maximumf %998, %1000 : vector<16xf32>
    %c9_659 = arith.constant 9 : index
    %c0_660 = arith.constant 0 : index
    %1006 = vector.load %arg8[%c9_659, %c0_660] : memref<16x16xf32, #tpu.memory_space<vmem>>, vector<1x16xf32>
    %1007 = vector.shape_cast %1006 : vector<1x16xf32> to vector<16xf32>
    %1008 = vector.shape_cast %1005 : vector<16xf32> to vector<1x16xf32>
    tpu.vector_store %arg8[%c9_659, %c0_660], %1008 {strides = array<i32>} : memref<16x16xf32, #tpu.memory_space<vmem>>, vector<1x16xf32>,
    %c11_661 = arith.constant 11 : index
    %c0_662 = arith.constant 0 : index
    %1009 = vector.load %arg8[%c11_661, %c0_662] : memref<16x16xf32, #tpu.memory_space<vmem>>, vector<1x16xf32>
    %1010 = vector.shape_cast %1009 : vector<1x16xf32> to vector<16xf32>
    %c13_663 = arith.constant 13 : index
    %c0_664 = arith.constant 0 : index
    %1011 = vector.load %arg8[%c13_663, %c0_664] : memref<16x16xf32, #tpu.memory_space<vmem>>, vector<1x16xf32>
    %1012 = vector.shape_cast %1011 : vector<1x16xf32> to vector<16xf32>
    %1013 = arith.minimumf %1010, %1012 : vector<16xf32>
    %c11_665 = arith.constant 11 : index
    %c0_666 = arith.constant 0 : index
    %1014 = vector.load %arg8[%c11_665, %c0_666] : memref<16x16xf32, #tpu.memory_space<vmem>>, vector<1x16xf32>
    %1015 = vector.shape_cast %1014 : vector<1x16xf32> to vector<16xf32>
    %1016 = vector.shape_cast %1013 : vector<16xf32> to vector<1x16xf32>
    tpu.vector_store %arg8[%c11_665, %c0_666], %1016 {strides = array<i32>} : memref<16x16xf32, #tpu.memory_space<vmem>>, vector<1x16xf32>,
    %1017 = arith.maximumf %1010, %1012 : vector<16xf32>
    %c13_667 = arith.constant 13 : index
    %c0_668 = arith.constant 0 : index
    %1018 = vector.load %arg8[%c13_667, %c0_668] : memref<16x16xf32, #tpu.memory_space<vmem>>, vector<1x16xf32>
    %1019 = vector.shape_cast %1018 : vector<1x16xf32> to vector<16xf32>
    %1020 = vector.shape_cast %1017 : vector<16xf32> to vector<1x16xf32>
    tpu.vector_store %arg8[%c13_667, %c0_668], %1020 {strides = array<i32>} : memref<16x16xf32, #tpu.memory_space<vmem>>, vector<1x16xf32>,
    %c0_669 = arith.constant 0 : index
    %c0_670 = arith.constant 0 : index
    %1021 = vector.load %arg8[%c0_669, %c0_670] : memref<16x16xf32, #tpu.memory_space<vmem>>, vector<2x16xf32>
    %c0_671 = arith.constant 0 : index
    %c0_672 = arith.constant 0 : index
    %c0_673 = arith.constant 0 : index
    %1022 = vector.load %arg2[%c0_671, %c0_672, %c0_673] : memref<8x16x32xf32, #tpu.memory_space<vmem>>, vector<1x16x32xf32>
    %1023 = vector.shape_cast %1022 : vector<1x16x32xf32> to vector<16x32xf32>
    %cst_674 = arith.constant dense<0.000000e+00> : vector<2x32xf32>
    %1024 = tpu.matmul %1021, %1023, %cst_674 {dimension_numbers = #tpu.dot_dimension_numbers<[1], [0], [0], [1], [0, 0, 1, 1], [], []>} : vector<2x16xf32>, vector<16x32xf32>, vector<2x32xf32> -> vector<2x32xf32>
    %c2_675 = arith.constant 2 : index
    %c0_676 = arith.constant 0 : index
    %1025 = vector.load %arg8[%c2_675, %c0_676] : memref<16x16xf32, #tpu.memory_space<vmem>>, vector<2x16xf32>
    %c1_677 = arith.constant 1 : index
    %c0_678 = arith.constant 0 : index
    %c0_679 = arith.constant 0 : index
    %1026 = vector.load %arg2[%c1_677, %c0_678, %c0_679] : memref<8x16x32xf32, #tpu.memory_space<vmem>>, vector<1x16x32xf32>
    %1027 = vector.shape_cast %1026 : vector<1x16x32xf32> to vector<16x32xf32>
    %cst_680 = arith.constant dense<0.000000e+00> : vector<2x32xf32>
    %1028 = tpu.matmul %1025, %1027, %cst_680 {dimension_numbers = #tpu.dot_dimension_numbers<[1], [0], [0], [1], [0, 0, 1, 1], [], []>} : vector<2x16xf32>, vector<16x32xf32>, vector<2x32xf32> -> vector<2x32xf32>
    %1029 = arith.addf %1024, %1028 : vector<2x32xf32>
    %c4_681 = arith.constant 4 : index
    %c0_682 = arith.constant 0 : index
    %1030 = vector.load %arg8[%c4_681, %c0_682] : memref<16x16xf32, #tpu.memory_space<vmem>>, vector<2x16xf32>
    %c2_683 = arith.constant 2 : index
    %c0_684 = arith.constant 0 : index
    %c0_685 = arith.constant 0 : index
    %1031 = vector.load %arg2[%c2_683, %c0_684, %c0_685] : memref<8x16x32xf32, #tpu.memory_space<vmem>>, vector<1x16x32xf32>
    %1032 = vector.shape_cast %1031 : vector<1x16x32xf32> to vector<16x32xf32>
    %cst_686 = arith.constant dense<0.000000e+00> : vector<2x32xf32>
    %1033 = tpu.matmul %1030, %1032, %cst_686 {dimension_numbers = #tpu.dot_dimension_numbers<[1], [0], [0], [1], [0, 0, 1, 1], [], []>} : vector<2x16xf32>, vector<16x32xf32>, vector<2x32xf32> -> vector<2x32xf32>
    %1034 = arith.addf %1029, %1033 : vector<2x32xf32>
    %c6_687 = arith.constant 6 : index
    %c0_688 = arith.constant 0 : index
    %1035 = vector.load %arg8[%c6_687, %c0_688] : memref<16x16xf32, #tpu.memory_space<vmem>>, vector<2x16xf32>
    %c3_689 = arith.constant 3 : index
    %c0_690 = arith.constant 0 : index
    %c0_691 = arith.constant 0 : index
    %1036 = vector.load %arg2[%c3_689, %c0_690, %c0_691] : memref<8x16x32xf32, #tpu.memory_space<vmem>>, vector<1x16x32xf32>
    %1037 = vector.shape_cast %1036 : vector<1x16x32xf32> to vector<16x32xf32>
    %cst_692 = arith.constant dense<0.000000e+00> : vector<2x32xf32>
    %1038 = tpu.matmul %1035, %1037, %cst_692 {dimension_numbers = #tpu.dot_dimension_numbers<[1], [0], [0], [1], [0, 0, 1, 1], [], []>} : vector<2x16xf32>, vector<16x32xf32>, vector<2x32xf32> -> vector<2x32xf32>
    %1039 = arith.addf %1034, %1038 : vector<2x32xf32>
    %c8_693 = arith.constant 8 : index
    %c0_694 = arith.constant 0 : index
    %1040 = vector.load %arg8[%c8_693, %c0_694] : memref<16x16xf32, #tpu.memory_space<vmem>>, vector<2x16xf32>
    %c4_695 = arith.constant 4 : index
    %c0_696 = arith.constant 0 : index
    %c0_697 = arith.constant 0 : index
    %1041 = vector.load %arg2[%c4_695, %c0_696, %c0_697] : memref<8x16x32xf32, #tpu.memory_space<vmem>>, vector<1x16x32xf32>
    %1042 = vector.shape_cast %1041 : vector<1x16x32xf32> to vector<16x32xf32>
    %cst_698 = arith.constant dense<0.000000e+00> : vector<2x32xf32>
    %1043 = tpu.matmul %1040, %1042, %cst_698 {dimension_numbers = #tpu.dot_dimension_numbers<[1], [0], [0], [1], [0, 0, 1, 1], [], []>} : vector<2x16xf32>, vector<16x32xf32>, vector<2x32xf32> -> vector<2x32xf32>
    %1044 = arith.addf %1039, %1043 : vector<2x32xf32>
    %c10_699 = arith.constant 10 : index
    %c0_700 = arith.constant 0 : index
    %1045 = vector.load %arg8[%c10_699, %c0_700] : memref<16x16xf32, #tpu.memory_space<vmem>>, vector<2x16xf32>
    %c5_701 = arith.constant 5 : index
    %c0_702 = arith.constant 0 : index
    %c0_703 = arith.constant 0 : index
    %1046 = vector.load %arg2[%c5_701, %c0_702, %c0_703] : memref<8x16x32xf32, #tpu.memory_space<vmem>>, vector<1x16x32xf32>
    %1047 = vector.shape_cast %1046 : vector<1x16x32xf32> to vector<16x32xf32>
    %cst_704 = arith.constant dense<0.000000e+00> : vector<2x32xf32>
    %1048 = tpu.matmul %1045, %1047, %cst_704 {dimension_numbers = #tpu.dot_dimension_numbers<[1], [0], [0], [1], [0, 0, 1, 1], [], []>} : vector<2x16xf32>, vector<16x32xf32>, vector<2x32xf32> -> vector<2x32xf32>
    %1049 = arith.addf %1044, %1048 : vector<2x32xf32>
    %c12_705 = arith.constant 12 : index
    %c0_706 = arith.constant 0 : index
    %1050 = vector.load %arg8[%c12_705, %c0_706] : memref<16x16xf32, #tpu.memory_space<vmem>>, vector<2x16xf32>
    %c6_707 = arith.constant 6 : index
    %c0_708 = arith.constant 0 : index
    %c0_709 = arith.constant 0 : index
    %1051 = vector.load %arg2[%c6_707, %c0_708, %c0_709] : memref<8x16x32xf32, #tpu.memory_space<vmem>>, vector<1x16x32xf32>
    %1052 = vector.shape_cast %1051 : vector<1x16x32xf32> to vector<16x32xf32>
    %cst_710 = arith.constant dense<0.000000e+00> : vector<2x32xf32>
    %1053 = tpu.matmul %1050, %1052, %cst_710 {dimension_numbers = #tpu.dot_dimension_numbers<[1], [0], [0], [1], [0, 0, 1, 1], [], []>} : vector<2x16xf32>, vector<16x32xf32>, vector<2x32xf32> -> vector<2x32xf32>
    %1054 = arith.addf %1049, %1053 : vector<2x32xf32>
    %c14_711 = arith.constant 14 : index
    %c0_712 = arith.constant 0 : index
    %1055 = vector.load %arg8[%c14_711, %c0_712] : memref<16x16xf32, #tpu.memory_space<vmem>>, vector<2x16xf32>
    %c7_713 = arith.constant 7 : index
    %c0_714 = arith.constant 0 : index
    %c0_715 = arith.constant 0 : index
    %1056 = vector.load %arg2[%c7_713, %c0_714, %c0_715] : memref<8x16x32xf32, #tpu.memory_space<vmem>>, vector<1x16x32xf32>
    %1057 = vector.shape_cast %1056 : vector<1x16x32xf32> to vector<16x32xf32>
    %cst_716 = arith.constant dense<0.000000e+00> : vector<2x32xf32>
    %1058 = tpu.matmul %1055, %1057, %cst_716 {dimension_numbers = #tpu.dot_dimension_numbers<[1], [0], [0], [1], [0, 0, 1, 1], [], []>} : vector<2x16xf32>, vector<16x32xf32>, vector<2x32xf32> -> vector<2x32xf32>
    %1059 = arith.addf %1054, %1058 : vector<2x32xf32>
    %c0_717 = arith.constant 0 : index
    %c0_718 = arith.constant 0 : index
    %1060 = vector.load %arg3[%c0_717, %c0_718] : memref<1x32xf32, #tpu.memory_space<vmem>>, vector<1x32xf32>
    %1061 = vector.broadcast %1060 : vector<1x32xf32> to vector<2x32xf32>
    %1062 = arith.addf %1059, %1061 : vector<2x32xf32>
    %cst_719 = arith.constant 0.000000e+00 : f32
    %1063 = vector.broadcast %cst_719 : f32 to vector<2x32xf32>
    %1064 = arith.maximumf %1062, %1063 : vector<2x32xf32>
    %c0_720 = arith.constant 0 : index
    %c0_721 = arith.constant 0 : index
    %1065 = vector.load %arg4[%c0_720, %c0_721] : memref<32x128xf32, #tpu.memory_space<vmem>>, vector<32x128xf32>
    %cst_722 = arith.constant dense<0.000000e+00> : vector<2x128xf32>
    %1066 = tpu.matmul %1064, %1065, %cst_722 {dimension_numbers = #tpu.dot_dimension_numbers<[1], [0], [0], [1], [0, 0, 1, 1], [], []>} : vector<2x32xf32>, vector<32x128xf32>, vector<2x128xf32> -> vector<2x128xf32>
    %c0_723 = arith.constant 0 : index
    %c0_724 = arith.constant 0 : index
    %1067 = vector.load %arg5[%c0_723, %c0_724] : memref<1x128xf32, #tpu.memory_space<vmem>>, vector<1x128xf32>
    %1068 = vector.broadcast %1067 : vector<1x128xf32> to vector<2x128xf32>
    %1069 = arith.addf %1066, %1068 : vector<2x128xf32>
    %1070 = math.tanh %1069 : vector<2x128xf32>
    %cst_725 = arith.constant 2.000000e+00 : f32
    %1071 = vector.broadcast %cst_725 : f32 to vector<2x128xf32>
    %1072 = arith.mulf %1070, %1071 : vector<2x128xf32>
    %c0_726 = arith.constant 0 : index
    %c0_727 = arith.constant 0 : index
    %1073 = vector.load %arg6[%c0_726, %c0_727] : memref<2x128xf32, #tpu.memory_space<vmem>>, vector<2x128xf32>
    tpu.vector_store %arg6[%c0_726, %c0_727], %1072 {strides = array<i32>} : memref<2x128xf32, #tpu.memory_space<vmem>>, vector<2x128xf32>,
    return
  }
}

</mosaic_0001>

<llo_original>
// kernel: new_forward.1
$region0: #{new_forward.1}
  #allocation0 [shape = 'u32[]', space=smem, size = 0x4, offset = 0x4, fixed_abs, tag = 'smem constant byte address 0x4 - core index']
  #allocation1 [shape = 'u32[72,128]{1,0:T(1,128)}', space=vmem, size = 0x9000, scoped, tag = 'internal scratch']
  #allocation2 [shape = 'f32[8,16]{1,0:T(8,128)}', space=vmem, size = 0x1000, scoped, tag = 'scratch operand']
  #allocation3 [shape = 'f32[16,16]{1,0:T(8,128)}', space=vmem, size = 0x2000, scoped, tag = 'scratch operand']
  %s0 = inlined_call_operand.vmem [shape: f32[8,16], index: 0, kind: input, shape index: {}]
  %s1 = inlined_call_operand.vmem [shape: f32[16,8], index: 1, kind: input, shape index: {}]
  %s2 = inlined_call_operand.hbm [shape: f32[8,16,32], index: 2, kind: input, shape index: {}]
  %s3 = inlined_call_operand.vmem [shape: f32[1,32], index: 3, kind: input, shape index: {}]
  %s4 = inlined_call_operand.vmem [shape: f32[32,128], index: 4, kind: input, shape index: {}]
  %s5 = inlined_call_operand.vmem [shape: f32[1,128], index: 5, kind: input, shape index: {}]
  %s6 = inlined_call_operand.hbm [shape: f32[2,128], index: 6, kind: output, shape index: {}]
  %s7 = sld [smem:[#allocation0]]
  $region38: #{new_forward.1} parent=0
    _
  %s9 = ssub.s32 1, %s7
  %s10 = scalar_select 0, %s9, %s7
  $region1: #{new_forward.1} parent=0
    #allocation4 [shape = 'u8[65536]{0}', space=vmem, size = 0x10000, scoped, tag = 'input window, operand 2, single buffered']
    #allocation5 [shape = 's32[1]{0}', space=sflag, size = 0x4, scoped, tag = 'scoped memory for new_forward.1']
    #allocation6 [shape = 's32[1]{0}', space=sflag, size = 0x4, scoped, tag = 'scoped memory for new_forward.1']
    #allocation7 [shape = 'u8[1024]{0}', space=vmem, size = 0x400, scoped, tag = 'output window, operand 0, single buffered']
    %11 = vsyncpa [#allocation5], 0
    %12 = vsyncpa [#allocation6], 0
    // Predicated region
    $region2: #{new_forward.1} parent=1 // pred_check
      _
    $region3: #{new_forward.1} parent=1 // pred_check_branch
      %14 = sbr.rel (0) target = $region5
    $region4: #{new_forward.1} parent=1 // pred_region
      _
    $region5: #{new_forward.1} parent=1 // pred_fallthru
      _
    // Predicated region
    $region6: #{new_forward.1} parent=1 // pred_check
      _
    $region7: #{new_forward.1} parent=1 // pred_check_branch
      %16 = sbr.rel (0) target = $region9
    $region8: #{new_forward.1} parent=1 // pred_region
      _
    $region9: #{new_forward.1} parent=1 // pred_fallthru
      _
    // Predicated region
    $region10: #{new_forward.1} parent=1 // pred_check
      _
    $region11: #{new_forward.1} parent=1 // pred_check_branch
      %18 = sbr.rel (0) target = $region13
    $region12: #{new_forward.1} parent=1 // pred_region
      %20 = vsyncadd [#allocation5], 0
      %s21 = sshll.u32 %s2, 4
      %s22 = int_to_ptr.hbm [resolvable:$true] %s21
      %s23 = sshll.u32 [#allocation4], 4
      %s24 = int_to_ptr.vmem [resolvable:$true] %s23
      %29 = dma.hbm_to_vmem [thread:$0]  %s22, 2048, %s24, [#allocation5], 128, 128, 8
    $region13: #{new_forward.1} parent=1 // pred_fallthru
      _
    // Predicated region
    $region14: #{new_forward.1} parent=1 // pred_check
      _
    $region15: #{new_forward.1} parent=1 // pred_check_branch
      %31 = sbr.rel (0) target = $region17
    $region16: #{new_forward.1} parent=1 // pred_region
      _
    $region17: #{new_forward.1} parent=1 // pred_fallthru
      _
    // Predicated region
    $region18: #{new_forward.1} parent=1 // pred_check
      _
    $region19: #{new_forward.1} parent=1 // pred_check_branch
      %33 = sbr.rel (0) target = $region21
    $region20: #{new_forward.1} parent=1 // pred_region
      _
    $region21: #{new_forward.1} parent=1 // pred_fallthru
      _
    // Predicated region
    $region22: #{new_forward.1} parent=1 // pred_check
      _
    $region23: #{new_forward.1} parent=1 // pred_check_branch
      %35 = sbr.rel (0) target = $region25
    $region24: #{new_forward.1} parent=1 // pred_region
      _
    $region25: #{new_forward.1} parent=1 // pred_fallthru
      _
    // Predicated region
    $region26: #{new_forward.1} parent=1 // pred_check
      _
    $region27: #{new_forward.1} parent=1 // pred_check_branch
      %37 = sbr.rel (0) target = $region29
    $region28: #{new_forward.1} parent=1 // pred_region
      %39 = dma.done [#allocation5], 2048
    $region29: #{new_forward.1} parent=1 // pred_fallthru
      _
    %v40 = vld [vmem:[%s0] sm:$0xff]
    %vm41 = vcmask 130048
    %42 = vst.msk [vmem:[#allocation2] sm:$0xff] %vm41, %v40
    %v43 = vld [vmem:[#allocation2] sm:$0x1]
    %v44 = vld [vmem:[#allocation2 + $0x1] sm:$0x1]
    %v45 = vmin.f32 %v43, %v44
    %vm46 = vcmask 122880
    %47 = vst.msk [vmem:[#allocation2] sm:$0x1] %vm46, %v45
    %v48 = vmax.f32 %v43, %v44
    %49 = vst.msk [vmem:[#allocation2 + $0x1] sm:$0x1] %vm46, %v48
    %v50 = vld [vmem:[#allocation2 + $0x2] sm:$0x1]
    %v51 = vld [vmem:[#allocation2 + $0x3] sm:$0x1]
    %v52 = vmin.f32 %v50, %v51
    %53 = vst.msk [vmem:[#allocation2 + $0x2] sm:$0x1] %vm46, %v52
    %v54 = vmax.f32 %v50, %v51
    %55 = vst.msk [vmem:[#allocation2 + $0x3] sm:$0x1] %vm46, %v54
    %v56 = vld [vmem:[#allocation2 + $0x4] sm:$0x1]
    %v57 = vld [vmem:[#allocation2 + $0x5] sm:$0x1]
    %v58 = vmin.f32 %v56, %v57
    %59 = vst.msk [vmem:[#allocation2 + $0x4] sm:$0x1] %vm46, %v58
    %v60 = vmax.f32 %v56, %v57
    %61 = vst.msk [vmem:[#allocation2 + $0x5] sm:$0x1] %vm46, %v60
    %v62 = vld [vmem:[#allocation2 + $0x6] sm:$0x1]
    %v63 = vld [vmem:[#allocation2 + $0x7] sm:$0x1]
    %v64 = vmin.f32 %v62, %v63
    %65 = vst.msk [vmem:[#allocation2 + $0x6] sm:$0x1] %vm46, %v64
    %v66 = vmax.f32 %v62, %v63
    %67 = vst.msk [vmem:[#allocation2 + $0x7] sm:$0x1] %vm46, %v66
    %v68 = vld [vmem:[#allocation2 + $0x1] sm:$0x1]
    %v69 = vld [vmem:[#allocation2 + $0x2] sm:$0x1]
    %v70 = vmin.f32 %v68, %v69
    %71 = vst.msk [vmem:[#allocation2 + $0x1] sm:$0x1] %vm46, %v70
    %v72 = vmax.f32 %v68, %v69
    %73 = vst.msk [vmem:[#allocation2 + $0x2] sm:$0x1] %vm46, %v72
    %v74 = vld [vmem:[#allocation2 + $0x3] sm:$0x1]
    %v75 = vld [vmem:[#allocation2 + $0x4] sm:$0x1]
    %v76 = vmin.f32 %v74, %v75
    %77 = vst.msk [vmem:[#allocation2 + $0x3] sm:$0x1] %vm46, %v76
    %v78 = vmax.f32 %v74, %v75
    %79 = vst.msk [vmem:[#allocation2 + $0x4] sm:$0x1] %vm46, %v78
    %v80 = vld [vmem:[#allocation2 + $0x5] sm:$0x1]
    %v81 = vld [vmem:[#allocation2 + $0x6] sm:$0x1]
    %v82 = vmin.f32 %v80, %v81
    %83 = vst.msk [vmem:[#allocation2 + $0x5] sm:$0x1] %vm46, %v82
    %v84 = vmax.f32 %v80, %v81
    %85 = vst.msk [vmem:[#allocation2 + $0x6] sm:$0x1] %vm46, %v84
    %v86 = vld [vmem:[#allocation2] sm:$0x1]
    %v87 = vld [vmem:[#allocation2 + $0x1] sm:$0x1]
    %v88 = vmin.f32 %v86, %v87
    %89 = vst.msk [vmem:[#allocation2] sm:$0x1] %vm46, %v88
    %v90 = vmax.f32 %v86, %v87
    %91 = vst.msk [vmem:[#allocation2 + $0x1] sm:$0x1] %vm46, %v90
    %v92 = vld [vmem:[#allocation2 + $0x2] sm:$0x1]
    %v93 = vld [vmem:[#allocation2 + $0x3] sm:$0x1]
    %v94 = vmin.f32 %v92, %v93
    %95 = vst.msk [vmem:[#allocation2 + $0x2] sm:$0x1] %vm46, %v94
    %v96 = vmax.f32 %v92, %v93
    %97 = vst.msk [vmem:[#allocation2 + $0x3] sm:$0x1] %vm46, %v96
    %v98 = vld [vmem:[#allocation2 + $0x4] sm:$0x1]
    %v99 = vld [vmem:[#allocation2 + $0x5] sm:$0x1]
    %v100 = vmin.f32 %v98, %v99
    %101 = vst.msk [vmem:[#allocation2 + $0x4] sm:$0x1] %vm46, %v100
    %v102 = vmax.f32 %v98, %v99
    %103 = vst.msk [vmem:[#allocation2 + $0x5] sm:$0x1] %vm46, %v102
    %v104 = vld [vmem:[#allocation2 + $0x6] sm:$0x1]
    %v105 = vld [vmem:[#allocation2 + $0x7] sm:$0x1]
    %v106 = vmin.f32 %v104, %v105
    %107 = vst.msk [vmem:[#allocation2 + $0x6] sm:$0x1] %vm46, %v106
    %v108 = vmax.f32 %v104, %v105
    %109 = vst.msk [vmem:[#allocation2 + $0x7] sm:$0x1] %vm46, %v108
    %v110 = vld [vmem:[#allocation2 + $0x1] sm:$0x1]
    %v111 = vld [vmem:[#allocation2 + $0x2] sm:$0x1]
    %v112 = vmin.f32 %v110, %v111
    %113 = vst.msk [vmem:[#allocation2 + $0x1] sm:$0x1] %vm46, %v112
    %v114 = vmax.f32 %v110, %v111
    %115 = vst.msk [vmem:[#allocation2 + $0x2] sm:$0x1] %vm46, %v114
    %v116 = vld [vmem:[#allocation2 + $0x3] sm:$0x1]
    %v117 = vld [vmem:[#allocation2 + $0x4] sm:$0x1]
    %v118 = vmin.f32 %v116, %v117
    %119 = vst.msk [vmem:[#allocation2 + $0x3] sm:$0x1] %vm46, %v118
    %v120 = vmax.f32 %v116, %v117
    %121 = vst.msk [vmem:[#allocation2 + $0x4] sm:$0x1] %vm46, %v120
    %v122 = vld [vmem:[#allocation2 + $0x5] sm:$0x1]
    %v123 = vld [vmem:[#allocation2 + $0x6] sm:$0x1]
    %v124 = vmin.f32 %v122, %v123
    %125 = vst.msk [vmem:[#allocation2 + $0x5] sm:$0x1] %vm46, %v124
    %v126 = vmax.f32 %v122, %v123
    %127 = vst.msk [vmem:[#allocation2 + $0x6] sm:$0x1] %vm46, %v126
    %v128 = vld [vmem:[#allocation2] sm:$0x1]
    %v129 = vld [vmem:[#allocation2 + $0x1] sm:$0x1]
    %v130 = vmin.f32 %v128, %v129
    %131 = vst.msk [vmem:[#allocation2] sm:$0x1] %vm46, %v130
    %v132 = vmax.f32 %v128, %v129
    %133 = vst.msk [vmem:[#allocation2 + $0x1] sm:$0x1] %vm46, %v132
    %v134 = vld [vmem:[#allocation2 + $0x2] sm:$0x1]
    %v135 = vld [vmem:[#allocation2 + $0x3] sm:$0x1]
    %v136 = vmin.f32 %v134, %v135
    %137 = vst.msk [vmem:[#allocation2 + $0x2] sm:$0x1] %vm46, %v136
    %v138 = vmax.f32 %v134, %v135
    %139 = vst.msk [vmem:[#allocation2 + $0x3] sm:$0x1] %vm46, %v138
    %v140 = vld [vmem:[#allocation2 + $0x4] sm:$0x1]
    %v141 = vld [vmem:[#allocation2 + $0x5] sm:$0x1]
    %v142 = vmin.f32 %v140, %v141
    %143 = vst.msk [vmem:[#allocation2 + $0x4] sm:$0x1] %vm46, %v142
    %v144 = vmax.f32 %v140, %v141
    %145 = vst.msk [vmem:[#allocation2 + $0x5] sm:$0x1] %vm46, %v144
    %v146 = vld [vmem:[#allocation2 + $0x6] sm:$0x1]
    %v147 = vld [vmem:[#allocation2 + $0x7] sm:$0x1]
    %v148 = vmin.f32 %v146, %v147
    %149 = vst.msk [vmem:[#allocation2 + $0x6] sm:$0x1] %vm46, %v148
    %v150 = vmax.f32 %v146, %v147
    %151 = vst.msk [vmem:[#allocation2 + $0x7] sm:$0x1] %vm46, %v150
    %v152 = vld [vmem:[#allocation2 + $0x1] sm:$0x1]
    %v153 = vld [vmem:[#allocation2 + $0x2] sm:$0x1]
    %v154 = vmin.f32 %v152, %v153
    %155 = vst.msk [vmem:[#allocation2 + $0x1] sm:$0x1] %vm46, %v154
    %v156 = vmax.f32 %v152, %v153
    %157 = vst.msk [vmem:[#allocation2 + $0x2] sm:$0x1] %vm46, %v156
    %v158 = vld [vmem:[#allocation2 + $0x3] sm:$0x1]
    %v159 = vld [vmem:[#allocation2 + $0x4] sm:$0x1]
    %v160 = vmin.f32 %v158, %v159
    %161 = vst.msk [vmem:[#allocation2 + $0x3] sm:$0x1] %vm46, %v160
    %v162 = vmax.f32 %v158, %v159
    %163 = vst.msk [vmem:[#allocation2 + $0x4] sm:$0x1] %vm46, %v162
    %v164 = vld [vmem:[#allocation2 + $0x5] sm:$0x1]
    %v165 = vld [vmem:[#allocation2 + $0x6] sm:$0x1]
    %v166 = vmin.f32 %v164, %v165
    %167 = vst.msk [vmem:[#allocation2 + $0x5] sm:$0x1] %vm46, %v166
    %v168 = vmax.f32 %v164, %v165
    %169 = vst.msk [vmem:[#allocation2 + $0x6] sm:$0x1] %vm46, %v168
    %v170 = vld [vmem:[#allocation2] sm:$0x1]
    %v171 = vld [vmem:[#allocation2 + $0x1] sm:$0x1]
    %v172 = vmin.f32 %v170, %v171
    %173 = vst.msk [vmem:[#allocation2] sm:$0x1] %vm46, %v172
    %v174 = vmax.f32 %v170, %v171
    %175 = vst.msk [vmem:[#allocation2 + $0x1] sm:$0x1] %vm46, %v174
    %v176 = vld [vmem:[#allocation2 + $0x2] sm:$0x1]
    %v177 = vld [vmem:[#allocation2 + $0x3] sm:$0x1]
    %v178 = vmin.f32 %v176, %v177
    %179 = vst.msk [vmem:[#allocation2 + $0x2] sm:$0x1] %vm46, %v178
    %v180 = vmax.f32 %v176, %v177
    %181 = vst.msk [vmem:[#allocation2 + $0x3] sm:$0x1] %vm46, %v180
    %v182 = vld [vmem:[#allocation2 + $0x4] sm:$0x1]
    %v183 = vld [vmem:[#allocation2 + $0x5] sm:$0x1]
    %v184 = vmin.f32 %v182, %v183
    %185 = vst.msk [vmem:[#allocation2 + $0x4] sm:$0x1] %vm46, %v184
    %v186 = vmax.f32 %v182, %v183
    %187 = vst.msk [vmem:[#allocation2 + $0x5] sm:$0x1] %vm46, %v186
    %v188 = vld [vmem:[#allocation2 + $0x6] sm:$0x1]
    %v189 = vld [vmem:[#allocation2 + $0x7] sm:$0x1]
    %v190 = vmin.f32 %v188, %v189
    %191 = vst.msk [vmem:[#allocation2 + $0x6] sm:$0x1] %vm46, %v190
    %v192 = vmax.f32 %v188, %v189
    %193 = vst.msk [vmem:[#allocation2 + $0x7] sm:$0x1] %vm46, %v192
    %v194 = vld [vmem:[#allocation2 + $0x1] sm:$0x1]
    %v195 = vld [vmem:[#allocation2 + $0x2] sm:$0x1]
    %v196 = vmin.f32 %v194, %v195
    %197 = vst.msk [vmem:[#allocation2 + $0x1] sm:$0x1] %vm46, %v196
    %v198 = vmax.f32 %v194, %v195
    %199 = vst.msk [vmem:[#allocation2 + $0x2] sm:$0x1] %vm46, %v198
    %v200 = vld [vmem:[#allocation2 + $0x3] sm:$0x1]
    %v201 = vld [vmem:[#allocation2 + $0x4] sm:$0x1]
    %v202 = vmin.f32 %v200, %v201
    %203 = vst.msk [vmem:[#allocation2 + $0x3] sm:$0x1] %vm46, %v202
    %v204 = vmax.f32 %v200, %v201
    %205 = vst.msk [vmem:[#allocation2 + $0x4] sm:$0x1] %vm46, %v204
    %v206 = vld [vmem:[#allocation2 + $0x5] sm:$0x1]
    %v207 = vld [vmem:[#allocation2 + $0x6] sm:$0x1]
    %v208 = vmin.f32 %v206, %v207
    %209 = vst.msk [vmem:[#allocation2 + $0x5] sm:$0x1] %vm46, %v208
    %v210 = vmax.f32 %v206, %v207
    %211 = vst.msk [vmem:[#allocation2 + $0x6] sm:$0x1] %vm46, %v210
    %v212 = vld [vmem:[%s1] sm:$0xff]
    %v213 = vld [vmem:[%s1 + $0x8] sm:$0xff]
    %v214 = vld [vmem:[#allocation2] sm:$0xff]
    %vm215 = vcmask 64512
    %v217 = vsel %vm215, %v212, 0
    %v220 = vsel %vm215, %v213, 0
    %222 = vmatpush.msra.mxu0 0.0
    %223 = vmatpush.msra.mxu0 0.0
    %224 = vmatpush.msra.mxu0 0.0
    %225 = vmatpush.msra.mxu0 0.0
    %226 = vmatpush.msra.mxu0 0.0
    %227 = vmatpush.msra.mxu0 0.0
    %228 = vmatpush.msra.mxu0 0.0
    %229 = vmatpush.msra.mxu0 0.0
    %230 = vmatpush.msra.mxu0 0.0
    %231 = vmatpush.msra.mxu0 0.0
    %232 = vmatpush.msra.mxu0 0.0
    %233 = vmatpush.msra.mxu0 0.0
    %234 = vmatpush.msra.mxu0 0.0
    %235 = vmatpush.msra.mxu0 0.0
    %236 = vmatpush.msra.mxu0 0.0
    %237 = vmatpush.msra.mxu0 %v214
    %238 = vmatmul.f32.gmra.mxu0 %v217
    %v239 = vpop.f32.mrf.mxu0
    %v240 = vadd.f32 0.0, %v239
    %241 = vmatmul.f32.gmra.mxu0 %v220
    %v242 = vpop.f32.mrf.mxu0
    %v243 = vadd.f32 0.0, %v242
    %244 = vdwg.mxu0
    %v245 = vlaneseq
    %v246 = vshrl.u32 %v245, 7
    %v247 = vadd.s32 %v246, 8
    %v248 = vlaneseq
    %v249 = vand.u32 %v248, 127
    %vm250 = vcmp.eq.s32.totalorder %v246, %v249
    %vm251 = vcmp.eq.s32.totalorder %v247, %v249
    %v252 = vsel %vm250, 1.0, 0.0
    %v253 = vsel %vm251, 1.0, 0.0
    %v255 = vsel %vm41, %v252, 0
    %v258 = vsel %vm41, %v253, 0
    %v261 = vsel %vm41, %v240, 0
    %v264 = vsel %vm41, %v243, 0
    %266 = vmatpush.xpose.msra.mxu0 0.0
    %267 = vmatpush.xpose.msra.mxu0 0.0
    %268 = vmatpush.xpose.msra.mxu0 0.0
    %269 = vmatpush.xpose.msra.mxu0 0.0
    %270 = vmatpush.xpose.msra.mxu0 0.0
    %271 = vmatpush.xpose.msra.mxu0 0.0
    %272 = vmatpush.xpose.msra.mxu0 0.0
    %273 = vmatpush.xpose.msra.mxu0 0.0
    %274 = vmatpush.xpose.msra.mxu0 0.0
    %275 = vmatpush.xpose.msra.mxu0 0.0
    %276 = vmatpush.xpose.msra.mxu0 0.0
    %277 = vmatpush.xpose.msra.mxu0 0.0
    %278 = vmatpush.xpose.msra.mxu0 0.0
    %279 = vmatpush.xpose.msra.mxu0 0.0
    %280 = vmatpush.xpose.msra.mxu0 %v264
    %281 = vmatpush.xpose.msra.mxu0 %v261
    %282 = vmatmul.f32.gmra.mxu0 %v255
    %v283 = vpop.f32.mrf.mxu0
    %v284 = vadd.f32 0.0, %v283
    %285 = vmatmul.f32.gmra.mxu0 %v258
    %v286 = vpop.f32.mrf.mxu0
    %v287 = vadd.f32 0.0, %v286
    %288 = vdwg.mxu0
    %289 = vst.msk [vmem:[#allocation3] sm:$0xff] %vm41, %v284
    %290 = vst.msk [vmem:[#allocation3 + $0x8] sm:$0xff] %vm41, %v287
    %v291 = vld [vmem:[#allocation3] sm:$0x1]
    %v292 = vld [vmem:[#allocation3 + $0x2] sm:$0x1]
    %v293 = vmin.f32 %v291, %v292
    %294 = vst.msk [vmem:[#allocation3] sm:$0x1] %vm46, %v293
    %v295 = vmax.f32 %v291, %v292
    %296 = vst.msk [vmem:[#allocation3 + $0x2] sm:$0x1] %vm46, %v295
    %v297 = vld [vmem:[#allocation3 + $0x4] sm:$0x1]
    %v298 = vld [vmem:[#allocation3 + $0x6] sm:$0x1]
    %v299 = vmin.f32 %v297, %v298
    %300 = vst.msk [vmem:[#allocation3 + $0x4] sm:$0x1] %vm46, %v299
    %v301 = vmax.f32 %v297, %v298
    %302 = vst.msk [vmem:[#allocation3 + $0x6] sm:$0x1] %vm46, %v301
    %v303 = vld [vmem:[#allocation3 + $0x8] sm:$0x1]
    %v304 = vld [vmem:[#allocation3 + $0xa] sm:$0x1]
    %v305 = vmin.f32 %v303, %v304
    %306 = vst.msk [vmem:[#allocation3 + $0x8] sm:$0x1] %vm46, %v305
    %v307 = vmax.f32 %v303, %v304
    %308 = vst.msk [vmem:[#allocation3 + $0xa] sm:$0x1] %vm46, %v307
    %v309 = vld [vmem:[#allocation3 + $0xc] sm:$0x1]
    %v310 = vld [vmem:[#allocation3 + $0xe] sm:$0x1]
    %v311 = vmin.f32 %v309, %v310
    %312 = vst.msk [vmem:[#allocation3 + $0xc] sm:$0x1] %vm46, %v311
    %v313 = vmax.f32 %v309, %v310
    %314 = vst.msk [vmem:[#allocation3 + $0xe] sm:$0x1] %vm46, %v313
    %v315 = vld [vmem:[#allocation3 + $0x2] sm:$0x1]
    %v316 = vld [vmem:[#allocation3 + $0x4] sm:$0x1]
    %v317 = vmin.f32 %v315, %v316
    %318 = vst.msk [vmem:[#allocation3 + $0x2] sm:$0x1] %vm46, %v317
    %v319 = vmax.f32 %v315, %v316
    %320 = vst.msk [vmem:[#allocation3 + $0x4] sm:$0x1] %vm46, %v319
    %v321 = vld [vmem:[#allocation3 + $0x6] sm:$0x1]
    %v322 = vld [vmem:[#allocation3 + $0x8] sm:$0x1]
    %v323 = vmin.f32 %v321, %v322
    %324 = vst.msk [vmem:[#allocation3 + $0x6] sm:$0x1] %vm46, %v323
    %v325 = vmax.f32 %v321, %v322
    %326 = vst.msk [vmem:[#allocation3 + $0x8] sm:$0x1] %vm46, %v325
    %v327 = vld [vmem:[#allocation3 + $0xa] sm:$0x1]
    %v328 = vld [vmem:[#allocation3 + $0xc] sm:$0x1]
    %v329 = vmin.f32 %v327, %v328
    %330 = vst.msk [vmem:[#allocation3 + $0xa] sm:$0x1] %vm46, %v329
    %v331 = vmax.f32 %v327, %v328
    %332 = vst.msk [vmem:[#allocation3 + $0xc] sm:$0x1] %vm46, %v331
    %v333 = vld [vmem:[#allocation3] sm:$0x1]
    %v334 = vld [vmem:[#allocation3 + $0x2] sm:$0x1]
    %v335 = vmin.f32 %v333, %v334
    %336 = vst.msk [vmem:[#allocation3] sm:$0x1] %vm46, %v335
    %v337 = vmax.f32 %v333, %v334
    %338 = vst.msk [vmem:[#allocation3 + $0x2] sm:$0x1] %vm46, %v337
    %v339 = vld [vmem:[#allocation3 + $0x4] sm:$0x1]
    %v340 = vld [vmem:[#allocation3 + $0x6] sm:$0x1]
    %v341 = vmin.f32 %v339, %v340
    %342 = vst.msk [vmem:[#allocation3 + $0x4] sm:$0x1] %vm46, %v341
    %v343 = vmax.f32 %v339, %v340
    %344 = vst.msk [vmem:[#allocation3 + $0x6] sm:$0x1] %vm46, %v343
    %v345 = vld [vmem:[#allocation3 + $0x8] sm:$0x1]
    %v346 = vld [vmem:[#allocation3 + $0xa] sm:$0x1]
    %v347 = vmin.f32 %v345, %v346
    %348 = vst.msk [vmem:[#allocation3 + $0x8] sm:$0x1] %vm46, %v347
    %v349 = vmax.f32 %v345, %v346
    %350 = vst.msk [vmem:[#allocation3 + $0xa] sm:$0x1] %vm46, %v349
    %v351 = vld [vmem:[#allocation3 + $0xc] sm:$0x1]
    %v352 = vld [vmem:[#allocation3 + $0xe] sm:$0x1]
    %v353 = vmin.f32 %v351, %v352
    %354 = vst.msk [vmem:[#allocation3 + $0xc] sm:$0x1] %vm46, %v353
    %v355 = vmax.f32 %v351, %v352
    %356 = vst.msk [vmem:[#allocation3 + $0xe] sm:$0x1] %vm46, %v355
    %v357 = vld [vmem:[#allocation3 + $0x2] sm:$0x1]
    %v358 = vld [vmem:[#allocation3 + $0x4] sm:$0x1]
    %v359 = vmin.f32 %v357, %v358
    %360 = vst.msk [vmem:[#allocation3 + $0x2] sm:$0x1] %vm46, %v359
    %v361 = vmax.f32 %v357, %v358
    %362 = vst.msk [vmem:[#allocation3 + $0x4] sm:$0x1] %vm46, %v361
    %v363 = vld [vmem:[#allocation3 + $0x6] sm:$0x1]
    %v364 = vld [vmem:[#allocation3 + $0x8] sm:$0x1]
    %v365 = vmin.f32 %v363, %v364
    %366 = vst.msk [vmem:[#allocation3 + $0x6] sm:$0x1] %vm46, %v365
    %v367 = vmax.f32 %v363, %v364
    %368 = vst.msk [vmem:[#allocation3 + $0x8] sm:$0x1] %vm46, %v367
    %v369 = vld [vmem:[#allocation3 + $0xa] sm:$0x1]
    %v370 = vld [vmem:[#allocation3 + $0xc] sm:$0x1]
    %v371 = vmin.f32 %v369, %v370
    %372 = vst.msk [vmem:[#allocation3 + $0xa] sm:$0x1] %vm46, %v371
    %v373 = vmax.f32 %v369, %v370
    %374 = vst.msk [vmem:[#allocation3 + $0xc] sm:$0x1] %vm46, %v373
    %v375 = vld [vmem:[#allocation3] sm:$0x1]
    %v376 = vld [vmem:[#allocation3 + $0x2] sm:$0x1]
    %v377 = vmin.f32 %v375, %v376
    %378 = vst.msk [vmem:[#allocation3] sm:$0x1] %vm46, %v377
    %v379 = vmax.f32 %v375, %v376
    %380 = vst.msk [vmem:[#allocation3 + $0x2] sm:$0x1] %vm46, %v379
    %v381 = vld [vmem:[#allocation3 + $0x4] sm:$0x1]
    %v382 = vld [vmem:[#allocation3 + $0x6] sm:$0x1]
    %v383 = vmin.f32 %v381, %v382
    %384 = vst.msk [vmem:[#allocation3 + $0x4] sm:$0x1] %vm46, %v383
    %v385 = vmax.f32 %v381, %v382
    %386 = vst.msk [vmem:[#allocation3 + $0x6] sm:$0x1] %vm46, %v385
    %v387 = vld [vmem:[#allocation3 + $0x8] sm:$0x1]
    %v388 = vld [vmem:[#allocation3 + $0xa] sm:$0x1]
    %v389 = vmin.f32 %v387, %v388
    %390 = vst.msk [vmem:[#allocation3 + $0x8] sm:$0x1] %vm46, %v389
    %v391 = vmax.f32 %v387, %v388
    %392 = vst.msk [vmem:[#allocation3 + $0xa] sm:$0x1] %vm46, %v391
    %v393 = vld [vmem:[#allocation3 + $0xc] sm:$0x1]
    %v394 = vld [vmem:[#allocation3 + $0xe] sm:$0x1]
    %v395 = vmin.f32 %v393, %v394
    %396 = vst.msk [vmem:[#allocation3 + $0xc] sm:$0x1] %vm46, %v395
    %v397 = vmax.f32 %v393, %v394
    %398 = vst.msk [vmem:[#allocation3 + $0xe] sm:$0x1] %vm46, %v397
    %v399 = vld [vmem:[#allocation3 + $0x2] sm:$0x1]
    %v400 = vld [vmem:[#allocation3 + $0x4] sm:$0x1]
    %v401 = vmin.f32 %v399, %v400
    %402 = vst.msk [vmem:[#allocation3 + $0x2] sm:$0x1] %vm46, %v401
    %v403 = vmax.f32 %v399, %v400
    %404 = vst.msk [vmem:[#allocation3 + $0x4] sm:$0x1] %vm46, %v403
    %v405 = vld [vmem:[#allocation3 + $0x6] sm:$0x1]
    %v406 = vld [vmem:[#allocation3 + $0x8] sm:$0x1]
    %v407 = vmin.f32 %v405, %v406
    %408 = vst.msk [vmem:[#allocation3 + $0x6] sm:$0x1] %vm46, %v407
    %v409 = vmax.f32 %v405, %v406
    %410 = vst.msk [vmem:[#allocation3 + $0x8] sm:$0x1] %vm46, %v409
    %v411 = vld [vmem:[#allocation3 + $0xa] sm:$0x1]
    %v412 = vld [vmem:[#allocation3 + $0xc] sm:$0x1]
    %v413 = vmin.f32 %v411, %v412
    %414 = vst.msk [vmem:[#allocation3 + $0xa] sm:$0x1] %vm46, %v413
    %v415 = vmax.f32 %v411, %v412
    %416 = vst.msk [vmem:[#allocation3 + $0xc] sm:$0x1] %vm46, %v415
    %v417 = vld [vmem:[#allocation3] sm:$0x1]
    %v418 = vld [vmem:[#allocation3 + $0x2] sm:$0x1]
    %v419 = vmin.f32 %v417, %v418
    %420 = vst.msk [vmem:[#allocation3] sm:$0x1] %vm46, %v419
    %v421 = vmax.f32 %v417, %v418
    %422 = vst.msk [vmem:[#allocation3 + $0x2] sm:$0x1] %vm46, %v421
    %v423 = vld [vmem:[#allocation3 + $0x4] sm:$0x1]
    %v424 = vld [vmem:[#allocation3 + $0x6] sm:$0x1]
    %v425 = vmin.f32 %v423, %v424
    %426 = vst.msk [vmem:[#allocation3 + $0x4] sm:$0x1] %vm46, %v425
    %v427 = vmax.f32 %v423, %v424
    %428 = vst.msk [vmem:[#allocation3 + $0x6] sm:$0x1] %vm46, %v427
    %v429 = vld [vmem:[#allocation3 + $0x8] sm:$0x1]
    %v430 = vld [vmem:[#allocation3 + $0xa] sm:$0x1]
    %v431 = vmin.f32 %v429, %v430
    %432 = vst.msk [vmem:[#allocation3 + $0x8] sm:$0x1] %vm46, %v431
    %v433 = vmax.f32 %v429, %v430
    %434 = vst.msk [vmem:[#allocation3 + $0xa] sm:$0x1] %vm46, %v433
    %v435 = vld [vmem:[#allocation3 + $0xc] sm:$0x1]
    %v436 = vld [vmem:[#allocation3 + $0xe] sm:$0x1]
    %v437 = vmin.f32 %v435, %v436
    %438 = vst.msk [vmem:[#allocation3 + $0xc] sm:$0x1] %vm46, %v437
    %v439 = vmax.f32 %v435, %v436
    %440 = vst.msk [vmem:[#allocation3 + $0xe] sm:$0x1] %vm46, %v439
    %v441 = vld [vmem:[#allocation3 + $0x2] sm:$0x1]
    %v442 = vld [vmem:[#allocation3 + $0x4] sm:$0x1]
    %v443 = vmin.f32 %v441, %v442
    %444 = vst.msk [vmem:[#allocation3 + $0x2] sm:$0x1] %vm46, %v443
    %v445 = vmax.f32 %v441, %v442
    %446 = vst.msk [vmem:[#allocation3 + $0x4] sm:$0x1] %vm46, %v445
    %v447 = vld [vmem:[#allocation3 + $0x6] sm:$0x1]
    %v448 = vld [vmem:[#allocation3 + $0x8] sm:$0x1]
    %v449 = vmin.f32 %v447, %v448
    %450 = vst.msk [vmem:[#allocation3 + $0x6] sm:$0x1] %vm46, %v449
    %v451 = vmax.f32 %v447, %v448
    %452 = vst.msk [vmem:[#allocation3 + $0x8] sm:$0x1] %vm46, %v451
    %v453 = vld [vmem:[#allocation3 + $0xa] sm:$0x1]
    %v454 = vld [vmem:[#allocation3 + $0xc] sm:$0x1]
    %v455 = vmin.f32 %v453, %v454
    %456 = vst.msk [vmem:[#allocation3 + $0xa] sm:$0x1] %vm46, %v455
    %v457 = vmax.f32 %v453, %v454
    %458 = vst.msk [vmem:[#allocation3 + $0xc] sm:$0x1] %vm46, %v457
    %v459 = vld [vmem:[#allocation3 + $0x1] sm:$0x1]
    %v460 = vld [vmem:[#allocation3 + $0x3] sm:$0x1]
    %v461 = vmin.f32 %v459, %v460
    %462 = vst.msk [vmem:[#allocation3 + $0x1] sm:$0x1] %vm46, %v461
    %v463 = vmax.f32 %v459, %v460
    %464 = vst.msk [vmem:[#allocation3 + $0x3] sm:$0x1] %vm46, %v463
    %v465 = vld [vmem:[#allocation3 + $0x5] sm:$0x1]
    %v466 = vld [vmem:[#allocation3 + $0x7] sm:$0x1]
    %v467 = vmin.f32 %v465, %v466
    %468 = vst.msk [vmem:[#allocation3 + $0x5] sm:$0x1] %vm46, %v467
    %v469 = vmax.f32 %v465, %v466
    %470 = vst.msk [vmem:[#allocation3 + $0x7] sm:$0x1] %vm46, %v469
    %v471 = vld [vmem:[#allocation3 + $0x9] sm:$0x1]
    %v472 = vld [vmem:[#allocation3 + $0xb] sm:$0x1]
    %v473 = vmin.f32 %v471, %v472
    %474 = vst.msk [vmem:[#allocation3 + $0x9] sm:$0x1] %vm46, %v473
    %v475 = vmax.f32 %v471, %v472
    %476 = vst.msk [vmem:[#allocation3 + $0xb] sm:$0x1] %vm46, %v475
    %v477 = vld [vmem:[#allocation3 + $0xd] sm:$0x1]
    %v478 = vld [vmem:[#allocation3 + $0xf] sm:$0x1]
    %v479 = vmin.f32 %v477, %v478
    %480 = vst.msk [vmem:[#allocation3 + $0xd] sm:$0x1] %vm46, %v479
    %v481 = vmax.f32 %v477, %v478
    %482 = vst.msk [vmem:[#allocation3 + $0xf] sm:$0x1] %vm46, %v481
    %v483 = vld [vmem:[#allocation3 + $0x3] sm:$0x1]
    %v484 = vld [vmem:[#allocation3 + $0x5] sm:$0x1]
    %v485 = vmin.f32 %v483, %v484
    %486 = vst.msk [vmem:[#allocation3 + $0x3] sm:$0x1] %vm46, %v485
    %v487 = vmax.f32 %v483, %v484
    %488 = vst.msk [vmem:[#allocation3 + $0x5] sm:$0x1] %vm46, %v487
    %v489 = vld [vmem:[#allocation3 + $0x7] sm:$0x1]
    %v490 = vld [vmem:[#allocation3 + $0x9] sm:$0x1]
    %v491 = vmin.f32 %v489, %v490
    %492 = vst.msk [vmem:[#allocation3 + $0x7] sm:$0x1] %vm46, %v491
    %v493 = vmax.f32 %v489, %v490
    %494 = vst.msk [vmem:[#allocation3 + $0x9] sm:$0x1] %vm46, %v493
    %v495 = vld [vmem:[#allocation3 + $0xb] sm:$0x1]
    %v496 = vld [vmem:[#allocation3 + $0xd] sm:$0x1]
    %v497 = vmin.f32 %v495, %v496
    %498 = vst.msk [vmem:[#allocation3 + $0xb] sm:$0x1] %vm46, %v497
    %v499 = vmax.f32 %v495, %v496
    %500 = vst.msk [vmem:[#allocation3 + $0xd] sm:$0x1] %vm46, %v499
    %v501 = vld [vmem:[#allocation3 + $0x1] sm:$0x1]
    %v502 = vld [vmem:[#allocation3 + $0x3] sm:$0x1]
    %v503 = vmin.f32 %v501, %v502
    %504 = vst.msk [vmem:[#allocation3 + $0x1] sm:$0x1] %vm46, %v503
    %v505 = vmax.f32 %v501, %v502
    %506 = vst.msk [vmem:[#allocation3 + $0x3] sm:$0x1] %vm46, %v505
    %v507 = vld [vmem:[#allocation3 + $0x5] sm:$0x1]
    %v508 = vld [vmem:[#allocation3 + $0x7] sm:$0x1]
    %v509 = vmin.f32 %v507, %v508
    %510 = vst.msk [vmem:[#allocation3 + $0x5] sm:$0x1] %vm46, %v509
    %v511 = vmax.f32 %v507, %v508
    %512 = vst.msk [vmem:[#allocation3 + $0x7] sm:$0x1] %vm46, %v511
    %v513 = vld [vmem:[#allocation3 + $0x9] sm:$0x1]
    %v514 = vld [vmem:[#allocation3 + $0xb] sm:$0x1]
    %v515 = vmin.f32 %v513, %v514
    %516 = vst.msk [vmem:[#allocation3 + $0x9] sm:$0x1] %vm46, %v515
    %v517 = vmax.f32 %v513, %v514
    %518 = vst.msk [vmem:[#allocation3 + $0xb] sm:$0x1] %vm46, %v517
    %v519 = vld [vmem:[#allocation3 + $0xd] sm:$0x1]
    %v520 = vld [vmem:[#allocation3 + $0xf] sm:$0x1]
    %v521 = vmin.f32 %v519, %v520
    %522 = vst.msk [vmem:[#allocation3 + $0xd] sm:$0x1] %vm46, %v521
    %v523 = vmax.f32 %v519, %v520
    %524 = vst.msk [vmem:[#allocation3 + $0xf] sm:$0x1] %vm46, %v523
    %v525 = vld [vmem:[#allocation3 + $0x3] sm:$0x1]
    %v526 = vld [vmem:[#allocation3 + $0x5] sm:$0x1]
    %v527 = vmin.f32 %v525, %v526
    %528 = vst.msk [vmem:[#allocation3 + $0x3] sm:$0x1] %vm46, %v527
    %v529 = vmax.f32 %v525, %v526
    %530 = vst.msk [vmem:[#allocation3 + $0x5] sm:$0x1] %vm46, %v529
    %v531 = vld [vmem:[#allocation3 + $0x7] sm:$0x1]
    %v532 = vld [vmem:[#allocation3 + $0x9] sm:$0x1]
    %v533 = vmin.f32 %v531, %v532
    %534 = vst.msk [vmem:[#allocation3 + $0x7] sm:$0x1] %vm46, %v533
    %v535 = vmax.f32 %v531, %v532
    %536 = vst.msk [vmem:[#allocation3 + $0x9] sm:$0x1] %vm46, %v535
    %v537 = vld [vmem:[#allocation3 + $0xb] sm:$0x1]
    %v538 = vld [vmem:[#allocation3 + $0xd] sm:$0x1]
    %v539 = vmin.f32 %v537, %v538
    %540 = vst.msk [vmem:[#allocation3 + $0xb] sm:$0x1] %vm46, %v539
    %v541 = vmax.f32 %v537, %v538
    %542 = vst.msk [vmem:[#allocation3 + $0xd] sm:$0x1] %vm46, %v541
    %v543 = vld [vmem:[#allocation3 + $0x1] sm:$0x1]
    %v544 = vld [vmem:[#allocation3 + $0x3] sm:$0x1]
    %v545 = vmin.f32 %v543, %v544
    %546 = vst.msk [vmem:[#allocation3 + $0x1] sm:$0x1] %vm46, %v545
    %v547 = vmax.f32 %v543, %v544
    %548 = vst.msk [vmem:[#allocation3 + $0x3] sm:$0x1] %vm46, %v547
    %v549 = vld [vmem:[#allocation3 + $0x5] sm:$0x1]
    %v550 = vld [vmem:[#allocation3 + $0x7] sm:$0x1]
    %v551 = vmin.f32 %v549, %v550
    %552 = vst.msk [vmem:[#allocation3 + $0x5] sm:$0x1] %vm46, %v551
    %v553 = vmax.f32 %v549, %v550
    %554 = vst.msk [vmem:[#allocation3 + $0x7] sm:$0x1] %vm46, %v553
    %v555 = vld [vmem:[#allocation3 + $0x9] sm:$0x1]
    %v556 = vld [vmem:[#allocation3 + $0xb] sm:$0x1]
    %v557 = vmin.f32 %v555, %v556
    %558 = vst.msk [vmem:[#allocation3 + $0x9] sm:$0x1] %vm46, %v557
    %v559 = vmax.f32 %v555, %v556
    %560 = vst.msk [vmem:[#allocation3 + $0xb] sm:$0x1] %vm46, %v559
    %v561 = vld [vmem:[#allocation3 + $0xd] sm:$0x1]
    %v562 = vld [vmem:[#allocation3 + $0xf] sm:$0x1]
    %v563 = vmin.f32 %v561, %v562
    %564 = vst.msk [vmem:[#allocation3 + $0xd] sm:$0x1] %vm46, %v563
    %v565 = vmax.f32 %v561, %v562
    %566 = vst.msk [vmem:[#allocation3 + $0xf] sm:$0x1] %vm46, %v565
    %v567 = vld [vmem:[#allocation3 + $0x3] sm:$0x1]
    %v568 = vld [vmem:[#allocation3 + $0x5] sm:$0x1]
    %v569 = vmin.f32 %v567, %v568
    %570 = vst.msk [vmem:[#allocation3 + $0x3] sm:$0x1] %vm46, %v569
    %v571 = vmax.f32 %v567, %v568
    %572 = vst.msk [vmem:[#allocation3 + $0x5] sm:$0x1] %vm46, %v571
    %v573 = vld [vmem:[#allocation3 + $0x7] sm:$0x1]
    %v574 = vld [vmem:[#allocation3 + $0x9] sm:$0x1]
    %v575 = vmin.f32 %v573, %v574
    %576 = vst.msk [vmem:[#allocation3 + $0x7] sm:$0x1] %vm46, %v575
    %v577 = vmax.f32 %v573, %v574
    %578 = vst.msk [vmem:[#allocation3 + $0x9] sm:$0x1] %vm46, %v577
    %v579 = vld [vmem:[#allocation3 + $0xb] sm:$0x1]
    %v580 = vld [vmem:[#allocation3 + $0xd] sm:$0x1]
    %v581 = vmin.f32 %v579, %v580
    %582 = vst.msk [vmem:[#allocation3 + $0xb] sm:$0x1] %vm46, %v581
    %v583 = vmax.f32 %v579, %v580
    %584 = vst.msk [vmem:[#allocation3 + $0xd] sm:$0x1] %vm46, %v583
    %v585 = vld [vmem:[#allocation3 + $0x1] sm:$0x1]
    %v586 = vld [vmem:[#allocation3 + $0x3] sm:$0x1]
    %v587 = vmin.f32 %v585, %v586
    %588 = vst.msk [vmem:[#allocation3 + $0x1] sm:$0x1] %vm46, %v587
    %v589 = vmax.f32 %v585, %v586
    %590 = vst.msk [vmem:[#allocation3 + $0x3] sm:$0x1] %vm46, %v589
    %v591 = vld [vmem:[#allocation3 + $0x5] sm:$0x1]
    %v592 = vld [vmem:[#allocation3 + $0x7] sm:$0x1]
    %v593 = vmin.f32 %v591, %v592
    %594 = vst.msk [vmem:[#allocation3 + $0x5] sm:$0x1] %vm46, %v593
    %v595 = vmax.f32 %v591, %v592
    %596 = vst.msk [vmem:[#allocation3 + $0x7] sm:$0x1] %vm46, %v595
    %v597 = vld [vmem:[#allocation3 + $0x9] sm:$0x1]
    %v598 = vld [vmem:[#allocation3 + $0xb] sm:$0x1]
    %v599 = vmin.f32 %v597, %v598
    %600 = vst.msk [vmem:[#allocation3 + $0x9] sm:$0x1] %vm46, %v599
    %v601 = vmax.f32 %v597, %v598
    %602 = vst.msk [vmem:[#allocation3 + $0xb] sm:$0x1] %vm46, %v601
    %v603 = vld [vmem:[#allocation3 + $0xd] sm:$0x1]
    %v604 = vld [vmem:[#allocation3 + $0xf] sm:$0x1]
    %v605 = vmin.f32 %v603, %v604
    %606 = vst.msk [vmem:[#allocation3 + $0xd] sm:$0x1] %vm46, %v605
    %v607 = vmax.f32 %v603, %v604
    %608 = vst.msk [vmem:[#allocation3 + $0xf] sm:$0x1] %vm46, %v607
    %v609 = vld [vmem:[#allocation3 + $0x3] sm:$0x1]
    %v610 = vld [vmem:[#allocation3 + $0x5] sm:$0x1]
    %v611 = vmin.f32 %v609, %v610
    %612 = vst.msk [vmem:[#allocation3 + $0x3] sm:$0x1] %vm46, %v611
    %v613 = vmax.f32 %v609, %v610
    %614 = vst.msk [vmem:[#allocation3 + $0x5] sm:$0x1] %vm46, %v613
    %v615 = vld [vmem:[#allocation3 + $0x7] sm:$0x1]
    %v616 = vld [vmem:[#allocation3 + $0x9] sm:$0x1]
    %v617 = vmin.f32 %v615, %v616
    %618 = vst.msk [vmem:[#allocation3 + $0x7] sm:$0x1] %vm46, %v617
    %v619 = vmax.f32 %v615, %v616
    %620 = vst.msk [vmem:[#allocation3 + $0x9] sm:$0x1] %vm46, %v619
    %v621 = vld [vmem:[#allocation3 + $0xb] sm:$0x1]
    %v622 = vld [vmem:[#allocation3 + $0xd] sm:$0x1]
    %v623 = vmin.f32 %v621, %v622
    %624 = vst.msk [vmem:[#allocation3 + $0xb] sm:$0x1] %vm46, %v623
    %v625 = vmax.f32 %v621, %v622
    %626 = vst.msk [vmem:[#allocation3 + $0xd] sm:$0x1] %vm46, %v625
    %v627 = vld [vmem:[#allocation3] sm:$0x3]
    %v628 = vld [vmem:[#allocation4] sm:$0xff]
    %v629 = vld [vmem:[#allocation4 + $0x8] sm:$0xff]
    %v630 = vld [vmem:[#allocation3 + $0x2] sm:$0x3]
    %s631 = scalar_lea.vmem [#allocation4], 16
    %v632 = vld [vmem:[%s631] sm:$0xff]
    %v633 = vld [vmem:[%s631 + $0x8] sm:$0xff]
    %v635 = vsel %vm41, %v630, 0
    %637 = vmatpush.msra.mxu0 0.0
    %638 = vmatpush.msra.mxu0 0.0
    %639 = vmatpush.msra.mxu0 0.0
    %640 = vmatpush.msra.mxu0 0.0
    %641 = vmatpush.msra.mxu0 0.0
    %642 = vmatpush.msra.mxu0 0.0
    %643 = vmatpush.msra.mxu0 0.0
    %644 = vmatpush.msra.mxu0 0.0
    %645 = vmatpush.msra.mxu0 0.0
    %646 = vmatpush.msra.mxu0 0.0
    %647 = vmatpush.msra.mxu0 0.0
    %648 = vmatpush.msra.mxu0 0.0
    %649 = vmatpush.msra.mxu0 0.0
    %650 = vmatpush.msra.mxu0 0.0
    %651 = vmatpush.msra.mxu0 %v633
    %652 = vmatpush.msra.mxu0 %v632
    %653 = vmatmul.f32.gmra.mxu0 %v635
    %v654 = vpop.f32.mrf.mxu0
    %v655 = vadd.f32 0.0, %v654
    %656 = vdwg.mxu0
    %v658 = vsel %vm41, %v627, 0
    %660 = vmatpush.msra.mxu0 0.0
    %661 = vmatpush.msra.mxu0 0.0
    %662 = vmatpush.msra.mxu0 0.0
    %663 = vmatpush.msra.mxu0 0.0
    %664 = vmatpush.msra.mxu0 0.0
    %665 = vmatpush.msra.mxu0 0.0
    %666 = vmatpush.msra.mxu0 0.0
    %667 = vmatpush.msra.mxu0 0.0
    %668 = vmatpush.msra.mxu0 0.0
    %669 = vmatpush.msra.mxu0 0.0
    %670 = vmatpush.msra.mxu0 0.0
    %671 = vmatpush.msra.mxu0 0.0
    %672 = vmatpush.msra.mxu0 0.0
    %673 = vmatpush.msra.mxu0 0.0
    %674 = vmatpush.msra.mxu0 %v629
    %675 = vmatpush.msra.mxu0 %v628
    %676 = vmatmul.f32.gmra.mxu0 %v658
    %v677 = vpop.f32.mrf.mxu0
    %v678 = vadd.f32 %v655, %v677
    %679 = vdwg.mxu0
    %v680 = vld [vmem:[#allocation3 + $0x4] sm:$0x3]
    %s681 = scalar_lea.vmem [#allocation4], 32
    %v682 = vld [vmem:[%s681] sm:$0xff]
    %v683 = vld [vmem:[%s681 + $0x8] sm:$0xff]
    %v685 = vsel %vm41, %v680, 0
    %687 = vmatpush.msra.mxu0 0.0
    %688 = vmatpush.msra.mxu0 0.0
    %689 = vmatpush.msra.mxu0 0.0
    %690 = vmatpush.msra.mxu0 0.0
    %691 = vmatpush.msra.mxu0 0.0
    %692 = vmatpush.msra.mxu0 0.0
    %693 = vmatpush.msra.mxu0 0.0
    %694 = vmatpush.msra.mxu0 0.0
    %695 = vmatpush.msra.mxu0 0.0
    %696 = vmatpush.msra.mxu0 0.0
    %697 = vmatpush.msra.mxu0 0.0
    %698 = vmatpush.msra.mxu0 0.0
    %699 = vmatpush.msra.mxu0 0.0
    %700 = vmatpush.msra.mxu0 0.0
    %701 = vmatpush.msra.mxu0 %v683
    %702 = vmatpush.msra.mxu0 %v682
    %703 = vmatmul.f32.gmra.mxu0 %v685
    %v704 = vpop.f32.mrf.mxu0
    %v705 = vadd.f32 0.0, %v704
    %706 = vdwg.mxu0
    %v707 = vadd.f32 %v678, %v705
    %v708 = vld [vmem:[#allocation3 + $0x6] sm:$0x3]
    %s709 = scalar_lea.vmem [#allocation4], 48
    %v710 = vld [vmem:[%s709] sm:$0xff]
    %v711 = vld [vmem:[%s709 + $0x8] sm:$0xff]
    %v713 = vsel %vm41, %v708, 0
    %715 = vmatpush.msra.mxu0 0.0
    %716 = vmatpush.msra.mxu0 0.0
    %717 = vmatpush.msra.mxu0 0.0
    %718 = vmatpush.msra.mxu0 0.0
    %719 = vmatpush.msra.mxu0 0.0
    %720 = vmatpush.msra.mxu0 0.0
    %721 = vmatpush.msra.mxu0 0.0
    %722 = vmatpush.msra.mxu0 0.0
    %723 = vmatpush.msra.mxu0 0.0
    %724 = vmatpush.msra.mxu0 0.0
    %725 = vmatpush.msra.mxu0 0.0
    %726 = vmatpush.msra.mxu0 0.0
    %727 = vmatpush.msra.mxu0 0.0
    %728 = vmatpush.msra.mxu0 0.0
    %729 = vmatpush.msra.mxu0 %v711
    %730 = vmatpush.msra.mxu0 %v710
    %731 = vmatmul.f32.gmra.mxu0 %v713
    %v732 = vpop.f32.mrf.mxu0
    %v733 = vadd.f32 0.0, %v732
    %734 = vdwg.mxu0
    %v735 = vadd.f32 %v707, %v733
    %v736 = vld [vmem:[#allocation3 + $0x8] sm:$0x3]
    %s737 = scalar_lea.vmem [#allocation4], 64
    %v738 = vld [vmem:[%s737] sm:$0xff]
    %v739 = vld [vmem:[%s737 + $0x8] sm:$0xff]
    %v741 = vsel %vm41, %v736, 0
    %743 = vmatpush.msra.mxu0 0.0
    %744 = vmatpush.msra.mxu0 0.0
    %745 = vmatpush.msra.mxu0 0.0
    %746 = vmatpush.msra.mxu0 0.0
    %747 = vmatpush.msra.mxu0 0.0
    %748 = vmatpush.msra.mxu0 0.0
    %749 = vmatpush.msra.mxu0 0.0
    %750 = vmatpush.msra.mxu0 0.0
    %751 = vmatpush.msra.mxu0 0.0
    %752 = vmatpush.msra.mxu0 0.0
    %753 = vmatpush.msra.mxu0 0.0
    %754 = vmatpush.msra.mxu0 0.0
    %755 = vmatpush.msra.mxu0 0.0
    %756 = vmatpush.msra.mxu0 0.0
    %757 = vmatpush.msra.mxu0 %v739
    %758 = vmatpush.msra.mxu0 %v738
    %759 = vmatmul.f32.gmra.mxu0 %v741
    %v760 = vpop.f32.mrf.mxu0
    %v761 = vadd.f32 0.0, %v760
    %762 = vdwg.mxu0
    %v763 = vadd.f32 %v735, %v761
    %v764 = vld [vmem:[#allocation3 + $0xa] sm:$0x3]
    %s765 = scalar_lea.vmem [#allocation4], 80
    %v766 = vld [vmem:[%s765] sm:$0xff]
    %v767 = vld [vmem:[%s765 + $0x8] sm:$0xff]
    %v769 = vsel %vm41, %v764, 0
    %771 = vmatpush.msra.mxu0 0.0
    %772 = vmatpush.msra.mxu0 0.0
    %773 = vmatpush.msra.mxu0 0.0
    %774 = vmatpush.msra.mxu0 0.0
    %775 = vmatpush.msra.mxu0 0.0
    %776 = vmatpush.msra.mxu0 0.0
    %777 = vmatpush.msra.mxu0 0.0
    %778 = vmatpush.msra.mxu0 0.0
    %779 = vmatpush.msra.mxu0 0.0
    %780 = vmatpush.msra.mxu0 0.0
    %781 = vmatpush.msra.mxu0 0.0
    %782 = vmatpush.msra.mxu0 0.0
    %783 = vmatpush.msra.mxu0 0.0
    %784 = vmatpush.msra.mxu0 0.0
    %785 = vmatpush.msra.mxu0 %v767
    %786 = vmatpush.msra.mxu0 %v766
    %787 = vmatmul.f32.gmra.mxu0 %v769
    %v788 = vpop.f32.mrf.mxu0
    %v789 = vadd.f32 0.0, %v788
    %790 = vdwg.mxu0
    %v791 = vadd.f32 %v763, %v789
    %v792 = vld [vmem:[#allocation3 + $0xc] sm:$0x3]
    %s793 = scalar_lea.vmem [#allocation4], 96
    %v794 = vld [vmem:[%s793] sm:$0xff]
    %v795 = vld [vmem:[%s793 + $0x8] sm:$0xff]
    %v797 = vsel %vm41, %v792, 0
    %799 = vmatpush.msra.mxu0 0.0
    %800 = vmatpush.msra.mxu0 0.0
    %801 = vmatpush.msra.mxu0 0.0
    %802 = vmatpush.msra.mxu0 0.0
    %803 = vmatpush.msra.mxu0 0.0
    %804 = vmatpush.msra.mxu0 0.0
    %805 = vmatpush.msra.mxu0 0.0
    %806 = vmatpush.msra.mxu0 0.0
    %807 = vmatpush.msra.mxu0 0.0
    %808 = vmatpush.msra.mxu0 0.0
    %809 = vmatpush.msra.mxu0 0.0
    %810 = vmatpush.msra.mxu0 0.0
    %811 = vmatpush.msra.mxu0 0.0
    %812 = vmatpush.msra.mxu0 0.0
    %813 = vmatpush.msra.mxu0 %v795
    %814 = vmatpush.msra.mxu0 %v794
    %815 = vmatmul.f32.gmra.mxu0 %v797
    %v816 = vpop.f32.mrf.mxu0
    %v817 = vadd.f32 0.0, %v816
    %818 = vdwg.mxu0
    %v819 = vadd.f32 %v791, %v817
    %v820 = vld [vmem:[#allocation3 + $0xe] sm:$0x3]
    %s821 = scalar_lea.vmem [#allocation4], 112
    %v822 = vld [vmem:[%s821] sm:$0xff]
    %v823 = vld [vmem:[%s821 + $0x8] sm:$0xff]
    %v825 = vsel %vm41, %v820, 0
    %827 = vmatpush.msra.mxu0 0.0
    %828 = vmatpush.msra.mxu0 0.0
    %829 = vmatpush.msra.mxu0 0.0
    %830 = vmatpush.msra.mxu0 0.0
    %831 = vmatpush.msra.mxu0 0.0
    %832 = vmatpush.msra.mxu0 0.0
    %833 = vmatpush.msra.mxu0 0.0
    %834 = vmatpush.msra.mxu0 0.0
    %835 = vmatpush.msra.mxu0 0.0
    %836 = vmatpush.msra.mxu0 0.0
    %837 = vmatpush.msra.mxu0 0.0
    %838 = vmatpush.msra.mxu0 0.0
    %839 = vmatpush.msra.mxu0 0.0
    %840 = vmatpush.msra.mxu0 0.0
    %841 = vmatpush.msra.mxu0 %v823
    %842 = vmatpush.msra.mxu0 %v822
    %843 = vmatmul.f32.gmra.mxu0 %v825
    %v844 = vpop.f32.mrf.mxu0
    %v845 = vadd.f32 0.0, %v844
    %846 = vdwg.mxu0
    %v847 = vadd.f32 %v819, %v845
    %v848 = vld [vmem:[%s3] sm:$0x1]
    %v850 = vperm.slane %v848, 0
    %v852 = vadd.f32 %v847, %v850
    %v853 = vmax.f32 %v852, 0.0
    %v854 = vld [vmem:[%s4] sm:$0xff]
    %v855 = vld [vmem:[%s4 + $0x8] sm:$0xff]
    %v856 = vld [vmem:[%s4 + $0x10] sm:$0xff]
    %v857 = vld [vmem:[%s4 + $0x18] sm:$0xff]
    %v858 = vld [vmem:[%s5] sm:$0x1]
    %v860 = vperm.slane %v858, 0
    %vm862 = vcmask 261120
    %v864 = vsel %vm862, %v853, 0
    %866 = vmatpush.msra.mxu0 0.0
    %867 = vmatpush.msra.mxu0 0.0
    %868 = vmatpush.msra.mxu0 0.0
    %869 = vmatpush.msra.mxu0 0.0
    %870 = vmatpush.msra.mxu0 0.0
    %871 = vmatpush.msra.mxu0 0.0
    %872 = vmatpush.msra.mxu0 0.0
    %873 = vmatpush.msra.mxu0 0.0
    %874 = vmatpush.msra.mxu0 0.0
    %875 = vmatpush.msra.mxu0 0.0
    %876 = vmatpush.msra.mxu0 0.0
    %877 = vmatpush.msra.mxu0 0.0
    %878 = vmatpush.msra.mxu0 %v857
    %879 = vmatpush.msra.mxu0 %v856
    %880 = vmatpush.msra.mxu0 %v855
    %881 = vmatpush.msra.mxu0 %v854
    %882 = vmatmul.f32.gmra.mxu0 %v864
    %v883 = vpop.f32.mrf.mxu0
    %v884 = vadd.f32 %v860, %v883
    %885 = vdwg.mxu0
    %v886 = vtanh.pop %v884
    %v887 = vmul.f32 %v886, 2.0
    %888 = vst [vmem:[#allocation7] sm:$0x3] %v887
    // Predicated region
    $region30: #{new_forward.1} parent=1 // pred_check
      _
    $region31: #{new_forward.1} parent=1 // pred_check_branch
      %890 = sbr.rel (0) target = $region33
    $region32: #{new_forward.1} parent=1 // pred_region
      %892 = vsyncadd [#allocation6], 0
      %s894 = sshll.u32 [#allocation7], 4
      %s895 = int_to_ptr.vmem [resolvable:$true] %s894
      %s896 = sshll.u32 %s6, 4
      %s897 = int_to_ptr.hbm [resolvable:$true] %s896
      %899 = dma.vmem_to_hbm [thread:$0]  %s895, 32, %s897, [#allocation6]
    $region33: #{new_forward.1} parent=1 // pred_fallthru
      _
    // Predicated region
    $region34: #{new_forward.1} parent=1 // pred_check
      _
    $region35: #{new_forward.1} parent=1 // pred_check_branch
      %901 = sbr.rel (0) target = $region37
    $region36: #{new_forward.1} parent=1 // pred_region
      %903 = dma.done [#allocation6], 32
    $region37: #{new_forward.1} parent=1 // pred_fallthru
      _
    %904 = vsyncpa [#allocation5], 1
    %905 = vsyncpa [#allocation6], 1

</llo_original>
